<compile_context>
chip_gen: v6e
topology: v6e:2x2x1
jax: 0.10.0
libtpu: 0.0.40
codegen_flags: <defaults>
</compile_context>

<pallas_src>
import numpy as np
import jax
import jax.numpy as jnp
from jax import lax
from jax.experimental import pallas as pl
from jax.experimental.pallas import tpu as pltpu

LANE = 128   # TPU lane width; equals both W*Cout and the zero-padded contraction depth.


def make_down_block3d(*, in_features, out_features, spatial, kernel_size=3, eps=1e-5):
    """Returns (prepare, forward):
         prepare(params) -- weight-only preprocessing, call once per parameter set.
         forward(x, prep) -- jitted forward for x of shape (N, Cin, D, H, W) (NCDHW)."""
    Cin, Cout = in_features, out_features
    D, H, W = spatial
    KD = KH = KW = kernel_size
    pad = (kernel_size - 1) // 2
    assert kernel_size == 3 and pad == 1, "module defaults: kernel_size=3, padding=1"
    Dp, Hp, Wp = D + 2 * pad, H + 2 * pad, W + 2 * pad
    assert H % 2 == 0 and W % 2 == 0
    assert W * Cout == LANE, "design point: W*Cout == 128 (lane-dense conv output rows)"
    assert Wp * Cin <= LANE, "folded (Wp, Cin) contraction must fit in 128 lanes"
    DH = D * H
    ROWS_VALID = (D - 1) * Hp + H                    # rows actually needed per tap (70)
    ROWS = ((ROWS_VALID + 15) // 16) * 16            # MXU M dim, multiple of the bf16 tile (80)
    XROWS = (KD - 1) * Hp + (KH - 1) + ROWS          # padded input rows so every slab fits
    ROW_PAD = XROWS - Dp * Hp

    # ------------------------- weight-only preprocessing (hoisted) -------------------------
    def prepare(params):
        w = jnp.asarray(params["conv_w"], jnp.float32)        # (KD, KH, KW, Cin, Cout) DHWIO
        b = jnp.asarray(params["conv_b"], jnp.float32)
        gamma = jnp.asarray(params["bn_gamma"], jnp.float32)
        beta = jnp.asarray(params["bn_beta"], jnp.float32)
        # Block-Toeplitz weights:
        #   T[kd*KH+kh, wp*Cin+cin, w*Cout+cout] = w[kd, kh, wp-w, cin, cout] if 0<=wp-w<KW.
        wg = w.reshape(KD * KH, KW, Cin, Cout)
        kw_idx = jnp.arange(Wp)[:, None] - jnp.arange(W)[None, :]          # (Wp, W)
        valid = (kw_idx >= 0) & (kw_idx < KW)
        t6 = wg[:, jnp.clip(kw_idx, 0, KW - 1)]                            # (G, Wp, W, Cin, Cout)
        t6 = jnp.where(valid[None, :, :, None, None], t6, 0.0)
        t = t6.transpose(0, 1, 3, 2, 4).reshape(KD * KH, Wp * Cin, W * Cout)
        t = jnp.pad(t, ((0, 0), (0, LANE - Wp * Cin), (0, 0))).astype(jnp.bfloat16)
        return {
            "t": t,                                            # (9, 128, 128) bf16
            "b_t": jnp.tile(b, W).reshape(1, LANE),            # conv bias, lane-tiled over w
            "g_t": jnp.tile(gamma, W).reshape(1, LANE),
            "be_t": jnp.tile(beta, W).reshape(1, LANE),
        }

    # ------------------------------- fused Pallas kernel ----------------------------------
    def _fused_call(xp, t, b_t, g_t, be_t, N):
        inv_cnt = 1.0 / float(N * D * H * W)

        def lane_group_sum(v):
            # Sum lanes sharing (lane % Cout): log2(W) roll+add fold (XLU slot, free-ish).
            # Direction-agnostic, so the rotate sign convention does not matter.
            s, step = v, Cout
            while step < LANE:
                s = s + pltpu.roll(s, shift=step, axis=1)
                step *= 2
            return s

        def kernel(x_ref, t_ref, b_ref, g_ref, be_ref, o_ref, y_ref):
            bias = b_ref[...]                                   # (1, 128)
            ssum = jnp.zeros((1, LANE), jnp.float32)
            # ---- Conv3d: 9 block-Toeplitz matmuls per sample (M=80, K=128, N=128) ----
            for n in range(N):
                acc = jnp.zeros((ROWS, LANE), jnp.float32)
                for kd in range(KD):
                    for kh in range(KH):
                        r0 = kd * Hp + kh                       # contiguous row slab covers all d
                        acc = acc + jnp.dot(x_ref[n, r0:r0 + ROWS, :],
                                            t_ref[kd * KH + kh],
                                            preferred_element_type=jnp.float32)
                acc = acc + bias
                for d in range(D):                              # keep only valid (d, h) rows
                    blk = acc[d * Hp:d * Hp + H, :]             # (H, 128)
                    y_ref[n, d * H:(d + 1) * H, :] = blk
                    ssum = ssum + jnp.sum(blk, axis=0, keepdims=True)
            # ---- Train-mode BatchNorm3d stats: exact two-pass mean / variance ----
            mean_t = lane_group_sum(ssum) * inv_cnt             # per-channel, lane-tiled over w
            sq = jnp.zeros((1, LANE), jnp.float32)
            for n in range(N):
                dlt = y_ref[n] - mean_t
                sq = sq + jnp.sum(dlt * dlt, axis=0, keepdims=True)
            var_t = lane_group_sum(sq) * inv_cnt
            scale_t = g_ref[...] * lax.rsqrt(var_t + eps)
            shift_t = be_ref[...] - mean_t * scale_t
            # ---- BN affine + ReLU + AvgPool3d((1, 2, 2)) via roll pair-sums ----
            for n in range(N):
                z = jnp.maximum(y_ref[n] * scale_t + shift_t, 0.0)   # (D*H, 128)
                p = z + jnp.roll(z, -1, axis=0)                      # + next h row
                p = p + jnp.roll(p, -Cout, axis=1)                   # + next w lane group
                o_ref[n] = 0.25 * p        # valid at (even h row, even-w lane group); full vst

        return pl.pallas_call(
            kernel,
            out_shape=jax.ShapeDtypeStruct((N, DH, LANE), jnp.float32),
            grid=(1,),
            in_specs=[
                pl.BlockSpec((N, XROWS, LANE), lambda i: (0, 0, 0)),
                pl.BlockSpec((KD * KH, LANE, LANE), lambda i: (0, 0, 0)),
                pl.BlockSpec((1, LANE), lambda i: (0, 0)),
                pl.BlockSpec((1, LANE), lambda i: (0, 0)),
                pl.BlockSpec((1, LANE), lambda i: (0, 0)),
            ],
            out_specs=pl.BlockSpec((N, DH, LANE), lambda i: (0, 0, 0)),
            scratch_shapes=[pltpu.VMEM((N, DH, LANE), jnp.float32)],  # conv output, VMEM-resident
            compiler_params=pltpu.CompilerParams(
                dimension_semantics=("arbitrary",),
                allow_input_fusion=[True, False, False, False, False]),
        )(xp, t, b_t, g_t, be_t)

    # ------------------------------------ forward -----------------------------------------
    @jax.jit
    def forward(x, prep):
        N = x.shape[0]
        assert x.shape == (N, Cin, D, H, W)
        # NCDHW -> NDHWC, pad D/H/W by 1, fold (Wp, Cin) into the lane dim (zero-padded to
        # 128), flatten (Dp, Hp) into contiguous rows (+ zero rows so fixed-M slabs fit),
        # cast to bf16 for the MXU.
        xt = jnp.transpose(x, (0, 2, 3, 4, 1)).astype(jnp.float32)
        xp = jnp.pad(xt, ((0, 0), (pad, pad), (pad, pad), (pad, pad), (0, 0)))
        xp = xp.reshape(N, Dp, Hp, Wp * Cin)
        xp = jnp.pad(xp, ((0, 0), (0, 0), (0, 0), (0, LANE - Wp * Cin)))
        xp = xp.reshape(N, Dp * Hp, LANE)
        xp = jnp.pad(xp, ((0, 0), (0, ROW_PAD), (0, 0))).astype(jnp.bfloat16)

        out_k = _fused_call(xp, prep["t"], prep["b_t"], prep["g_t"], prep["be_t"], N)

        # Compact pooled values (even h rows, even-w lane groups) and go back to NCDHW.
        out = out_k.reshape(N, D, H // 2, 2, W // 2, 2, Cout)[:, :, :, 0, :, 0, :]
        return jnp.transpose(out, (0, 4, 1, 2, 3))

    # TODO(synk): BatchNorm3d running_mean/running_var are neither consumed nor updated;
    # only the train-mode forward activation (batch statistics) is reproduced.
    return prepare, forward


# ------------------------------------ Pure-JAX reference ------------------------------------
def down_block3d_reference(x_ncdhw, params, eps=1e-5):
    w, b = params["conv_w"], params["conv_b"]
    gamma, beta = params["bn_gamma"], params["bn_beta"]
    x = jnp.transpose(x_ncdhw, (0, 2, 3, 4, 1)).astype(jnp.float32)
    y = lax.conv_general_dilated(
        x, w, window_strides=(1, 1, 1),
        padding=((1, 1), (1, 1), (1, 1)),
        dimension_numbers=("NDHWC", "DHWIO", "NDHWC"),
        precision=lax.Precision.HIGHEST) + b
    mean = jnp.mean(y, axis=(0, 1, 2, 3))
    var = jnp.var(y, axis=(0, 1, 2, 3))
    z = (y - mean) / jnp.sqrt(var + eps) * gamma + beta
    z = jnp.maximum(z, 0.0)
    N, D, H, W, C = z.shape
    z = z.reshape(N, D, H // 2, 2, W // 2, 2, C).mean(axis=(3, 5))
    return jnp.transpose(z, (0, 4, 1, 2, 3))                          # NCDHW


if __name__ == "__main__":
    key = jax.random.PRNGKey(0)
    k1, k2, k3, k4, k5 = jax.random.split(key, 5)

    N, Cin, Cout, D, H, W = 2, 4, 8, 4, 16, 16
    x = jax.random.normal(k1, (N, Cin, D, H, W), jnp.float32)         # PyTorch NCDHW input

    # Deterministic synthetic parameters (Conv3d weight in DHWIO layout).
    params = {
        "conv_w": 0.1 * jax.random.normal(k2, (3, 3, 3, Cin, Cout), jnp.float32),
        "conv_b": 0.1 * jax.random.normal(k3, (Cout,), jnp.float32),
        "bn_gamma": 1.0 + 0.1 * jax.random.normal(k4, (Cout,), jnp.float32),
        "bn_beta": 0.1 * jax.random.normal(k5, (Cout,), jnp.float32),
    }

    prepare, forward = make_down_block3d(in_features=Cin, out_features=Cout,
                                         spatial=(D, H, W))
    prep = prepare(params)          # weight-only preprocessing, hoisted out of the hot path

    out = jax.block_until_ready(forward(x, prep))
    assert out.shape == (N, Cout, D, H // 2, W // 2), out.shape

    ref = jax.block_until_ready(down_block3d_reference(x, params))
    # Tolerance covers bf16 MXU inputs (f32 accumulation); typical error is ~3e-3 here.
    np.testing.assert_allclose(np.asarray(out), np.asarray(ref), rtol=2e-2, atol=2e-2)

    print("KERNEL_OK")
</pallas_src>

<mosaic_0001>
module attributes {stable_mosaic.version = 11 : i64} {
  func.func @kernel(%arg0: i32, %arg1: memref<2x118x128xbf16, #tpu.memory_space<vmem>>, %arg2: memref<9x128x128xbf16, #tpu.memory_space<vmem>>, %arg3: memref<1x128xf32, #tpu.memory_space<vmem>>, %arg4: memref<1x128xf32, #tpu.memory_space<vmem>>, %arg5: memref<1x128xf32, #tpu.memory_space<vmem>>, %arg6: memref<2x64x128xf32, #tpu.memory_space<vmem>>, %arg7: memref<2x64x128xf32, #tpu.memory_space<vmem>>) attributes {dimension_semantics = [#tpu.dimension_semantics<arbitrary>], iteration_bounds = array<i64: 1>, scalar_prefetch = 0 : i64, scratch_operands = 1 : i64, tpu.core_type = #tpu.core_type<tc>, window_params = [{pipeline_mode = #tpu.pipeline_mode<synchronous>, transform_indices = @transform_0, window_bounds = array<i64: 2, 118, 128>}, {pipeline_mode = #tpu.pipeline_mode<synchronous>, transform_indices = @transform_1, window_bounds = array<i64: 9, 128, 128>}, {pipeline_mode = #tpu.pipeline_mode<synchronous>, transform_indices = @transform_2, window_bounds = array<i64: 1, 128>}, {pipeline_mode = #tpu.pipeline_mode<synchronous>, transform_indices = @transform_3, window_bounds = array<i64: 1, 128>}, {pipeline_mode = #tpu.pipeline_mode<synchronous>, transform_indices = @transform_4, window_bounds = array<i64: 1, 128>}, {pipeline_mode = #tpu.pipeline_mode<synchronous>, transform_indices = @transform_5, window_bounds = array<i64: 2, 64, 128>}]} {
    %c0 = arith.constant 0 : index
    %c0_0 = arith.constant 0 : index
    %0 = vector.load %arg3[%c0, %c0_0] : memref<1x128xf32, #tpu.memory_space<vmem>>, vector<1x128xf32>
    %cst = arith.constant 0.000000e+00 : f32
    %1 = vector.broadcast %cst : f32 to vector<1x128xf32>
    %cst_1 = arith.constant 0.000000e+00 : f32
    %2 = vector.broadcast %cst_1 : f32 to vector<80x128xf32>
    %c0_2 = arith.constant 0 : index
    %c0_3 = arith.constant 0 : index
    %c0_4 = arith.constant 0 : index
    %3 = vector.load %arg1[%c0_2, %c0_3, %c0_4] : memref<2x118x128xbf16, #tpu.memory_space<vmem>>, vector<1x80x128xbf16>
    %4 = vector.shape_cast %3 : vector<1x80x128xbf16> to vector<80x128xbf16>
    %c0_5 = arith.constant 0 : index
    %c0_6 = arith.constant 0 : index
    %c0_7 = arith.constant 0 : index
    %5 = vector.load %arg2[%c0_5, %c0_6, %c0_7] : memref<9x128x128xbf16, #tpu.memory_space<vmem>>, vector<1x128x128xbf16>
    %6 = vector.shape_cast %5 : vector<1x128x128xbf16> to vector<128x128xbf16>
    %cst_8 = arith.constant dense<0.000000e+00> : vector<80x128xf32>
    %7 = tpu.matmul %4, %6, %cst_8 {dimension_numbers = #tpu.dot_dimension_numbers<[1], [0], [0], [1], [0, 0, 1, 1], [], []>} : vector<80x128xbf16>, vector<128x128xbf16>, vector<80x128xf32> -> vector<80x128xf32>
    %8 = arith.addf %2, %7 : vector<80x128xf32>
    %c0_9 = arith.constant 0 : index
    %c1 = arith.constant 1 : index
    %c0_10 = arith.constant 0 : index
    %9 = vector.load %arg1[%c0_9, %c1, %c0_10] : memref<2x118x128xbf16, #tpu.memory_space<vmem>>, vector<1x80x128xbf16>
    %10 = vector.shape_cast %9 : vector<1x80x128xbf16> to vector<80x128xbf16>
    %c1_11 = arith.constant 1 : index
    %c0_12 = arith.constant 0 : index
    %c0_13 = arith.constant 0 : index
    %11 = vector.load %arg2[%c1_11, %c0_12, %c0_13] : memref<9x128x128xbf16, #tpu.memory_space<vmem>>, vector<1x128x128xbf16>
    %12 = vector.shape_cast %11 : vector<1x128x128xbf16> to vector<128x128xbf16>
    %cst_14 = arith.constant dense<0.000000e+00> : vector<80x128xf32>
    %13 = tpu.matmul %10, %12, %cst_14 {dimension_numbers = #tpu.dot_dimension_numbers<[1], [0], [0], [1], [0, 0, 1, 1], [], []>} : vector<80x128xbf16>, vector<128x128xbf16>, vector<80x128xf32> -> vector<80x128xf32>
    %14 = arith.addf %8, %13 : vector<80x128xf32>
    %c0_15 = arith.constant 0 : index
    %c2 = arith.constant 2 : index
    %c0_16 = arith.constant 0 : index
    %15 = vector.load %arg1[%c0_15, %c2, %c0_16] : memref<2x118x128xbf16, #tpu.memory_space<vmem>>, vector<1x80x128xbf16>
    %16 = vector.shape_cast %15 : vector<1x80x128xbf16> to vector<80x128xbf16>
    %c2_17 = arith.constant 2 : index
    %c0_18 = arith.constant 0 : index
    %c0_19 = arith.constant 0 : index
    %17 = vector.load %arg2[%c2_17, %c0_18, %c0_19] : memref<9x128x128xbf16, #tpu.memory_space<vmem>>, vector<1x128x128xbf16>
    %18 = vector.shape_cast %17 : vector<1x128x128xbf16> to vector<128x128xbf16>
    %cst_20 = arith.constant dense<0.000000e+00> : vector<80x128xf32>
    %19 = tpu.matmul %16, %18, %cst_20 {dimension_numbers = #tpu.dot_dimension_numbers<[1], [0], [0], [1], [0, 0, 1, 1], [], []>} : vector<80x128xbf16>, vector<128x128xbf16>, vector<80x128xf32> -> vector<80x128xf32>
    %20 = arith.addf %14, %19 : vector<80x128xf32>
    %c0_21 = arith.constant 0 : index
    %c18 = arith.constant 18 : index
    %c0_22 = arith.constant 0 : index
    %21 = vector.load %arg1[%c0_21, %c18, %c0_22] : memref<2x118x128xbf16, #tpu.memory_space<vmem>>, vector<1x80x128xbf16>
    %22 = vector.shape_cast %21 : vector<1x80x128xbf16> to vector<80x128xbf16>
    %c3 = arith.constant 3 : index
    %c0_23 = arith.constant 0 : index
    %c0_24 = arith.constant 0 : index
    %23 = vector.load %arg2[%c3, %c0_23, %c0_24] : memref<9x128x128xbf16, #tpu.memory_space<vmem>>, vector<1x128x128xbf16>
    %24 = vector.shape_cast %23 : vector<1x128x128xbf16> to vector<128x128xbf16>
    %cst_25 = arith.constant dense<0.000000e+00> : vector<80x128xf32>
    %25 = tpu.matmul %22, %24, %cst_25 {dimension_numbers = #tpu.dot_dimension_numbers<[1], [0], [0], [1], [0, 0, 1, 1], [], []>} : vector<80x128xbf16>, vector<128x128xbf16>, vector<80x128xf32> -> vector<80x128xf32>
    %26 = arith.addf %20, %25 : vector<80x128xf32>
    %c0_26 = arith.constant 0 : index
    %c19 = arith.constant 19 : index
    %c0_27 = arith.constant 0 : index
    %27 = vector.load %arg1[%c0_26, %c19, %c0_27] : memref<2x118x128xbf16, #tpu.memory_space<vmem>>, vector<1x80x128xbf16>
    %28 = vector.shape_cast %27 : vector<1x80x128xbf16> to vector<80x128xbf16>
    %c4 = arith.constant 4 : index
    %c0_28 = arith.constant 0 : index
    %c0_29 = arith.constant 0 : index
    %29 = vector.load %arg2[%c4, %c0_28, %c0_29] : memref<9x128x128xbf16, #tpu.memory_space<vmem>>, vector<1x128x128xbf16>
    %30 = vector.shape_cast %29 : vector<1x128x128xbf16> to vector<128x128xbf16>
    %cst_30 = arith.constant dense<0.000000e+00> : vector<80x128xf32>
    %31 = tpu.matmul %28, %30, %cst_30 {dimension_numbers = #tpu.dot_dimension_numbers<[1], [0], [0], [1], [0, 0, 1, 1], [], []>} : vector<80x128xbf16>, vector<128x128xbf16>, vector<80x128xf32> -> vector<80x128xf32>
    %32 = arith.addf %26, %31 : vector<80x128xf32>
    %c0_31 = arith.constant 0 : index
    %c20 = arith.constant 20 : index
    %c0_32 = arith.constant 0 : index
    %33 = vector.load %arg1[%c0_31, %c20, %c0_32] : memref<2x118x128xbf16, #tpu.memory_space<vmem>>, vector<1x80x128xbf16>
    %34 = vector.shape_cast %33 : vector<1x80x128xbf16> to vector<80x128xbf16>
    %c5 = arith.constant 5 : index
    %c0_33 = arith.constant 0 : index
    %c0_34 = arith.constant 0 : index
    %35 = vector.load %arg2[%c5, %c0_33, %c0_34] : memref<9x128x128xbf16, #tpu.memory_space<vmem>>, vector<1x128x128xbf16>
    %36 = vector.shape_cast %35 : vector<1x128x128xbf16> to vector<128x128xbf16>
    %cst_35 = arith.constant dense<0.000000e+00> : vector<80x128xf32>
    %37 = tpu.matmul %34, %36, %cst_35 {dimension_numbers = #tpu.dot_dimension_numbers<[1], [0], [0], [1], [0, 0, 1, 1], [], []>} : vector<80x128xbf16>, vector<128x128xbf16>, vector<80x128xf32> -> vector<80x128xf32>
    %38 = arith.addf %32, %37 : vector<80x128xf32>
    %c0_36 = arith.constant 0 : index
    %c36 = arith.constant 36 : index
    %c0_37 = arith.constant 0 : index
    %39 = vector.load %arg1[%c0_36, %c36, %c0_37] : memref<2x118x128xbf16, #tpu.memory_space<vmem>>, vector<1x80x128xbf16>
    %40 = vector.shape_cast %39 : vector<1x80x128xbf16> to vector<80x128xbf16>
    %c6 = arith.constant 6 : index
    %c0_38 = arith.constant 0 : index
    %c0_39 = arith.constant 0 : index
    %41 = vector.load %arg2[%c6, %c0_38, %c0_39] : memref<9x128x128xbf16, #tpu.memory_space<vmem>>, vector<1x128x128xbf16>
    %42 = vector.shape_cast %41 : vector<1x128x128xbf16> to vector<128x128xbf16>
    %cst_40 = arith.constant dense<0.000000e+00> : vector<80x128xf32>
    %43 = tpu.matmul %40, %42, %cst_40 {dimension_numbers = #tpu.dot_dimension_numbers<[1], [0], [0], [1], [0, 0, 1, 1], [], []>} : vector<80x128xbf16>, vector<128x128xbf16>, vector<80x128xf32> -> vector<80x128xf32>
    %44 = arith.addf %38, %43 : vector<80x128xf32>
    %c0_41 = arith.constant 0 : index
    %c37 = arith.constant 37 : index
    %c0_42 = arith.constant 0 : index
    %45 = vector.load %arg1[%c0_41, %c37, %c0_42] : memref<2x118x128xbf16, #tpu.memory_space<vmem>>, vector<1x80x128xbf16>
    %46 = vector.shape_cast %45 : vector<1x80x128xbf16> to vector<80x128xbf16>
    %c7 = arith.constant 7 : index
    %c0_43 = arith.constant 0 : index
    %c0_44 = arith.constant 0 : index
    %47 = vector.load %arg2[%c7, %c0_43, %c0_44] : memref<9x128x128xbf16, #tpu.memory_space<vmem>>, vector<1x128x128xbf16>
    %48 = vector.shape_cast %47 : vector<1x128x128xbf16> to vector<128x128xbf16>
    %cst_45 = arith.constant dense<0.000000e+00> : vector<80x128xf32>
    %49 = tpu.matmul %46, %48, %cst_45 {dimension_numbers = #tpu.dot_dimension_numbers<[1], [0], [0], [1], [0, 0, 1, 1], [], []>} : vector<80x128xbf16>, vector<128x128xbf16>, vector<80x128xf32> -> vector<80x128xf32>
    %50 = arith.addf %44, %49 : vector<80x128xf32>
    %c0_46 = arith.constant 0 : index
    %c38 = arith.constant 38 : index
    %c0_47 = arith.constant 0 : index
    %51 = vector.load %arg1[%c0_46, %c38, %c0_47] : memref<2x118x128xbf16, #tpu.memory_space<vmem>>, vector<1x80x128xbf16>
    %52 = vector.shape_cast %51 : vector<1x80x128xbf16> to vector<80x128xbf16>
    %c8 = arith.constant 8 : index
    %c0_48 = arith.constant 0 : index
    %c0_49 = arith.constant 0 : index
    %53 = vector.load %arg2[%c8, %c0_48, %c0_49] : memref<9x128x128xbf16, #tpu.memory_space<vmem>>, vector<1x128x128xbf16>
    %54 = vector.shape_cast %53 : vector<1x128x128xbf16> to vector<128x128xbf16>
    %cst_50 = arith.constant dense<0.000000e+00> : vector<80x128xf32>
    %55 = tpu.matmul %52, %54, %cst_50 {dimension_numbers = #tpu.dot_dimension_numbers<[1], [0], [0], [1], [0, 0, 1, 1], [], []>} : vector<80x128xbf16>, vector<128x128xbf16>, vector<80x128xf32> -> vector<80x128xf32>
    %56 = arith.addf %50, %55 : vector<80x128xf32>
    %57 = vector.broadcast %0 : vector<1x128xf32> to vector<80x128xf32>
    %58 = arith.addf %56, %57 : vector<80x128xf32>
    %59 = vector.extract_strided_slice %58 {offsets = [0, 0], sizes = [16, 128], strides = [1, 1]} : vector<80x128xf32> to vector<16x128xf32>
    %c0_51 = arith.constant 0 : index
    %c0_52 = arith.constant 0 : index
    %c0_53 = arith.constant 0 : index
    %60 = vector.load %arg7[%c0_51, %c0_52, %c0_53] : memref<2x64x128xf32, #tpu.memory_space<vmem>>, vector<1x16x128xf32>
    %61 = vector.shape_cast %60 : vector<1x16x128xf32> to vector<16x128xf32>
    %62 = vector.shape_cast %59 : vector<16x128xf32> to vector<1x16x128xf32>
    tpu.vector_store %arg7[%c0_51, %c0_52, %c0_53], %62 {strides = array<i32>} : memref<2x64x128xf32, #tpu.memory_space<vmem>>, vector<1x16x128xf32>,
    %cst_54 = arith.constant dense<0.000000e+00> : vector<128xf32>
    %63 = vector.multi_reduction <add>, %59, %cst_54 [0] : vector<16x128xf32> to vector<128xf32>
    %64 = vector.shape_cast %63 : vector<128xf32> to vector<1x128xf32>
    %65 = arith.addf %1, %64 : vector<1x128xf32>
    %66 = vector.extract_strided_slice %58 {offsets = [18, 0], sizes = [16, 128], strides = [1, 1]} : vector<80x128xf32> to vector<16x128xf32>
    %c0_55 = arith.constant 0 : index
    %c16 = arith.constant 16 : index
    %c0_56 = arith.constant 0 : index
    %67 = vector.load %arg7[%c0_55, %c16, %c0_56] : memref<2x64x128xf32, #tpu.memory_space<vmem>>, vector<1x16x128xf32>
    %68 = vector.shape_cast %67 : vector<1x16x128xf32> to vector<16x128xf32>
    %69 = vector.shape_cast %66 : vector<16x128xf32> to vector<1x16x128xf32>
    tpu.vector_store %arg7[%c0_55, %c16, %c0_56], %69 {strides = array<i32>} : memref<2x64x128xf32, #tpu.memory_space<vmem>>, vector<1x16x128xf32>,
    %cst_57 = arith.constant dense<0.000000e+00> : vector<128xf32>
    %70 = vector.multi_reduction <add>, %66, %cst_57 [0] : vector<16x128xf32> to vector<128xf32>
    %71 = vector.shape_cast %70 : vector<128xf32> to vector<1x128xf32>
    %72 = arith.addf %65, %71 : vector<1x128xf32>
    %73 = vector.extract_strided_slice %58 {offsets = [36, 0], sizes = [16, 128], strides = [1, 1]} : vector<80x128xf32> to vector<16x128xf32>
    %c0_58 = arith.constant 0 : index
    %c32 = arith.constant 32 : index
    %c0_59 = arith.constant 0 : index
    %74 = vector.load %arg7[%c0_58, %c32, %c0_59] : memref<2x64x128xf32, #tpu.memory_space<vmem>>, vector<1x16x128xf32>
    %75 = vector.shape_cast %74 : vector<1x16x128xf32> to vector<16x128xf32>
    %76 = vector.shape_cast %73 : vector<16x128xf32> to vector<1x16x128xf32>
    tpu.vector_store %arg7[%c0_58, %c32, %c0_59], %76 {strides = array<i32>} : memref<2x64x128xf32, #tpu.memory_space<vmem>>, vector<1x16x128xf32>,
    %cst_60 = arith.constant dense<0.000000e+00> : vector<128xf32>
    %77 = vector.multi_reduction <add>, %73, %cst_60 [0] : vector<16x128xf32> to vector<128xf32>
    %78 = vector.shape_cast %77 : vector<128xf32> to vector<1x128xf32>
    %79 = arith.addf %72, %78 : vector<1x128xf32>
    %80 = vector.extract_strided_slice %58 {offsets = [54, 0], sizes = [16, 128], strides = [1, 1]} : vector<80x128xf32> to vector<16x128xf32>
    %c0_61 = arith.constant 0 : index
    %c48 = arith.constant 48 : index
    %c0_62 = arith.constant 0 : index
    %81 = vector.load %arg7[%c0_61, %c48, %c0_62] : memref<2x64x128xf32, #tpu.memory_space<vmem>>, vector<1x16x128xf32>
    %82 = vector.shape_cast %81 : vector<1x16x128xf32> to vector<16x128xf32>
    %83 = vector.shape_cast %80 : vector<16x128xf32> to vector<1x16x128xf32>
    tpu.vector_store %arg7[%c0_61, %c48, %c0_62], %83 {strides = array<i32>} : memref<2x64x128xf32, #tpu.memory_space<vmem>>, vector<1x16x128xf32>,
    %cst_63 = arith.constant dense<0.000000e+00> : vector<128xf32>
    %84 = vector.multi_reduction <add>, %80, %cst_63 [0] : vector<16x128xf32> to vector<128xf32>
    %85 = vector.shape_cast %84 : vector<128xf32> to vector<1x128xf32>
    %86 = arith.addf %79, %85 : vector<1x128xf32>
    %cst_64 = arith.constant 0.000000e+00 : f32
    %87 = vector.broadcast %cst_64 : f32 to vector<80x128xf32>
    %c1_65 = arith.constant 1 : index
    %c0_66 = arith.constant 0 : index
    %c0_67 = arith.constant 0 : index
    %88 = vector.load %arg1[%c1_65, %c0_66, %c0_67] : memref<2x118x128xbf16, #tpu.memory_space<vmem>>, vector<1x80x128xbf16>
    %89 = vector.shape_cast %88 : vector<1x80x128xbf16> to vector<80x128xbf16>
    %c0_68 = arith.constant 0 : index
    %c0_69 = arith.constant 0 : index
    %c0_70 = arith.constant 0 : index
    %90 = vector.load %arg2[%c0_68, %c0_69, %c0_70] : memref<9x128x128xbf16, #tpu.memory_space<vmem>>, vector<1x128x128xbf16>
    %91 = vector.shape_cast %90 : vector<1x128x128xbf16> to vector<128x128xbf16>
    %cst_71 = arith.constant dense<0.000000e+00> : vector<80x128xf32>
    %92 = tpu.matmul %89, %91, %cst_71 {dimension_numbers = #tpu.dot_dimension_numbers<[1], [0], [0], [1], [0, 0, 1, 1], [], []>} : vector<80x128xbf16>, vector<128x128xbf16>, vector<80x128xf32> -> vector<80x128xf32>
    %93 = arith.addf %87, %92 : vector<80x128xf32>
    %c1_72 = arith.constant 1 : index
    %c1_73 = arith.constant 1 : index
    %c0_74 = arith.constant 0 : index
    %94 = vector.load %arg1[%c1_72, %c1_73, %c0_74] : memref<2x118x128xbf16, #tpu.memory_space<vmem>>, vector<1x80x128xbf16>
    %95 = vector.shape_cast %94 : vector<1x80x128xbf16> to vector<80x128xbf16>
    %c1_75 = arith.constant 1 : index
    %c0_76 = arith.constant 0 : index
    %c0_77 = arith.constant 0 : index
    %96 = vector.load %arg2[%c1_75, %c0_76, %c0_77] : memref<9x128x128xbf16, #tpu.memory_space<vmem>>, vector<1x128x128xbf16>
    %97 = vector.shape_cast %96 : vector<1x128x128xbf16> to vector<128x128xbf16>
    %cst_78 = arith.constant dense<0.000000e+00> : vector<80x128xf32>
    %98 = tpu.matmul %95, %97, %cst_78 {dimension_numbers = #tpu.dot_dimension_numbers<[1], [0], [0], [1], [0, 0, 1, 1], [], []>} : vector<80x128xbf16>, vector<128x128xbf16>, vector<80x128xf32> -> vector<80x128xf32>
    %99 = arith.addf %93, %98 : vector<80x128xf32>
    %c1_79 = arith.constant 1 : index
    %c2_80 = arith.constant 2 : index
    %c0_81 = arith.constant 0 : index
    %100 = vector.load %arg1[%c1_79, %c2_80, %c0_81] : memref<2x118x128xbf16, #tpu.memory_space<vmem>>, vector<1x80x128xbf16>
    %101 = vector.shape_cast %100 : vector<1x80x128xbf16> to vector<80x128xbf16>
    %c2_82 = arith.constant 2 : index
    %c0_83 = arith.constant 0 : index
    %c0_84 = arith.constant 0 : index
    %102 = vector.load %arg2[%c2_82, %c0_83, %c0_84] : memref<9x128x128xbf16, #tpu.memory_space<vmem>>, vector<1x128x128xbf16>
    %103 = vector.shape_cast %102 : vector<1x128x128xbf16> to vector<128x128xbf16>
    %cst_85 = arith.constant dense<0.000000e+00> : vector<80x128xf32>
    %104 = tpu.matmul %101, %103, %cst_85 {dimension_numbers = #tpu.dot_dimension_numbers<[1], [0], [0], [1], [0, 0, 1, 1], [], []>} : vector<80x128xbf16>, vector<128x128xbf16>, vector<80x128xf32> -> vector<80x128xf32>
    %105 = arith.addf %99, %104 : vector<80x128xf32>
    %c1_86 = arith.constant 1 : index
    %c18_87 = arith.constant 18 : index
    %c0_88 = arith.constant 0 : index
    %106 = vector.load %arg1[%c1_86, %c18_87, %c0_88] : memref<2x118x128xbf16, #tpu.memory_space<vmem>>, vector<1x80x128xbf16>
    %107 = vector.shape_cast %106 : vector<1x80x128xbf16> to vector<80x128xbf16>
    %c3_89 = arith.constant 3 : index
    %c0_90 = arith.constant 0 : index
    %c0_91 = arith.constant 0 : index
    %108 = vector.load %arg2[%c3_89, %c0_90, %c0_91] : memref<9x128x128xbf16, #tpu.memory_space<vmem>>, vector<1x128x128xbf16>
    %109 = vector.shape_cast %108 : vector<1x128x128xbf16> to vector<128x128xbf16>
    %cst_92 = arith.constant dense<0.000000e+00> : vector<80x128xf32>
    %110 = tpu.matmul %107, %109, %cst_92 {dimension_numbers = #tpu.dot_dimension_numbers<[1], [0], [0], [1], [0, 0, 1, 1], [], []>} : vector<80x128xbf16>, vector<128x128xbf16>, vector<80x128xf32> -> vector<80x128xf32>
    %111 = arith.addf %105, %110 : vector<80x128xf32>
    %c1_93 = arith.constant 1 : index
    %c19_94 = arith.constant 19 : index
    %c0_95 = arith.constant 0 : index
    %112 = vector.load %arg1[%c1_93, %c19_94, %c0_95] : memref<2x118x128xbf16, #tpu.memory_space<vmem>>, vector<1x80x128xbf16>
    %113 = vector.shape_cast %112 : vector<1x80x128xbf16> to vector<80x128xbf16>
    %c4_96 = arith.constant 4 : index
    %c0_97 = arith.constant 0 : index
    %c0_98 = arith.constant 0 : index
    %114 = vector.load %arg2[%c4_96, %c0_97, %c0_98] : memref<9x128x128xbf16, #tpu.memory_space<vmem>>, vector<1x128x128xbf16>
    %115 = vector.shape_cast %114 : vector<1x128x128xbf16> to vector<128x128xbf16>
    %cst_99 = arith.constant dense<0.000000e+00> : vector<80x128xf32>
    %116 = tpu.matmul %113, %115, %cst_99 {dimension_numbers = #tpu.dot_dimension_numbers<[1], [0], [0], [1], [0, 0, 1, 1], [], []>} : vector<80x128xbf16>, vector<128x128xbf16>, vector<80x128xf32> -> vector<80x128xf32>
    %117 = arith.addf %111, %116 : vector<80x128xf32>
    %c1_100 = arith.constant 1 : index
    %c20_101 = arith.constant 20 : index
    %c0_102 = arith.constant 0 : index
    %118 = vector.load %arg1[%c1_100, %c20_101, %c0_102] : memref<2x118x128xbf16, #tpu.memory_space<vmem>>, vector<1x80x128xbf16>
    %119 = vector.shape_cast %118 : vector<1x80x128xbf16> to vector<80x128xbf16>
    %c5_103 = arith.constant 5 : index
    %c0_104 = arith.constant 0 : index
    %c0_105 = arith.constant 0 : index
    %120 = vector.load %arg2[%c5_103, %c0_104, %c0_105] : memref<9x128x128xbf16, #tpu.memory_space<vmem>>, vector<1x128x128xbf16>
    %121 = vector.shape_cast %120 : vector<1x128x128xbf16> to vector<128x128xbf16>
    %cst_106 = arith.constant dense<0.000000e+00> : vector<80x128xf32>
    %122 = tpu.matmul %119, %121, %cst_106 {dimension_numbers = #tpu.dot_dimension_numbers<[1], [0], [0], [1], [0, 0, 1, 1], [], []>} : vector<80x128xbf16>, vector<128x128xbf16>, vector<80x128xf32> -> vector<80x128xf32>
    %123 = arith.addf %117, %122 : vector<80x128xf32>
    %c1_107 = arith.constant 1 : index
    %c36_108 = arith.constant 36 : index
    %c0_109 = arith.constant 0 : index
    %124 = vector.load %arg1[%c1_107, %c36_108, %c0_109] : memref<2x118x128xbf16, #tpu.memory_space<vmem>>, vector<1x80x128xbf16>
    %125 = vector.shape_cast %124 : vector<1x80x128xbf16> to vector<80x128xbf16>
    %c6_110 = arith.constant 6 : index
    %c0_111 = arith.constant 0 : index
    %c0_112 = arith.constant 0 : index
    %126 = vector.load %arg2[%c6_110, %c0_111, %c0_112] : memref<9x128x128xbf16, #tpu.memory_space<vmem>>, vector<1x128x128xbf16>
    %127 = vector.shape_cast %126 : vector<1x128x128xbf16> to vector<128x128xbf16>
    %cst_113 = arith.constant dense<0.000000e+00> : vector<80x128xf32>
    %128 = tpu.matmul %125, %127, %cst_113 {dimension_numbers = #tpu.dot_dimension_numbers<[1], [0], [0], [1], [0, 0, 1, 1], [], []>} : vector<80x128xbf16>, vector<128x128xbf16>, vector<80x128xf32> -> vector<80x128xf32>
    %129 = arith.addf %123, %128 : vector<80x128xf32>
    %c1_114 = arith.constant 1 : index
    %c37_115 = arith.constant 37 : index
    %c0_116 = arith.constant 0 : index
    %130 = vector.load %arg1[%c1_114, %c37_115, %c0_116] : memref<2x118x128xbf16, #tpu.memory_space<vmem>>, vector<1x80x128xbf16>
    %131 = vector.shape_cast %130 : vector<1x80x128xbf16> to vector<80x128xbf16>
    %c7_117 = arith.constant 7 : index
    %c0_118 = arith.constant 0 : index
    %c0_119 = arith.constant 0 : index
    %132 = vector.load %arg2[%c7_117, %c0_118, %c0_119] : memref<9x128x128xbf16, #tpu.memory_space<vmem>>, vector<1x128x128xbf16>
    %133 = vector.shape_cast %132 : vector<1x128x128xbf16> to vector<128x128xbf16>
    %cst_120 = arith.constant dense<0.000000e+00> : vector<80x128xf32>
    %134 = tpu.matmul %131, %133, %cst_120 {dimension_numbers = #tpu.dot_dimension_numbers<[1], [0], [0], [1], [0, 0, 1, 1], [], []>} : vector<80x128xbf16>, vector<128x128xbf16>, vector<80x128xf32> -> vector<80x128xf32>
    %135 = arith.addf %129, %134 : vector<80x128xf32>
    %c1_121 = arith.constant 1 : index
    %c38_122 = arith.constant 38 : index
    %c0_123 = arith.constant 0 : index
    %136 = vector.load %arg1[%c1_121, %c38_122, %c0_123] : memref<2x118x128xbf16, #tpu.memory_space<vmem>>, vector<1x80x128xbf16>
    %137 = vector.shape_cast %136 : vector<1x80x128xbf16> to vector<80x128xbf16>
    %c8_124 = arith.constant 8 : index
    %c0_125 = arith.constant 0 : index
    %c0_126 = arith.constant 0 : index
    %138 = vector.load %arg2[%c8_124, %c0_125, %c0_126] : memref<9x128x128xbf16, #tpu.memory_space<vmem>>, vector<1x128x128xbf16>
    %139 = vector.shape_cast %138 : vector<1x128x128xbf16> to vector<128x128xbf16>
    %cst_127 = arith.constant dense<0.000000e+00> : vector<80x128xf32>
    %140 = tpu.matmul %137, %139, %cst_127 {dimension_numbers = #tpu.dot_dimension_numbers<[1], [0], [0], [1], [0, 0, 1, 1], [], []>} : vector<80x128xbf16>, vector<128x128xbf16>, vector<80x128xf32> -> vector<80x128xf32>
    %141 = arith.addf %135, %140 : vector<80x128xf32>
    %142 = vector.broadcast %0 : vector<1x128xf32> to vector<80x128xf32>
    %143 = arith.addf %141, %142 : vector<80x128xf32>
    %144 = vector.extract_strided_slice %143 {offsets = [0, 0], sizes = [16, 128], strides = [1, 1]} : vector<80x128xf32> to vector<16x128xf32>
    %c1_128 = arith.constant 1 : index
    %c0_129 = arith.constant 0 : index
    %c0_130 = arith.constant 0 : index
    %145 = vector.load %arg7[%c1_128, %c0_129, %c0_130] : memref<2x64x128xf32, #tpu.memory_space<vmem>>, vector<1x16x128xf32>
    %146 = vector.shape_cast %145 : vector<1x16x128xf32> to vector<16x128xf32>
    %147 = vector.shape_cast %144 : vector<16x128xf32> to vector<1x16x128xf32>
    tpu.vector_store %arg7[%c1_128, %c0_129, %c0_130], %147 {strides = array<i32>} : memref<2x64x128xf32, #tpu.memory_space<vmem>>, vector<1x16x128xf32>,
    %cst_131 = arith.constant dense<0.000000e+00> : vector<128xf32>
    %148 = vector.multi_reduction <add>, %144, %cst_131 [0] : vector<16x128xf32> to vector<128xf32>
    %149 = vector.shape_cast %148 : vector<128xf32> to vector<1x128xf32>
    %150 = arith.addf %86, %149 : vector<1x128xf32>
    %151 = vector.extract_strided_slice %143 {offsets = [18, 0], sizes = [16, 128], strides = [1, 1]} : vector<80x128xf32> to vector<16x128xf32>
    %c1_132 = arith.constant 1 : index
    %c16_133 = arith.constant 16 : index
    %c0_134 = arith.constant 0 : index
    %152 = vector.load %arg7[%c1_132, %c16_133, %c0_134] : memref<2x64x128xf32, #tpu.memory_space<vmem>>, vector<1x16x128xf32>
    %153 = vector.shape_cast %152 : vector<1x16x128xf32> to vector<16x128xf32>
    %154 = vector.shape_cast %151 : vector<16x128xf32> to vector<1x16x128xf32>
    tpu.vector_store %arg7[%c1_132, %c16_133, %c0_134], %154 {strides = array<i32>} : memref<2x64x128xf32, #tpu.memory_space<vmem>>, vector<1x16x128xf32>,
    %cst_135 = arith.constant dense<0.000000e+00> : vector<128xf32>
    %155 = vector.multi_reduction <add>, %151, %cst_135 [0] : vector<16x128xf32> to vector<128xf32>
    %156 = vector.shape_cast %155 : vector<128xf32> to vector<1x128xf32>
    %157 = arith.addf %150, %156 : vector<1x128xf32>
    %158 = vector.extract_strided_slice %143 {offsets = [36, 0], sizes = [16, 128], strides = [1, 1]} : vector<80x128xf32> to vector<16x128xf32>
    %c1_136 = arith.constant 1 : index
    %c32_137 = arith.constant 32 : index
    %c0_138 = arith.constant 0 : index
    %159 = vector.load %arg7[%c1_136, %c32_137, %c0_138] : memref<2x64x128xf32, #tpu.memory_space<vmem>>, vector<1x16x128xf32>
    %160 = vector.shape_cast %159 : vector<1x16x128xf32> to vector<16x128xf32>
    %161 = vector.shape_cast %158 : vector<16x128xf32> to vector<1x16x128xf32>
    tpu.vector_store %arg7[%c1_136, %c32_137, %c0_138], %161 {strides = array<i32>} : memref<2x64x128xf32, #tpu.memory_space<vmem>>, vector<1x16x128xf32>,
    %cst_139 = arith.constant dense<0.000000e+00> : vector<128xf32>
    %162 = vector.multi_reduction <add>, %158, %cst_139 [0] : vector<16x128xf32> to vector<128xf32>
    %163 = vector.shape_cast %162 : vector<128xf32> to vector<1x128xf32>
    %164 = arith.addf %157, %163 : vector<1x128xf32>
    %165 = vector.extract_strided_slice %143 {offsets = [54, 0], sizes = [16, 128], strides = [1, 1]} : vector<80x128xf32> to vector<16x128xf32>
    %c1_140 = arith.constant 1 : index
    %c48_141 = arith.constant 48 : index
    %c0_142 = arith.constant 0 : index
    %166 = vector.load %arg7[%c1_140, %c48_141, %c0_142] : memref<2x64x128xf32, #tpu.memory_space<vmem>>, vector<1x16x128xf32>
    %167 = vector.shape_cast %166 : vector<1x16x128xf32> to vector<16x128xf32>
    %168 = vector.shape_cast %165 : vector<16x128xf32> to vector<1x16x128xf32>
    tpu.vector_store %arg7[%c1_140, %c48_141, %c0_142], %168 {strides = array<i32>} : memref<2x64x128xf32, #tpu.memory_space<vmem>>, vector<1x16x128xf32>,
    %cst_143 = arith.constant dense<0.000000e+00> : vector<128xf32>
    %169 = vector.multi_reduction <add>, %165, %cst_143 [0] : vector<16x128xf32> to vector<128xf32>
    %170 = vector.shape_cast %169 : vector<128xf32> to vector<1x128xf32>
    %171 = arith.addf %164, %170 : vector<1x128xf32>
    %c8_i32 = arith.constant 8 : i32
    %172 = tpu.dynamic_rotate %171 by %c8_i32 dim 1 : vector<1x128xf32>, i32 -> vector<1x128xf32>
    %173 = arith.addf %171, %172 : vector<1x128xf32>
    %c16_i32 = arith.constant 16 : i32
    %174 = tpu.dynamic_rotate %173 by %c16_i32 dim 1 : vector<1x128xf32>, i32 -> vector<1x128xf32>
    %175 = arith.addf %173, %174 : vector<1x128xf32>
    %c32_i32 = arith.constant 32 : i32
    %176 = tpu.dynamic_rotate %175 by %c32_i32 dim 1 : vector<1x128xf32>, i32 -> vector<1x128xf32>
    %177 = arith.addf %175, %176 : vector<1x128xf32>
    %c64_i32 = arith.constant 64 : i32
    %178 = tpu.dynamic_rotate %177 by %c64_i32 dim 1 : vector<1x128xf32>, i32 -> vector<1x128xf32>
    %179 = arith.addf %177, %178 : vector<1x128xf32>
    %cst_144 = arith.constant 4.8828125E-4 : f32
    %180 = vector.broadcast %cst_144 : f32 to vector<1x128xf32>
    %181 = arith.mulf %179, %180 : vector<1x128xf32>
    %cst_145 = arith.constant 0.000000e+00 : f32
    %182 = vector.broadcast %cst_145 : f32 to vector<1x128xf32>
    %c0_146 = arith.constant 0 : index
    %c0_147 = arith.constant 0 : index
    %c0_148 = arith.constant 0 : index
    %183 = vector.load %arg7[%c0_146, %c0_147, %c0_148] : memref<2x64x128xf32, #tpu.memory_space<vmem>>, vector<1x64x128xf32>
    %184 = vector.shape_cast %183 : vector<1x64x128xf32> to vector<64x128xf32>
    %185 = vector.broadcast %181 : vector<1x128xf32> to vector<64x128xf32>
    %186 = arith.subf %184, %185 : vector<64x128xf32>
    %187 = arith.mulf %186, %186 : vector<64x128xf32>
    %cst_149 = arith.constant dense<0.000000e+00> : vector<128xf32>
    %188 = vector.multi_reduction <add>, %187, %cst_149 [0] : vector<64x128xf32> to vector<128xf32>
    %189 = vector.shape_cast %188 : vector<128xf32> to vector<1x128xf32>
    %190 = arith.addf %182, %189 : vector<1x128xf32>
    %c1_150 = arith.constant 1 : index
    %c0_151 = arith.constant 0 : index
    %c0_152 = arith.constant 0 : index
    %191 = vector.load %arg7[%c1_150, %c0_151, %c0_152] : memref<2x64x128xf32, #tpu.memory_space<vmem>>, vector<1x64x128xf32>
    %192 = vector.shape_cast %191 : vector<1x64x128xf32> to vector<64x128xf32>
    %193 = vector.broadcast %181 : vector<1x128xf32> to vector<64x128xf32>
    %194 = arith.subf %192, %193 : vector<64x128xf32>
    %195 = arith.mulf %194, %194 : vector<64x128xf32>
    %cst_153 = arith.constant dense<0.000000e+00> : vector<128xf32>
    %196 = vector.multi_reduction <add>, %195, %cst_153 [0] : vector<64x128xf32> to vector<128xf32>
    %197 = vector.shape_cast %196 : vector<128xf32> to vector<1x128xf32>
    %198 = arith.addf %190, %197 : vector<1x128xf32>
    %c8_i32_154 = arith.constant 8 : i32
    %199 = tpu.dynamic_rotate %198 by %c8_i32_154 dim 1 : vector<1x128xf32>, i32 -> vector<1x128xf32>
    %200 = arith.addf %198, %199 : vector<1x128xf32>
    %c16_i32_155 = arith.constant 16 : i32
    %201 = tpu.dynamic_rotate %200 by %c16_i32_155 dim 1 : vector<1x128xf32>, i32 -> vector<1x128xf32>
    %202 = arith.addf %200, %201 : vector<1x128xf32>
    %c32_i32_156 = arith.constant 32 : i32
    %203 = tpu.dynamic_rotate %202 by %c32_i32_156 dim 1 : vector<1x128xf32>, i32 -> vector<1x128xf32>
    %204 = arith.addf %202, %203 : vector<1x128xf32>
    %c64_i32_157 = arith.constant 64 : i32
    %205 = tpu.dynamic_rotate %204 by %c64_i32_157 dim 1 : vector<1x128xf32>, i32 -> vector<1x128xf32>
    %206 = arith.addf %204, %205 : vector<1x128xf32>
    %cst_158 = arith.constant 4.8828125E-4 : f32
    %207 = vector.broadcast %cst_158 : f32 to vector<1x128xf32>
    %208 = arith.mulf %206, %207 : vector<1x128xf32>
    %c0_159 = arith.constant 0 : index
    %c0_160 = arith.constant 0 : index
    %209 = vector.load %arg4[%c0_159, %c0_160] : memref<1x128xf32, #tpu.memory_space<vmem>>, vector<1x128xf32>
    %cst_161 = arith.constant 9.99999974E-6 : f32
    %210 = vector.broadcast %cst_161 : f32 to vector<1x128xf32>
    %211 = arith.addf %208, %210 : vector<1x128xf32>
    %212 = math.rsqrt %211 : vector<1x128xf32>
    %213 = arith.mulf %209, %212 : vector<1x128xf32>
    %c0_162 = arith.constant 0 : index
    %c0_163 = arith.constant 0 : index
    %214 = vector.load %arg5[%c0_162, %c0_163] : memref<1x128xf32, #tpu.memory_space<vmem>>, vector<1x128xf32>
    %215 = arith.mulf %181, %213 : vector<1x128xf32>
    %216 = arith.subf %214, %215 : vector<1x128xf32>
    %c0_164 = arith.constant 0 : index
    %c0_165 = arith.constant 0 : index
    %c0_166 = arith.constant 0 : index
    %217 = vector.load %arg7[%c0_164, %c0_165, %c0_166] : memref<2x64x128xf32, #tpu.memory_space<vmem>>, vector<1x64x128xf32>
    %218 = vector.shape_cast %217 : vector<1x64x128xf32> to vector<64x128xf32>
    %219 = vector.broadcast %213 : vector<1x128xf32> to vector<64x128xf32>
    %220 = arith.mulf %218, %219 : vector<64x128xf32>
    %221 = vector.broadcast %216 : vector<1x128xf32> to vector<64x128xf32>
    %222 = arith.addf %220, %221 : vector<64x128xf32>
    %cst_167 = arith.constant 0.000000e+00 : f32
    %223 = vector.broadcast %cst_167 : f32 to vector<64x128xf32>
    %224 = arith.maximumf %222, %223 : vector<64x128xf32>
    %225 = vector.extract_strided_slice %224 {offsets = [1, 0], sizes = [63, 128], strides = [1, 1]} : vector<64x128xf32> to vector<63x128xf32>
    %226 = vector.extract_strided_slice %224 {offsets = [0, 0], sizes = [1, 128], strides = [1, 1]} : vector<64x128xf32> to vector<1x128xf32>
    %227 = tpu.concatenate %225, %226 in 0 : vector<63x128xf32>, vector<1x128xf32> -> vector<64x128xf32>
    %228 = arith.addf %224, %227 : vector<64x128xf32>
    %229 = vector.extract_strided_slice %228 {offsets = [0, 8], sizes = [64, 120], strides = [1, 1]} : vector<64x128xf32> to vector<64x120xf32>
    %230 = vector.extract_strided_slice %228 {offsets = [0, 0], sizes = [64, 8], strides = [1, 1]} : vector<64x128xf32> to vector<64x8xf32>
    %231 = tpu.concatenate %229, %230 in 1 : vector<64x120xf32>, vector<64x8xf32> -> vector<64x128xf32>
    %232 = arith.addf %228, %231 : vector<64x128xf32>
    %cst_168 = arith.constant 2.500000e-01 : f32
    %233 = vector.broadcast %cst_168 : f32 to vector<64x128xf32>
    %234 = arith.mulf %233, %232 : vector<64x128xf32>
    %c0_169 = arith.constant 0 : index
    %c0_170 = arith.constant 0 : index
    %c0_171 = arith.constant 0 : index
    %235 = vector.load %arg6[%c0_169, %c0_170, %c0_171] : memref<2x64x128xf32, #tpu.memory_space<vmem>>, vector<1x64x128xf32>
    %236 = vector.shape_cast %235 : vector<1x64x128xf32> to vector<64x128xf32>
    %237 = vector.shape_cast %234 : vector<64x128xf32> to vector<1x64x128xf32>
    tpu.vector_store %arg6[%c0_169, %c0_170, %c0_171], %237 {strides = array<i32>} : memref<2x64x128xf32, #tpu.memory_space<vmem>>, vector<1x64x128xf32>,
    %c1_172 = arith.constant 1 : index
    %c0_173 = arith.constant 0 : index
    %c0_174 = arith.constant 0 : index
    %238 = vector.load %arg7[%c1_172, %c0_173, %c0_174] : memref<2x64x128xf32, #tpu.memory_space<vmem>>, vector<1x64x128xf32>
    %239 = vector.shape_cast %238 : vector<1x64x128xf32> to vector<64x128xf32>
    %240 = vector.broadcast %213 : vector<1x128xf32> to vector<64x128xf32>
    %241 = arith.mulf %239, %240 : vector<64x128xf32>
    %242 = vector.broadcast %216 : vector<1x128xf32> to vector<64x128xf32>
    %243 = arith.addf %241, %242 : vector<64x128xf32>
    %cst_175 = arith.constant 0.000000e+00 : f32
    %244 = vector.broadcast %cst_175 : f32 to vector<64x128xf32>
    %245 = arith.maximumf %243, %244 : vector<64x128xf32>
    %246 = vector.extract_strided_slice %245 {offsets = [1, 0], sizes = [63, 128], strides = [1, 1]} : vector<64x128xf32> to vector<63x128xf32>
    %247 = vector.extract_strided_slice %245 {offsets = [0, 0], sizes = [1, 128], strides = [1, 1]} : vector<64x128xf32> to vector<1x128xf32>
    %248 = tpu.concatenate %246, %247 in 0 : vector<63x128xf32>, vector<1x128xf32> -> vector<64x128xf32>
    %249 = arith.addf %245, %248 : vector<64x128xf32>
    %250 = vector.extract_strided_slice %249 {offsets = [0, 8], sizes = [64, 120], strides = [1, 1]} : vector<64x128xf32> to vector<64x120xf32>
    %251 = vector.extract_strided_slice %249 {offsets = [0, 0], sizes = [64, 8], strides = [1, 1]} : vector<64x128xf32> to vector<64x8xf32>
    %252 = tpu.concatenate %250, %251 in 1 : vector<64x120xf32>, vector<64x8xf32> -> vector<64x128xf32>
    %253 = arith.addf %249, %252 : vector<64x128xf32>
    %cst_176 = arith.constant 2.500000e-01 : f32
    %254 = vector.broadcast %cst_176 : f32 to vector<64x128xf32>
    %255 = arith.mulf %254, %253 : vector<64x128xf32>
    %c1_177 = arith.constant 1 : index
    %c0_178 = arith.constant 0 : index
    %c0_179 = arith.constant 0 : index
    %256 = vector.load %arg6[%c1_177, %c0_178, %c0_179] : memref<2x64x128xf32, #tpu.memory_space<vmem>>, vector<1x64x128xf32>
    %257 = vector.shape_cast %256 : vector<1x64x128xf32> to vector<64x128xf32>
    %258 = vector.shape_cast %255 : vector<64x128xf32> to vector<1x64x128xf32>
    tpu.vector_store %arg6[%c1_177, %c0_178, %c0_179], %258 {strides = array<i32>} : memref<2x64x128xf32, #tpu.memory_space<vmem>>, vector<1x64x128xf32>,
    return
  }
  func.func @transform_0(%arg0: i32) -> (i32, i32, i32) {
    %c0_i32 = arith.constant 0 : i32
    %c0_i32_0 = arith.constant 0 : i32
    %c0_i32_1 = arith.constant 0 : i32
    %c0_i32_2 = arith.constant 0 : i32
    return %c0_i32, %c0_i32_0, %c0_i32_1 : i32, i32, i32
  }
  func.func @transform_1(%arg0: i32) -> (i32, i32, i32) {
    %c0_i32 = arith.constant 0 : i32
    %c0_i32_0 = arith.constant 0 : i32
    %c0_i32_1 = arith.constant 0 : i32
    %c0_i32_2 = arith.constant 0 : i32
    return %c0_i32, %c0_i32_0, %c0_i32_1 : i32, i32, i32
  }
  func.func @transform_2(%arg0: i32) -> (i32, i32) {
    %c0_i32 = arith.constant 0 : i32
    %c0_i32_0 = arith.constant 0 : i32
    %c0_i32_1 = arith.constant 0 : i32
    return %c0_i32, %c0_i32_0 : i32, i32
  }
  func.func @transform_3(%arg0: i32) -> (i32, i32) {
    %c0_i32 = arith.constant 0 : i32
    %c0_i32_0 = arith.constant 0 : i32
    %c0_i32_1 = arith.constant 0 : i32
    return %c0_i32, %c0_i32_0 : i32, i32
  }
  func.func @transform_4(%arg0: i32) -> (i32, i32) {
    %c0_i32 = arith.constant 0 : i32
    %c0_i32_0 = arith.constant 0 : i32
    %c0_i32_1 = arith.constant 0 : i32
    return %c0_i32, %c0_i32_0 : i32, i32
  }
  func.func @transform_5(%arg0: i32) -> (i32, i32, i32) {
    %c0_i32 = arith.constant 0 : i32
    %c0_i32_0 = arith.constant 0 : i32
    %c0_i32_1 = arith.constant 0 : i32
    %c0_i32_2 = arith.constant 0 : i32
    return %c0_i32, %c0_i32_0, %c0_i32_1 : i32, i32, i32
  }
}

</mosaic_0001>

<llo_original>
// kernel: forward.2
$region0: #{forward.2}
  #allocation0 [shape = 'u32[]', space=smem, size = 0x4, offset = 0x4, fixed_abs, tag = 'smem constant byte address 0x4 - core index']
  #allocation1 [shape = 'u32[144,128]{1,0:T(1,128)}', space=vmem, size = 0x12000, scoped, tag = 'internal scratch']
  #allocation2 [shape = 'f32[2,64,128]{2,1,0:T(8,128)}', space=vmem, size = 0x10000, scoped, tag = 'scratch operand']
  #allocation3 [shape = 'u32[2048]{0}', space=vmem, size = 0x2000, scoped, tag = 'scoped memory for forward.2']
  #allocation4 [shape = 'u32[2048]{0}', space=vmem, size = 0x2000, scoped, tag = 'scoped memory for forward.2']
  #allocation5 [shape = 'u32[2048]{0}', space=vmem, size = 0x2000, scoped, tag = 'scoped memory for forward.2']
  #allocation6 [shape = 'u32[2048]{0}', space=vmem, size = 0x2000, scoped, tag = 'scoped memory for forward.2']
  #allocation7 [shape = 'u32[2048]{0}', space=vmem, size = 0x2000, scoped, tag = 'scoped memory for forward.2']
  %s0 = inlined_call_operand.vmem [shape: bf16[9,128,128], index: 0, kind: input, shape index: {}]
  %s1 = inlined_call_operand.vmem [shape: f32[1,128], index: 1, kind: input, shape index: {}]
  %s2 = inlined_call_operand.vmem [shape: f32[1,128], index: 2, kind: input, shape index: {}]
  %s3 = inlined_call_operand.vmem [shape: f32[1,128], index: 3, kind: input, shape index: {}]
  %s4 = inlined_call_operand.vmem [shape: bf16[2,108,128], index: 4, kind: input, shape index: {}]
  %s5 = inlined_call_operand.<no memory space> [shape: bf16[], index: 5, kind: input, shape index: {}]
  %s6 = inlined_call_operand.vmem [shape: f32[2,64,128], index: 6, kind: output, shape index: {}]
  %s7 = sld [smem:[#allocation0]]
  $region30: #{forward.2} parent=0
    _
  %s9 = ssub.s32 1, %s7
  %s10 = scalar_select 0, %s9, %s7
  %v11 = vstv %s5
  %v12 = vunpack.i.l.bf16 %v11
  %v14 = vunpack.i.h.bf16 %v11
  $region1: #{forward.2} parent=0
    #allocation8 [shape = 'u8[61440]{0}', space=vmem, size = 0xf000, dematerialized = true, scoped, tag = 'FusionAdapter Buffer %fusion.1 = bf16[2,118,128]{2,1,0:T(8,128)(2,1)} fusion(%param_4.1, %param_5), kind=kLoop, calls=%fused_computation.2.clone, metadata={op_name="jit(forward)/jit(_pad)/pad" stack_frame_id=12}']
    // Predicated region
    $region2: #{forward.2} parent=1 // pred_check
      _
    $region3: #{forward.2} parent=1 // pred_check_branch
      %17 = sbr.rel (0) target = $region5
    $region4: #{forward.2} parent=1 // pred_region
      _
    $region5: #{forward.2} parent=1 // pred_fallthru
      _
    // Predicated region
    $region6: #{forward.2} parent=1 // pred_check
      _
    $region7: #{forward.2} parent=1 // pred_check_branch
      %19 = sbr.rel (0) target = $region9
    $region8: #{forward.2} parent=1 // pred_region
      _
    $region9: #{forward.2} parent=1 // pred_fallthru
      _
    // Predicated region
    $region10: #{forward.2} parent=1 // pred_check
      _
    $region11: #{forward.2} parent=1 // pred_check_branch
      %21 = sbr.rel (0) target = $region13
    $region12: #{forward.2} parent=1 // pred_region
      _
    $region13: #{forward.2} parent=1 // pred_fallthru
      _
    // Predicated region
    $region14: #{forward.2} parent=1 // pred_check
      _
    $region15: #{forward.2} parent=1 // pred_check_branch
      %23 = sbr.rel (0) target = $region17
    $region16: #{forward.2} parent=1 // pred_region
      _
    $region17: #{forward.2} parent=1 // pred_fallthru
      _
    // Predicated region
    $region18: #{forward.2} parent=1 // pred_check
      _
    $region19: #{forward.2} parent=1 // pred_check_branch
      %25 = sbr.rel (0) target = $region21
    $region20: #{forward.2} parent=1 // pred_region
      _
    $region21: #{forward.2} parent=1 // pred_fallthru
      _
    %v26 = vld [vmem:[%s4] sm:$0xf]
    %v27 = vunpack.c.l.bf16 %v26
    %v28 = vunpack.c.h.bf16 %v26
    %v29 = vlaneseq
    %v30 = vshrl.u32 %v29, 7
    %vm32 = vcmp.lt.s32.totalorder %v30, 108
    %v33 = vsel %vm32, %v27, %v12
    %v34 = vpack.c.bf16 0.0, %v33
    %s36 = ssub.s32 16, 1
    %37 = vst [vmem:[#allocation8] sm:%s36] %v34
    %s38 = scalar_lea.vmem %s4, 4
    %v39 = vld [vmem:[%s38] sm:$0xf]
    %v40 = vunpack.c.l.bf16 %v39
    %v41 = vunpack.c.h.bf16 %v39
    %v42 = vlaneseq
    %v43 = vshrl.u32 %v42, 7
    %v44 = vadd.s32 %v43, 8
    %vm45 = vcmp.lt.s32.totalorder %v44, 108
    %v46 = vsel %vm45, %v40, %v12
    %s47 = scalar_lea.vmem [#allocation8], 4
    %v48 = vpack.c.bf16 0.0, %v46
    %s50 = ssub.s32 16, 1
    %51 = vst [vmem:[%s47] sm:%s50] %v48
    %s52 = scalar_lea.vmem %s4, 8
    %v53 = vld [vmem:[%s52] sm:$0xf]
    %v54 = vunpack.c.l.bf16 %v53
    %v55 = vunpack.c.h.bf16 %v53
    %v56 = vlaneseq
    %v57 = vshrl.u32 %v56, 7
    %v58 = vadd.s32 %v57, 16
    %vm59 = vcmp.lt.s32.totalorder %v58, 108
    %v60 = vsel %vm59, %v54, %v12
    %s61 = scalar_lea.vmem [#allocation8], 8
    %v62 = vpack.c.bf16 0.0, %v60
    %s64 = ssub.s32 16, 1
    %65 = vst [vmem:[%s61] sm:%s64] %v62
    %s66 = scalar_lea.vmem %s4, 12
    %v67 = vld [vmem:[%s66] sm:$0xf]
    %v68 = vunpack.c.l.bf16 %v67
    %v69 = vunpack.c.h.bf16 %v67
    %v70 = vlaneseq
    %v71 = vshrl.u32 %v70, 7
    %v72 = vadd.s32 %v71, 24
    %vm73 = vcmp.lt.s32.totalorder %v72, 108
    %v74 = vsel %vm73, %v68, %v12
    %s75 = scalar_lea.vmem [#allocation8], 12
    %v76 = vpack.c.bf16 0.0, %v74
    %s78 = ssub.s32 16, 1
    %79 = vst [vmem:[%s75] sm:%s78] %v76
    %s80 = scalar_lea.vmem %s4, 16
    %v81 = vld [vmem:[%s80] sm:$0xf]
    %v82 = vunpack.c.l.bf16 %v81
    %v83 = vunpack.c.h.bf16 %v81
    %v84 = vlaneseq
    %v85 = vshrl.u32 %v84, 7
    %v86 = vadd.s32 %v85, 32
    %vm87 = vcmp.lt.s32.totalorder %v86, 108
    %v88 = vsel %vm87, %v82, %v12
    %s89 = scalar_lea.vmem [#allocation8], 16
    %v90 = vpack.c.bf16 0.0, %v88
    %s92 = ssub.s32 16, 1
    %93 = vst [vmem:[%s89] sm:%s92] %v90
    %s94 = scalar_lea.vmem %s4, 20
    %v95 = vld [vmem:[%s94] sm:$0xf]
    %v96 = vunpack.c.l.bf16 %v95
    %v97 = vunpack.c.h.bf16 %v95
    %v98 = vlaneseq
    %v99 = vshrl.u32 %v98, 7
    %v100 = vadd.s32 %v99, 40
    %vm101 = vcmp.lt.s32.totalorder %v100, 108
    %v102 = vsel %vm101, %v96, %v12
    %s103 = scalar_lea.vmem [#allocation8], 20
    %v104 = vpack.c.bf16 0.0, %v102
    %s106 = ssub.s32 16, 1
    %107 = vst [vmem:[%s103] sm:%s106] %v104
    %s108 = scalar_lea.vmem %s4, 24
    %v109 = vld [vmem:[%s108] sm:$0xf]
    %v110 = vunpack.c.l.bf16 %v109
    %v111 = vunpack.c.h.bf16 %v109
    %v112 = vlaneseq
    %v113 = vshrl.u32 %v112, 7
    %v114 = vadd.s32 %v113, 48
    %vm115 = vcmp.lt.s32.totalorder %v114, 108
    %v116 = vsel %vm115, %v110, %v12
    %s117 = scalar_lea.vmem [#allocation8], 24
    %v118 = vpack.c.bf16 0.0, %v116
    %s120 = ssub.s32 16, 1
    %121 = vst [vmem:[%s117] sm:%s120] %v118
    %s122 = scalar_lea.vmem %s4, 28
    %v123 = vld [vmem:[%s122] sm:$0xf]
    %v124 = vunpack.c.l.bf16 %v123
    %v125 = vunpack.c.h.bf16 %v123
    %v126 = vlaneseq
    %v127 = vshrl.u32 %v126, 7
    %v128 = vadd.s32 %v127, 56
    %vm129 = vcmp.lt.s32.totalorder %v128, 108
    %v130 = vsel %vm129, %v124, %v12
    %s131 = scalar_lea.vmem [#allocation8], 28
    %v132 = vpack.c.bf16 0.0, %v130
    %s134 = ssub.s32 16, 1
    %135 = vst [vmem:[%s131] sm:%s134] %v132
    %s136 = scalar_lea.vmem %s4, 32
    %v137 = vld [vmem:[%s136] sm:$0xf]
    %v138 = vunpack.c.l.bf16 %v137
    %v139 = vunpack.c.h.bf16 %v137
    %v140 = vlaneseq
    %v141 = vshrl.u32 %v140, 7
    %v142 = vadd.s32 %v141, 64
    %vm143 = vcmp.lt.s32.totalorder %v142, 108
    %v144 = vsel %vm143, %v138, %v12
    %s145 = scalar_lea.vmem [#allocation8], 32
    %v146 = vpack.c.bf16 0.0, %v144
    %s148 = ssub.s32 16, 1
    %149 = vst [vmem:[%s145] sm:%s148] %v146
    %s150 = scalar_lea.vmem %s4, 36
    %v151 = vld [vmem:[%s150] sm:$0xf]
    %v152 = vunpack.c.l.bf16 %v151
    %v153 = vunpack.c.h.bf16 %v151
    %v154 = vlaneseq
    %v155 = vshrl.u32 %v154, 7
    %v156 = vadd.s32 %v155, 72
    %vm157 = vcmp.lt.s32.totalorder %v156, 108
    %v158 = vsel %vm157, %v152, %v12
    %s159 = scalar_lea.vmem [#allocation8], 36
    %v160 = vpack.c.bf16 0.0, %v158
    %s162 = ssub.s32 16, 1
    %163 = vst [vmem:[%s159] sm:%s162] %v160
    %s164 = scalar_lea.vmem %s4, 40
    %v165 = vld [vmem:[%s164] sm:$0xf]
    %v166 = vunpack.c.l.bf16 %v165
    %v167 = vunpack.c.h.bf16 %v165
    %v168 = vlaneseq
    %v169 = vshrl.u32 %v168, 7
    %v170 = vadd.s32 %v169, 80
    %vm171 = vcmp.lt.s32.totalorder %v170, 108
    %v172 = vsel %vm171, %v166, %v12
    %s173 = scalar_lea.vmem [#allocation8], 40
    %v174 = vpack.c.bf16 0.0, %v172
    %s176 = ssub.s32 16, 1
    %177 = vst [vmem:[%s173] sm:%s176] %v174
    %s178 = scalar_lea.vmem %s4, 44
    %v179 = vld [vmem:[%s178] sm:$0xf]
    %v180 = vunpack.c.l.bf16 %v179
    %v181 = vunpack.c.h.bf16 %v179
    %v182 = vlaneseq
    %v183 = vshrl.u32 %v182, 7
    %v184 = vadd.s32 %v183, 88
    %vm185 = vcmp.lt.s32.totalorder %v184, 108
    %v186 = vsel %vm185, %v180, %v12
    %s187 = scalar_lea.vmem [#allocation8], 44
    %v188 = vpack.c.bf16 0.0, %v186
    %s190 = ssub.s32 16, 1
    %191 = vst [vmem:[%s187] sm:%s190] %v188
    %s192 = scalar_lea.vmem %s4, 48
    %s194 = sor.u32 255, 127
    %s195 = sand.u32 %s194, 85
    %s196 = sshrl.u32 %s195, 1
    %s197 = sor.u32 %s195, %s196
    %s198 = sand.u32 51, %s197
    %s199 = sshrl.u32 %s198, 2
    %s200 = sor.u32 %s198, %s199
    %s201 = sand.u32 15, %s200
    %v202 = vld [vmem:[%s192] sm:%s201]
    %v203 = vunpack.c.l.bf16 %v202
    %v204 = vunpack.c.h.bf16 %v202
    %v205 = vlaneseq
    %v206 = vshrl.u32 %v205, 7
    %v207 = vadd.s32 %v206, 96
    %vm208 = vcmp.lt.s32.totalorder %v207, 108
    %v209 = vsel %vm208, %v203, %v12
    %s210 = scalar_lea.vmem [#allocation8], 48
    %v211 = vpack.c.bf16 0.0, %v209
    %s213 = ssub.s32 16, 1
    %214 = vst [vmem:[%s210] sm:%s213] %v211
    %s215 = scalar_lea.vmem %s4, 52
    %s217 = sor.u32 255, 127
    %s218 = sand.u32 %s217, 85
    %s219 = sshrl.u32 %s218, 1
    %s220 = sor.u32 %s218, %s219
    %s221 = sand.u32 51, %s220
    %s222 = sshrl.u32 %s221, 2
    %s223 = sor.u32 %s221, %s222
    %s224 = sand.u32 15, %s223
    %v225 = vld [vmem:[%s215] sm:%s224]
    %v226 = vunpack.c.l.bf16 %v225
    %v227 = vunpack.c.h.bf16 %v225
    %v228 = vlaneseq
    %v229 = vshrl.u32 %v228, 7
    %v230 = vadd.s32 %v229, 104
    %vm231 = vcmp.lt.s32.totalorder %v230, 108
    %v232 = vsel %vm231, %v226, %v12
    %s233 = scalar_lea.vmem [#allocation8], 52
    %v234 = vpack.c.bf16 0.0, %v232
    %s236 = ssub.s32 16, 1
    %237 = vst [vmem:[%s233] sm:%s236] %v234
    %s238 = scalar_lea.vmem [#allocation8], 56
    %v239 = vpack.c.bf16 0.0, %v12
    %s241 = ssub.s32 16, 1
    %242 = vst [vmem:[%s238] sm:%s241] %v239
    %s243 = scalar_lea.vmem %s4, 56
    %v244 = vld [vmem:[%s243] sm:$0xf]
    %v245 = vunpack.c.l.bf16 %v244
    %v246 = vunpack.c.h.bf16 %v244
    %v247 = vlaneseq
    %v248 = vshrl.u32 %v247, 7
    %vm250 = vcmp.lt.s32.totalorder %v248, 108
    %v251 = vsel %vm250, %v245, %v12
    %s252 = scalar_lea.vmem [#allocation8], 60
    %v253 = vpack.c.bf16 0.0, %v251
    %s255 = ssub.s32 16, 1
    %256 = vst [vmem:[%s252] sm:%s255] %v253
    %s257 = scalar_lea.vmem %s4, 60
    %v258 = vld [vmem:[%s257] sm:$0xf]
    %v259 = vunpack.c.l.bf16 %v258
    %v260 = vunpack.c.h.bf16 %v258
    %v261 = vlaneseq
    %v262 = vshrl.u32 %v261, 7
    %v263 = vadd.s32 %v262, 8
    %vm264 = vcmp.lt.s32.totalorder %v263, 108
    %v265 = vsel %vm264, %v259, %v12
    %s266 = scalar_lea.vmem [#allocation8], 64
    %v267 = vpack.c.bf16 0.0, %v265
    %s269 = ssub.s32 16, 1
    %270 = vst [vmem:[%s266] sm:%s269] %v267
    %s271 = scalar_lea.vmem %s4, 64
    %v272 = vld [vmem:[%s271] sm:$0xf]
    %v273 = vunpack.c.l.bf16 %v272
    %v274 = vunpack.c.h.bf16 %v272
    %v275 = vlaneseq
    %v276 = vshrl.u32 %v275, 7
    %v277 = vadd.s32 %v276, 16
    %vm278 = vcmp.lt.s32.totalorder %v277, 108
    %v279 = vsel %vm278, %v273, %v12
    %s280 = scalar_lea.vmem [#allocation8], 68
    %v281 = vpack.c.bf16 0.0, %v279
    %s283 = ssub.s32 16, 1
    %284 = vst [vmem:[%s280] sm:%s283] %v281
    %s285 = scalar_lea.vmem %s4, 68
    %v286 = vld [vmem:[%s285] sm:$0xf]
    %v287 = vunpack.c.l.bf16 %v286
    %v288 = vunpack.c.h.bf16 %v286
    %v289 = vlaneseq
    %v290 = vshrl.u32 %v289, 7
    %v291 = vadd.s32 %v290, 24
    %vm292 = vcmp.lt.s32.totalorder %v291, 108
    %v293 = vsel %vm292, %v287, %v12
    %s294 = scalar_lea.vmem [#allocation8], 72
    %v295 = vpack.c.bf16 0.0, %v293
    %s297 = ssub.s32 16, 1
    %298 = vst [vmem:[%s294] sm:%s297] %v295
    %s299 = scalar_lea.vmem %s4, 72
    %v300 = vld [vmem:[%s299] sm:$0xf]
    %v301 = vunpack.c.l.bf16 %v300
    %v302 = vunpack.c.h.bf16 %v300
    %v303 = vlaneseq
    %v304 = vshrl.u32 %v303, 7
    %v305 = vadd.s32 %v304, 32
    %vm306 = vcmp.lt.s32.totalorder %v305, 108
    %v307 = vsel %vm306, %v301, %v12
    %s308 = scalar_lea.vmem [#allocation8], 76
    %v309 = vpack.c.bf16 0.0, %v307
    %s311 = ssub.s32 16, 1
    %312 = vst [vmem:[%s308] sm:%s311] %v309
    %s313 = scalar_lea.vmem %s4, 76
    %v314 = vld [vmem:[%s313] sm:$0xf]
    %v315 = vunpack.c.l.bf16 %v314
    %v316 = vunpack.c.h.bf16 %v314
    %v317 = vlaneseq
    %v318 = vshrl.u32 %v317, 7
    %v319 = vadd.s32 %v318, 40
    %vm320 = vcmp.lt.s32.totalorder %v319, 108
    %v321 = vsel %vm320, %v315, %v12
    %s322 = scalar_lea.vmem [#allocation8], 80
    %v323 = vpack.c.bf16 0.0, %v321
    %s325 = ssub.s32 16, 1
    %326 = vst [vmem:[%s322] sm:%s325] %v323
    %s327 = scalar_lea.vmem %s4, 80
    %v328 = vld [vmem:[%s327] sm:$0xf]
    %v329 = vunpack.c.l.bf16 %v328
    %v330 = vunpack.c.h.bf16 %v328
    %v331 = vlaneseq
    %v332 = vshrl.u32 %v331, 7
    %v333 = vadd.s32 %v332, 48
    %vm334 = vcmp.lt.s32.totalorder %v333, 108
    %v335 = vsel %vm334, %v329, %v12
    %s336 = scalar_lea.vmem [#allocation8], 84
    %v337 = vpack.c.bf16 0.0, %v335
    %s339 = ssub.s32 16, 1
    %340 = vst [vmem:[%s336] sm:%s339] %v337
    %s341 = scalar_lea.vmem %s4, 84
    %v342 = vld [vmem:[%s341] sm:$0xf]
    %v343 = vunpack.c.l.bf16 %v342
    %v344 = vunpack.c.h.bf16 %v342
    %v345 = vlaneseq
    %v346 = vshrl.u32 %v345, 7
    %v347 = vadd.s32 %v346, 56
    %vm348 = vcmp.lt.s32.totalorder %v347, 108
    %v349 = vsel %vm348, %v343, %v12
    %s350 = scalar_lea.vmem [#allocation8], 88
    %v351 = vpack.c.bf16 0.0, %v349
    %s353 = ssub.s32 16, 1
    %354 = vst [vmem:[%s350] sm:%s353] %v351
    %s355 = scalar_lea.vmem %s4, 88
    %v356 = vld [vmem:[%s355] sm:$0xf]
    %v357 = vunpack.c.l.bf16 %v356
    %v358 = vunpack.c.h.bf16 %v356
    %v359 = vlaneseq
    %v360 = vshrl.u32 %v359, 7
    %v361 = vadd.s32 %v360, 64
    %vm362 = vcmp.lt.s32.totalorder %v361, 108
    %v363 = vsel %vm362, %v357, %v12
    %s364 = scalar_lea.vmem [#allocation8], 92
    %v365 = vpack.c.bf16 0.0, %v363
    %s367 = ssub.s32 16, 1
    %368 = vst [vmem:[%s364] sm:%s367] %v365
    %s369 = scalar_lea.vmem %s4, 92
    %v370 = vld [vmem:[%s369] sm:$0xf]
    %v371 = vunpack.c.l.bf16 %v370
    %v372 = vunpack.c.h.bf16 %v370
    %v373 = vlaneseq
    %v374 = vshrl.u32 %v373, 7
    %v375 = vadd.s32 %v374, 72
    %vm376 = vcmp.lt.s32.totalorder %v375, 108
    %v377 = vsel %vm376, %v371, %v12
    %s378 = scalar_lea.vmem [#allocation8], 96
    %v379 = vpack.c.bf16 0.0, %v377
    %s381 = ssub.s32 16, 1
    %382 = vst [vmem:[%s378] sm:%s381] %v379
    %s383 = scalar_lea.vmem %s4, 96
    %v384 = vld [vmem:[%s383] sm:$0xf]
    %v385 = vunpack.c.l.bf16 %v384
    %v386 = vunpack.c.h.bf16 %v384
    %v387 = vlaneseq
    %v388 = vshrl.u32 %v387, 7
    %v389 = vadd.s32 %v388, 80
    %vm390 = vcmp.lt.s32.totalorder %v389, 108
    %v391 = vsel %vm390, %v385, %v12
    %s392 = scalar_lea.vmem [#allocation8], 100
    %v393 = vpack.c.bf16 0.0, %v391
    %s395 = ssub.s32 16, 1
    %396 = vst [vmem:[%s392] sm:%s395] %v393
    %s397 = scalar_lea.vmem %s4, 100
    %v398 = vld [vmem:[%s397] sm:$0xf]
    %v399 = vunpack.c.l.bf16 %v398
    %v400 = vunpack.c.h.bf16 %v398
    %v401 = vlaneseq
    %v402 = vshrl.u32 %v401, 7
    %v403 = vadd.s32 %v402, 88
    %vm404 = vcmp.lt.s32.totalorder %v403, 108
    %v405 = vsel %vm404, %v399, %v12
    %s406 = scalar_lea.vmem [#allocation8], 104
    %v407 = vpack.c.bf16 0.0, %v405
    %s409 = ssub.s32 16, 1
    %410 = vst [vmem:[%s406] sm:%s409] %v407
    %s411 = scalar_lea.vmem %s4, 104
    %s413 = sor.u32 255, 127
    %s414 = sand.u32 %s413, 85
    %s415 = sshrl.u32 %s414, 1
    %s416 = sor.u32 %s414, %s415
    %s417 = sand.u32 51, %s416
    %s418 = sshrl.u32 %s417, 2
    %s419 = sor.u32 %s417, %s418
    %s420 = sand.u32 15, %s419
    %v421 = vld [vmem:[%s411] sm:%s420]
    %v422 = vunpack.c.l.bf16 %v421
    %v423 = vunpack.c.h.bf16 %v421
    %v424 = vlaneseq
    %v425 = vshrl.u32 %v424, 7
    %v426 = vadd.s32 %v425, 96
    %vm427 = vcmp.lt.s32.totalorder %v426, 108
    %v428 = vsel %vm427, %v422, %v12
    %s429 = scalar_lea.vmem [#allocation8], 108
    %v430 = vpack.c.bf16 0.0, %v428
    %s432 = ssub.s32 16, 1
    %433 = vst [vmem:[%s429] sm:%s432] %v430
    %s434 = scalar_lea.vmem %s4, 108
    %s436 = sor.u32 255, 127
    %s437 = sand.u32 %s436, 85
    %s438 = sshrl.u32 %s437, 1
    %s439 = sor.u32 %s437, %s438
    %s440 = sand.u32 51, %s439
    %s441 = sshrl.u32 %s440, 2
    %s442 = sor.u32 %s440, %s441
    %s443 = sand.u32 15, %s442
    %v444 = vld [vmem:[%s434] sm:%s443]
    %v445 = vunpack.c.l.bf16 %v444
    %v446 = vunpack.c.h.bf16 %v444
    %v447 = vlaneseq
    %v448 = vshrl.u32 %v447, 7
    %v449 = vadd.s32 %v448, 104
    %vm450 = vcmp.lt.s32.totalorder %v449, 108
    %v451 = vsel %vm450, %v445, %v12
    %s452 = scalar_lea.vmem [#allocation8], 112
    %v453 = vpack.c.bf16 0.0, %v451
    %s455 = ssub.s32 16, 1
    %456 = vst [vmem:[%s452] sm:%s455] %v453
    %s457 = scalar_lea.vmem [#allocation8], 116
    %v458 = vpack.c.bf16 0.0, %v12
    %s460 = ssub.s32 16, 1
    %461 = vst [vmem:[%s457] sm:%s460] %v458
    %v463 = vld [vmem:[%s1] sm:$0x1]
    %v464 = vld [vmem:[#allocation8] sm:$0xf]
    %v465 = vld [vmem:[#allocation8 + $0x4] sm:$0xf]
    %v466 = vld [vmem:[#allocation8 + $0x8] sm:$0xf]
    %v467 = vld [vmem:[#allocation8 + $0xc] sm:$0xf]
    %v468 = vld [vmem:[#allocation8 + $0x10] sm:$0xf]
    %v469 = vld [vmem:[#allocation8 + $0x14] sm:$0xf]
    %v470 = vld [vmem:[#allocation8 + $0x18] sm:$0xf]
    %v471 = vld [vmem:[#allocation8 + $0x1c] sm:$0xf]
    %v472 = vld [vmem:[#allocation8 + $0x20] sm:$0xf]
    %v473 = vld [vmem:[#allocation8 + $0x24] sm:$0xf]
    %v474 = vld [vmem:[%s0] sm:$0xf]
    %v475 = vld [vmem:[%s0 + $0x4] sm:$0xf]
    %v476 = vld [vmem:[%s0 + $0x8] sm:$0xf]
    %v477 = vld [vmem:[%s0 + $0xc] sm:$0xf]
    %v478 = vld [vmem:[%s0 + $0x10] sm:$0xf]
    %v479 = vld [vmem:[%s0 + $0x14] sm:$0xf]
    %v480 = vld [vmem:[%s0 + $0x18] sm:$0xf]
    %v481 = vld [vmem:[%s0 + $0x1c] sm:$0xf]
    %v482 = vld [vmem:[%s0 + $0x20] sm:$0xf]
    %v483 = vld [vmem:[%s0 + $0x24] sm:$0xf]
    %v484 = vld [vmem:[%s0 + $0x28] sm:$0xf]
    %v485 = vld [vmem:[%s0 + $0x2c] sm:$0xf]
    %v486 = vld [vmem:[%s0 + $0x30] sm:$0xf]
    %v487 = vld [vmem:[%s0 + $0x34] sm:$0xf]
    %v488 = vld [vmem:[%s0 + $0x38] sm:$0xf]
    %v489 = vld [vmem:[%s0 + $0x3c] sm:$0xf]
    %v490 = vld [vmem:[#allocation8 + $0x28] sm:$0x1]
    %s491 = scalar_lea.vmem %s0, 64
    %v492 = vld [vmem:[%s491] sm:$0xf]
    %v493 = vld [vmem:[%s491 + $0x4] sm:$0xf]
    %v494 = vld [vmem:[%s491 + $0x8] sm:$0xf]
    %v495 = vld [vmem:[%s491 + $0xc] sm:$0xf]
    %v496 = vld [vmem:[%s491 + $0x10] sm:$0xf]
    %v497 = vld [vmem:[%s491 + $0x14] sm:$0xf]
    %v498 = vld [vmem:[%s491 + $0x18] sm:$0xf]
    %v499 = vld [vmem:[%s491 + $0x1c] sm:$0xf]
    %v500 = vld [vmem:[%s491 + $0x20] sm:$0xf]
    %v501 = vld [vmem:[%s491 + $0x24] sm:$0xf]
    %v502 = vld [vmem:[%s491 + $0x28] sm:$0xf]
    %v503 = vld [vmem:[%s491 + $0x2c] sm:$0xf]
    %v504 = vld [vmem:[%s491 + $0x30] sm:$0xf]
    %v505 = vld [vmem:[%s491 + $0x34] sm:$0xf]
    %v506 = vld [vmem:[%s491 + $0x38] sm:$0xf]
    %v507 = vld [vmem:[%s491 + $0x3c] sm:$0xf]
    %v519 = vunpack.c.l.b16 %v464
    %v520 = vunpack.c.l.b16 %v465
    %v521 = vunpack.c.l.b16 %v466
    %v522 = vunpack.c.l.b16 %v467
    %v523 = vunpack.c.l.b16 %v468
    %v524 = vunpack.c.l.b16 %v469
    %v525 = vunpack.c.l.b16 %v470
    %v526 = vunpack.c.l.b16 %v471
    %v527 = vunpack.c.l.b16 %v472
    %v528 = vunpack.c.l.b16 %v473
    %v529 = vunpack.c.l.b16 %v490
    %v530 = vpack.c.b16 %v520, %v519
    %v531 = vpack.c.b16 %v522, %v521
    %v532 = vpack.c.b16 %v524, %v523
    %v533 = vpack.c.b16 %v526, %v525
    %v534 = vpack.c.b16 %v528, %v527
    %v535 = vpack.c.b16 %v529, %v529
    %vm536 = vsmask.f32 7424
    %v538 = vshrl.u32 %v530, 16
    %v540 = vshll.u32 %v530, 16
    %v542 = vrot.slane %v540, 1
    %v543 = vor.u32 %v538, %v542
    %v545 = vshll.u32 %v531, 16
    %v547 = vrot.slane %v545, 1
    %v548 = vsel %vm536, %v543, %v547
    %v549 = vshrl.u32 %v531, 16
    %v551 = vor.u32 %v549, %v547
    %v553 = vshll.u32 %v532, 16
    %v555 = vrot.slane %v553, 1
    %v556 = vsel %vm536, %v551, %v555
    %v557 = vshrl.u32 %v532, 16
    %v559 = vor.u32 %v557, %v555
    %v561 = vshll.u32 %v533, 16
    %v563 = vrot.slane %v561, 1
    %v564 = vsel %vm536, %v559, %v563
    %v565 = vshrl.u32 %v533, 16
    %v567 = vor.u32 %v565, %v563
    %v569 = vshll.u32 %v534, 16
    %v571 = vrot.slane %v569, 1
    %v572 = vsel %vm536, %v567, %v571
    %v573 = vshrl.u32 %v534, 16
    %v575 = vor.u32 %v573, %v571
    %v577 = vshll.u32 %v535, 16
    %v579 = vrot.slane %v577, 1
    %v580 = vsel %vm536, %v575, %v579
    %v602 = vunpack.c.l.b16 %v492
    %v603 = vunpack.c.l.b16 %v493
    %v604 = vunpack.c.l.b16 %v494
    %v605 = vunpack.c.l.b16 %v495
    %v606 = vunpack.c.l.b16 %v496
    %v607 = vunpack.c.l.b16 %v497
    %v608 = vunpack.c.l.b16 %v498
    %v609 = vunpack.c.l.b16 %v499
    %v610 = vunpack.c.l.b16 %v500
    %v611 = vunpack.c.l.b16 %v501
    %v612 = vunpack.c.l.b16 %v502
    %v613 = vunpack.c.l.b16 %v503
    %v614 = vunpack.c.l.b16 %v504
    %v615 = vunpack.c.l.b16 %v505
    %v616 = vunpack.c.l.b16 %v506
    %v617 = vunpack.c.l.b16 %v507
    %v618 = vpack.c.b16 %v603, %v602
    %v619 = vpack.c.b16 %v605, %v604
    %v620 = vpack.c.b16 %v607, %v606
    %v621 = vpack.c.b16 %v609, %v608
    %v622 = vpack.c.b16 %v611, %v610
    %v623 = vpack.c.b16 %v613, %v612
    %v624 = vpack.c.b16 %v615, %v614
    %v625 = vpack.c.b16 %v617, %v616
    %634 = vmatprep.subr.bf16.mxu0 0
    %635 = vmatpush1.bf16.msra.mxu0 %v625
    %636 = vmatprep.subr.bf16.mxu0 0
    %637 = vmatpush1.bf16.msra.mxu0 %v624
    %638 = vmatprep.subr.bf16.mxu0 0
    %639 = vmatpush1.bf16.msra.mxu0 %v623
    %640 = vmatprep.subr.bf16.mxu0 0
    %641 = vmatpush1.bf16.msra.mxu0 %v622
    %642 = vmatprep.subr.bf16.mxu0 0
    %643 = vmatpush1.bf16.msra.mxu0 %v621
    %644 = vmatprep.subr.bf16.mxu0 0
    %645 = vmatpush1.bf16.msra.mxu0 %v620
    %646 = vmatprep.subr.bf16.mxu0 0
    %647 = vmatpush1.bf16.msra.mxu0 %v619
    %648 = vmatprep.subr.bf16.mxu0 0
    %649 = vmatpush1.bf16.msra.mxu0 %v618
    %650 = vmatprep.subr.bf16.mxu0 0
    %651 = vmatpush2.bf16.msra.mxu0 0
    %652 = vmatprep.subr.bf16.mxu0 0
    %653 = vmatpush2.bf16.msra.mxu0 0
    %654 = vmatprep.subr.bf16.mxu0 0
    %655 = vmatpush2.bf16.msra.mxu0 0
    %656 = vmatprep.subr.bf16.mxu0 0
    %657 = vmatpush2.bf16.msra.mxu0 0
    %658 = vmatprep.subr.bf16.mxu0 0
    %659 = vmatpush2.bf16.msra.mxu0 0
    %660 = vmatprep.subr.bf16.mxu0 0
    %661 = vmatpush2.bf16.msra.mxu0 0
    %662 = vmatprep.subr.bf16.mxu0 0
    %663 = vmatpush2.bf16.msra.mxu0 0
    %664 = vmatprep.subr.bf16.mxu0 0
    %665 = vmatpush2.bf16.msra.mxu0 0
    %666 = vmatprep.mubr.bf16.mxu0 0
    %667 = vmatmul.mubr.bf16.gmra.mxu0 %v548
    %v668 = vpop.f32.mrf.mxu0
    %v669 = vadd.f32 0.0, %v668
    %v670 = vpop.f32.mrf.mxu0
    %v671 = vpop.f32.mrf.mxu0
    %v672 = vadd.f32 0.0, %v671
    %v673 = vpop.f32.mrf.mxu0
    %674 = vmatprep.mubr.bf16.mxu0 0
    %675 = vmatmul.mubr.bf16.gmra.mxu0 %v556
    %v676 = vpop.f32.mrf.mxu0
    %v677 = vadd.f32 0.0, %v676
    %v678 = vpop.f32.mrf.mxu0
    %v679 = vpop.f32.mrf.mxu0
    %v680 = vadd.f32 0.0, %v679
    %v681 = vpop.f32.mrf.mxu0
    %682 = vmatprep.mubr.bf16.mxu0 0
    %683 = vmatmul.mubr.bf16.gmra.mxu0 %v564
    %v684 = vpop.f32.mrf.mxu0
    %v685 = vadd.f32 0.0, %v684
    %v686 = vpop.f32.mrf.mxu0
    %v687 = vpop.f32.mrf.mxu0
    %v688 = vadd.f32 0.0, %v687
    %v689 = vpop.f32.mrf.mxu0
    %690 = vmatprep.mubr.bf16.mxu0 0
    %691 = vmatmul.mubr.bf16.gmra.mxu0 %v572
    %v692 = vpop.f32.mrf.mxu0
    %v693 = vadd.f32 0.0, %v692
    %v694 = vpop.f32.mrf.mxu0
    %v695 = vpop.f32.mrf.mxu0
    %v696 = vadd.f32 0.0, %v695
    %v697 = vpop.f32.mrf.mxu0
    %698 = vmatprep.mubr.bf16.mxu0 0
    %699 = vmatmul.mubr.bf16.gmra.mxu0 %v580
    %v700 = vpop.f32.mrf.mxu0
    %v701 = vadd.f32 0.0, %v700
    %v702 = vpop.f32.mrf.mxu0
    %v703 = vpop.f32.mrf.mxu0
    %v704 = vpop.f32.mrf.mxu0
    %705 = vdwg.mxu0
    %v727 = vunpack.c.l.b16 %v474
    %v728 = vunpack.c.l.b16 %v475
    %v729 = vunpack.c.l.b16 %v476
    %v730 = vunpack.c.l.b16 %v477
    %v731 = vunpack.c.l.b16 %v478
    %v732 = vunpack.c.l.b16 %v479
    %v733 = vunpack.c.l.b16 %v480
    %v734 = vunpack.c.l.b16 %v481
    %v735 = vunpack.c.l.b16 %v482
    %v736 = vunpack.c.l.b16 %v483
    %v737 = vunpack.c.l.b16 %v484
    %v738 = vunpack.c.l.b16 %v485
    %v739 = vunpack.c.l.b16 %v486
    %v740 = vunpack.c.l.b16 %v487
    %v741 = vunpack.c.l.b16 %v488
    %v742 = vunpack.c.l.b16 %v489
    %v743 = vpack.c.b16 %v728, %v727
    %v744 = vpack.c.b16 %v730, %v729
    %v745 = vpack.c.b16 %v732, %v731
    %v746 = vpack.c.b16 %v734, %v733
    %v747 = vpack.c.b16 %v736, %v735
    %v748 = vpack.c.b16 %v738, %v737
    %v749 = vpack.c.b16 %v740, %v739
    %v750 = vpack.c.b16 %v742, %v741
    %759 = vmatprep.subr.bf16.mxu0 0
    %760 = vmatpush1.bf16.msra.mxu0 %v750
    %761 = vmatprep.subr.bf16.mxu0 0
    %762 = vmatpush1.bf16.msra.mxu0 %v749
    %763 = vmatprep.subr.bf16.mxu0 0
    %764 = vmatpush1.bf16.msra.mxu0 %v748
    %765 = vmatprep.subr.bf16.mxu0 0
    %766 = vmatpush1.bf16.msra.mxu0 %v747
    %767 = vmatprep.subr.bf16.mxu0 0
    %768 = vmatpush1.bf16.msra.mxu0 %v746
    %769 = vmatprep.subr.bf16.mxu0 0
    %770 = vmatpush1.bf16.msra.mxu0 %v745
    %771 = vmatprep.subr.bf16.mxu0 0
    %772 = vmatpush1.bf16.msra.mxu0 %v744
    %773 = vmatprep.subr.bf16.mxu0 0
    %774 = vmatpush1.bf16.msra.mxu0 %v743
    %775 = vmatprep.subr.bf16.mxu0 0
    %776 = vmatpush2.bf16.msra.mxu0 0
    %777 = vmatprep.subr.bf16.mxu0 0
    %778 = vmatpush2.bf16.msra.mxu0 0
    %779 = vmatprep.subr.bf16.mxu0 0
    %780 = vmatpush2.bf16.msra.mxu0 0
    %781 = vmatprep.subr.bf16.mxu0 0
    %782 = vmatpush2.bf16.msra.mxu0 0
    %783 = vmatprep.subr.bf16.mxu0 0
    %784 = vmatpush2.bf16.msra.mxu0 0
    %785 = vmatprep.subr.bf16.mxu0 0
    %786 = vmatpush2.bf16.msra.mxu0 0
    %787 = vmatprep.subr.bf16.mxu0 0
    %788 = vmatpush2.bf16.msra.mxu0 0
    %789 = vmatprep.subr.bf16.mxu0 0
    %790 = vmatpush2.bf16.msra.mxu0 0
    %791 = vmatprep.mubr.bf16.mxu0 0
    %792 = vmatmul.mubr.bf16.gmra.mxu0 %v530
    %v793 = vpop.f32.mrf.mxu0
    %v794 = vadd.f32 %v669, %v793
    %v795 = vpop.f32.mrf.mxu0
    %v796 = vpop.f32.mrf.mxu0
    %v797 = vadd.f32 %v672, %v796
    %v798 = vpop.f32.mrf.mxu0
    %799 = vmatprep.mubr.bf16.mxu0 0
    %800 = vmatmul.mubr.bf16.gmra.mxu0 %v531
    %v801 = vpop.f32.mrf.mxu0
    %v802 = vadd.f32 %v677, %v801
    %v803 = vpop.f32.mrf.mxu0
    %v804 = vpop.f32.mrf.mxu0
    %v805 = vadd.f32 %v680, %v804
    %v806 = vpop.f32.mrf.mxu0
    %807 = vmatprep.mubr.bf16.mxu0 0
    %808 = vmatmul.mubr.bf16.gmra.mxu0 %v532
    %v809 = vpop.f32.mrf.mxu0
    %v810 = vadd.f32 %v685, %v809
    %v811 = vpop.f32.mrf.mxu0
    %v812 = vpop.f32.mrf.mxu0
    %v813 = vadd.f32 %v688, %v812
    %v814 = vpop.f32.mrf.mxu0
    %815 = vmatprep.mubr.bf16.mxu0 0
    %816 = vmatmul.mubr.bf16.gmra.mxu0 %v533
    %v817 = vpop.f32.mrf.mxu0
    %v818 = vadd.f32 %v693, %v817
    %v819 = vpop.f32.mrf.mxu0
    %v820 = vpop.f32.mrf.mxu0
    %v821 = vadd.f32 %v696, %v820
    %v822 = vpop.f32.mrf.mxu0
    %823 = vmatprep.mubr.bf16.mxu0 0
    %824 = vmatmul.mubr.bf16.gmra.mxu0 %v534
    %v825 = vpop.f32.mrf.mxu0
    %v826 = vadd.f32 %v701, %v825
    %v827 = vpop.f32.mrf.mxu0
    %v828 = vpop.f32.mrf.mxu0
    %v829 = vpop.f32.mrf.mxu0
    %830 = vdwg.mxu0
    %v831 = vld [vmem:[#allocation8] sm:$0xe]
    %s832 = scalar_lea.vmem %s0, 128
    %v833 = vld [vmem:[%s832] sm:$0xf]
    %v834 = vld [vmem:[%s832 + $0x4] sm:$0xf]
    %v835 = vld [vmem:[%s832 + $0x8] sm:$0xf]
    %v836 = vld [vmem:[%s832 + $0xc] sm:$0xf]
    %v837 = vld [vmem:[%s832 + $0x10] sm:$0xf]
    %v838 = vld [vmem:[%s832 + $0x14] sm:$0xf]
    %v839 = vld [vmem:[%s832 + $0x18] sm:$0xf]
    %v840 = vld [vmem:[%s832 + $0x1c] sm:$0xf]
    %v841 = vld [vmem:[%s832 + $0x20] sm:$0xf]
    %v842 = vld [vmem:[%s832 + $0x24] sm:$0xf]
    %v843 = vld [vmem:[%s832 + $0x28] sm:$0xf]
    %v844 = vld [vmem:[%s832 + $0x2c] sm:$0xf]
    %v845 = vld [vmem:[%s832 + $0x30] sm:$0xf]
    %v846 = vld [vmem:[%s832 + $0x34] sm:$0xf]
    %v847 = vld [vmem:[%s832 + $0x38] sm:$0xf]
    %v848 = vld [vmem:[%s832 + $0x3c] sm:$0xf]
    %v850 = vunpack.c.l.b16 %v831
    %v851 = vpack.c.b16 %v520, %v850
    %vm852 = vcmask 1046528
    %v853 = vrot.slane %v851, 1
    %v854 = vrot.slane %v531, 1
    %v855 = vsel %vm852, %v853, %v854
    %v856 = vrot.slane %v532, 1
    %v857 = vsel %vm852, %v854, %v856
    %v858 = vrot.slane %v533, 1
    %v859 = vsel %vm852, %v856, %v858
    %v860 = vrot.slane %v534, 1
    %v861 = vsel %vm852, %v858, %v860
    %v862 = vrot.slane %v535, 1
    %v863 = vsel %vm852, %v860, %v862
    %v885 = vunpack.c.l.b16 %v833
    %v886 = vunpack.c.l.b16 %v834
    %v887 = vunpack.c.l.b16 %v835
    %v888 = vunpack.c.l.b16 %v836
    %v889 = vunpack.c.l.b16 %v837
    %v890 = vunpack.c.l.b16 %v838
    %v891 = vunpack.c.l.b16 %v839
    %v892 = vunpack.c.l.b16 %v840
    %v893 = vunpack.c.l.b16 %v841
    %v894 = vunpack.c.l.b16 %v842
    %v895 = vunpack.c.l.b16 %v843
    %v896 = vunpack.c.l.b16 %v844
    %v897 = vunpack.c.l.b16 %v845
    %v898 = vunpack.c.l.b16 %v846
    %v899 = vunpack.c.l.b16 %v847
    %v900 = vunpack.c.l.b16 %v848
    %v901 = vpack.c.b16 %v886, %v885
    %v902 = vpack.c.b16 %v888, %v887
    %v903 = vpack.c.b16 %v890, %v889
    %v904 = vpack.c.b16 %v892, %v891
    %v905 = vpack.c.b16 %v894, %v893
    %v906 = vpack.c.b16 %v896, %v895
    %v907 = vpack.c.b16 %v898, %v897
    %v908 = vpack.c.b16 %v900, %v899
    %917 = vmatprep.subr.bf16.mxu0 0
    %918 = vmatpush1.bf16.msra.mxu0 %v908
    %919 = vmatprep.subr.bf16.mxu0 0
    %920 = vmatpush1.bf16.msra.mxu0 %v907
    %921 = vmatprep.subr.bf16.mxu0 0
    %922 = vmatpush1.bf16.msra.mxu0 %v906
    %923 = vmatprep.subr.bf16.mxu0 0
    %924 = vmatpush1.bf16.msra.mxu0 %v905
    %925 = vmatprep.subr.bf16.mxu0 0
    %926 = vmatpush1.bf16.msra.mxu0 %v904
    %927 = vmatprep.subr.bf16.mxu0 0
    %928 = vmatpush1.bf16.msra.mxu0 %v903
    %929 = vmatprep.subr.bf16.mxu0 0
    %930 = vmatpush1.bf16.msra.mxu0 %v902
    %931 = vmatprep.subr.bf16.mxu0 0
    %932 = vmatpush1.bf16.msra.mxu0 %v901
    %933 = vmatprep.subr.bf16.mxu0 0
    %934 = vmatpush2.bf16.msra.mxu0 0
    %935 = vmatprep.subr.bf16.mxu0 0
    %936 = vmatpush2.bf16.msra.mxu0 0
    %937 = vmatprep.subr.bf16.mxu0 0
    %938 = vmatpush2.bf16.msra.mxu0 0
    %939 = vmatprep.subr.bf16.mxu0 0
    %940 = vmatpush2.bf16.msra.mxu0 0
    %941 = vmatprep.subr.bf16.mxu0 0
    %942 = vmatpush2.bf16.msra.mxu0 0
    %943 = vmatprep.subr.bf16.mxu0 0
    %944 = vmatpush2.bf16.msra.mxu0 0
    %945 = vmatprep.subr.bf16.mxu0 0
    %946 = vmatpush2.bf16.msra.mxu0 0
    %947 = vmatprep.subr.bf16.mxu0 0
    %948 = vmatpush2.bf16.msra.mxu0 0
    %949 = vmatprep.mubr.bf16.mxu0 0
    %950 = vmatmul.mubr.bf16.gmra.mxu0 %v855
    %v951 = vpop.f32.mrf.mxu0
    %v952 = vadd.f32 0.0, %v951
    %v953 = vpop.f32.mrf.mxu0
    %v954 = vpop.f32.mrf.mxu0
    %v955 = vadd.f32 0.0, %v954
    %v956 = vpop.f32.mrf.mxu0
    %957 = vmatprep.mubr.bf16.mxu0 0
    %958 = vmatmul.mubr.bf16.gmra.mxu0 %v857
    %v959 = vpop.f32.mrf.mxu0
    %v960 = vadd.f32 0.0, %v959
    %v961 = vpop.f32.mrf.mxu0
    %v962 = vpop.f32.mrf.mxu0
    %v963 = vadd.f32 0.0, %v962
    %v964 = vpop.f32.mrf.mxu0
    %965 = vmatprep.mubr.bf16.mxu0 0
    %966 = vmatmul.mubr.bf16.gmra.mxu0 %v859
    %v967 = vpop.f32.mrf.mxu0
    %v968 = vadd.f32 0.0, %v967
    %v969 = vpop.f32.mrf.mxu0
    %v970 = vpop.f32.mrf.mxu0
    %v971 = vadd.f32 0.0, %v970
    %v972 = vpop.f32.mrf.mxu0
    %973 = vmatprep.mubr.bf16.mxu0 0
    %974 = vmatmul.mubr.bf16.gmra.mxu0 %v861
    %v975 = vpop.f32.mrf.mxu0
    %v976 = vadd.f32 0.0, %v975
    %v977 = vpop.f32.mrf.mxu0
    %v978 = vpop.f32.mrf.mxu0
    %v979 = vadd.f32 0.0, %v978
    %v980 = vpop.f32.mrf.mxu0
    %981 = vmatprep.mubr.bf16.mxu0 0
    %982 = vmatmul.mubr.bf16.gmra.mxu0 %v863
    %v983 = vpop.f32.mrf.mxu0
    %v984 = vadd.f32 0.0, %v983
    %v985 = vpop.f32.mrf.mxu0
    %v986 = vpop.f32.mrf.mxu0
    %v987 = vpop.f32.mrf.mxu0
    %988 = vdwg.mxu0
    %v989 = vadd.f32 %v794, %v952
    %v990 = vadd.f32 %v797, %v955
    %v991 = vadd.f32 %v802, %v960
    %v992 = vadd.f32 %v805, %v963
    %v993 = vadd.f32 %v810, %v968
    %v994 = vadd.f32 %v813, %v971
    %v995 = vadd.f32 %v818, %v976
    %v996 = vadd.f32 %v821, %v979
    %v997 = vadd.f32 %v826, %v984
    %v998 = vld [vmem:[#allocation8 + $0x8] sm:$0xe]
    %v999 = vld [vmem:[#allocation8 + $0xc] sm:$0xf]
    %v1000 = vld [vmem:[#allocation8 + $0x10] sm:$0xf]
    %v1001 = vld [vmem:[#allocation8 + $0x14] sm:$0xf]
    %v1002 = vld [vmem:[#allocation8 + $0x18] sm:$0xf]
    %v1003 = vld [vmem:[#allocation8 + $0x1c] sm:$0xf]
    %v1004 = vld [vmem:[#allocation8 + $0x20] sm:$0xf]
    %v1005 = vld [vmem:[#allocation8 + $0x24] sm:$0xf]
    %v1006 = vld [vmem:[#allocation8 + $0x28] sm:$0xf]
    %v1007 = vld [vmem:[#allocation8 + $0x2c] sm:$0xf]
    %v1008 = vld [vmem:[#allocation8 + $0x30] sm:$0x1]
    %s1009 = scalar_lea.vmem %s0, 192
    %v1010 = vld [vmem:[%s1009] sm:$0xf]
    %v1011 = vld [vmem:[%s1009 + $0x4] sm:$0xf]
    %v1012 = vld [vmem:[%s1009 + $0x8] sm:$0xf]
    %v1013 = vld [vmem:[%s1009 + $0xc] sm:$0xf]
    %v1014 = vld [vmem:[%s1009 + $0x10] sm:$0xf]
    %v1015 = vld [vmem:[%s1009 + $0x14] sm:$0xf]
    %v1016 = vld [vmem:[%s1009 + $0x18] sm:$0xf]
    %v1017 = vld [vmem:[%s1009 + $0x1c] sm:$0xf]
    %v1018 = vld [vmem:[%s1009 + $0x20] sm:$0xf]
    %v1019 = vld [vmem:[%s1009 + $0x24] sm:$0xf]
    %v1020 = vld [vmem:[%s1009 + $0x28] sm:$0xf]
    %v1021 = vld [vmem:[%s1009 + $0x2c] sm:$0xf]
    %v1022 = vld [vmem:[%s1009 + $0x30] sm:$0xf]
    %v1023 = vld [vmem:[%s1009 + $0x34] sm:$0xf]
    %v1024 = vld [vmem:[%s1009 + $0x38] sm:$0xf]
    %v1025 = vld [vmem:[%s1009 + $0x3c] sm:$0xf]
    %v1037 = vunpack.c.l.b16 %v998
    %v1038 = vunpack.c.l.b16 %v999
    %v1039 = vunpack.c.l.b16 %v1000
    %v1040 = vunpack.c.l.b16 %v1001
    %v1041 = vunpack.c.l.b16 %v1002
    %v1042 = vunpack.c.l.b16 %v1003
    %v1043 = vunpack.c.l.b16 %v1004
    %v1044 = vunpack.c.l.b16 %v1005
    %v1045 = vunpack.c.l.b16 %v1006
    %v1046 = vunpack.c.l.b16 %v1007
    %v1047 = vunpack.c.l.b16 %v1008
    %v1048 = vpack.c.b16 %v1038, %v1037
    %v1049 = vpack.c.b16 %v1040, %v1039
    %v1050 = vpack.c.b16 %v1042, %v1041
    %v1051 = vpack.c.b16 %v1044, %v1043
    %v1052 = vpack.c.b16 %v1046, %v1045
    %v1053 = vpack.c.b16 %v1047, %v1047
    %v1054 = vrot.slane %v1048, 1
    %v1055 = vrot.slane %v1049, 1
    %v1056 = vsel %vm852, %v1054, %v1055
    %v1057 = vrot.slane %v1050, 1
    %v1058 = vsel %vm852, %v1055, %v1057
    %v1059 = vrot.slane %v1051, 1
    %v1060 = vsel %vm852, %v1057, %v1059
    %v1061 = vrot.slane %v1052, 1
    %v1062 = vsel %vm852, %v1059, %v1061
    %v1063 = vrot.slane %v1053, 1
    %v1064 = vsel %vm852, %v1061, %v1063
    %v1086 = vunpack.c.l.b16 %v1010
    %v1087 = vunpack.c.l.b16 %v1011
    %v1088 = vunpack.c.l.b16 %v1012
    %v1089 = vunpack.c.l.b16 %v1013
    %v1090 = vunpack.c.l.b16 %v1014
    %v1091 = vunpack.c.l.b16 %v1015
    %v1092 = vunpack.c.l.b16 %v1016
    %v1093 = vunpack.c.l.b16 %v1017
    %v1094 = vunpack.c.l.b16 %v1018
    %v1095 = vunpack.c.l.b16 %v1019
    %v1096 = vunpack.c.l.b16 %v1020
    %v1097 = vunpack.c.l.b16 %v1021
    %v1098 = vunpack.c.l.b16 %v1022
    %v1099 = vunpack.c.l.b16 %v1023
    %v1100 = vunpack.c.l.b16 %v1024
    %v1101 = vunpack.c.l.b16 %v1025
    %v1102 = vpack.c.b16 %v1087, %v1086
    %v1103 = vpack.c.b16 %v1089, %v1088
    %v1104 = vpack.c.b16 %v1091, %v1090
    %v1105 = vpack.c.b16 %v1093, %v1092
    %v1106 = vpack.c.b16 %v1095, %v1094
    %v1107 = vpack.c.b16 %v1097, %v1096
    %v1108 = vpack.c.b16 %v1099, %v1098
    %v1109 = vpack.c.b16 %v1101, %v1100
    %1118 = vmatprep.subr.bf16.mxu0 0
    %1119 = vmatpush1.bf16.msra.mxu0 %v1109
    %1120 = vmatprep.subr.bf16.mxu0 0
    %1121 = vmatpush1.bf16.msra.mxu0 %v1108
    %1122 = vmatprep.subr.bf16.mxu0 0
    %1123 = vmatpush1.bf16.msra.mxu0 %v1107
    %1124 = vmatprep.subr.bf16.mxu0 0
    %1125 = vmatpush1.bf16.msra.mxu0 %v1106
    %1126 = vmatprep.subr.bf16.mxu0 0
    %1127 = vmatpush1.bf16.msra.mxu0 %v1105
    %1128 = vmatprep.subr.bf16.mxu0 0
    %1129 = vmatpush1.bf16.msra.mxu0 %v1104
    %1130 = vmatprep.subr.bf16.mxu0 0
    %1131 = vmatpush1.bf16.msra.mxu0 %v1103
    %1132 = vmatprep.subr.bf16.mxu0 0
    %1133 = vmatpush1.bf16.msra.mxu0 %v1102
    %1134 = vmatprep.subr.bf16.mxu0 0
    %1135 = vmatpush2.bf16.msra.mxu0 0
    %1136 = vmatprep.subr.bf16.mxu0 0
    %1137 = vmatpush2.bf16.msra.mxu0 0
    %1138 = vmatprep.subr.bf16.mxu0 0
    %1139 = vmatpush2.bf16.msra.mxu0 0
    %1140 = vmatprep.subr.bf16.mxu0 0
    %1141 = vmatpush2.bf16.msra.mxu0 0
    %1142 = vmatprep.subr.bf16.mxu0 0
    %1143 = vmatpush2.bf16.msra.mxu0 0
    %1144 = vmatprep.subr.bf16.mxu0 0
    %1145 = vmatpush2.bf16.msra.mxu0 0
    %1146 = vmatprep.subr.bf16.mxu0 0
    %1147 = vmatpush2.bf16.msra.mxu0 0
    %1148 = vmatprep.subr.bf16.mxu0 0
    %1149 = vmatpush2.bf16.msra.mxu0 0
    %1150 = vmatprep.mubr.bf16.mxu0 0
    %1151 = vmatmul.mubr.bf16.gmra.mxu0 %v1056
    %v1152 = vpop.f32.mrf.mxu0
    %v1153 = vadd.f32 0.0, %v1152
    %v1154 = vpop.f32.mrf.mxu0
    %v1155 = vpop.f32.mrf.mxu0
    %v1156 = vadd.f32 0.0, %v1155
    %v1157 = vpop.f32.mrf.mxu0
    %1158 = vmatprep.mubr.bf16.mxu0 0
    %1159 = vmatmul.mubr.bf16.gmra.mxu0 %v1058
    %v1160 = vpop.f32.mrf.mxu0
    %v1161 = vadd.f32 0.0, %v1160
    %v1162 = vpop.f32.mrf.mxu0
    %v1163 = vpop.f32.mrf.mxu0
    %v1164 = vadd.f32 0.0, %v1163
    %v1165 = vpop.f32.mrf.mxu0
    %1166 = vmatprep.mubr.bf16.mxu0 0
    %1167 = vmatmul.mubr.bf16.gmra.mxu0 %v1060
    %v1168 = vpop.f32.mrf.mxu0
    %v1169 = vadd.f32 0.0, %v1168
    %v1170 = vpop.f32.mrf.mxu0
    %v1171 = vpop.f32.mrf.mxu0
    %v1172 = vadd.f32 0.0, %v1171
    %v1173 = vpop.f32.mrf.mxu0
    %1174 = vmatprep.mubr.bf16.mxu0 0
    %1175 = vmatmul.mubr.bf16.gmra.mxu0 %v1062
    %v1176 = vpop.f32.mrf.mxu0
    %v1177 = vadd.f32 0.0, %v1176
    %v1178 = vpop.f32.mrf.mxu0
    %v1179 = vpop.f32.mrf.mxu0
    %v1180 = vadd.f32 0.0, %v1179
    %v1181 = vpop.f32.mrf.mxu0
    %1182 = vmatprep.mubr.bf16.mxu0 0
    %1183 = vmatmul.mubr.bf16.gmra.mxu0 %v1064
    %v1184 = vpop.f32.mrf.mxu0
    %v1185 = vadd.f32 0.0, %v1184
    %v1186 = vpop.f32.mrf.mxu0
    %v1187 = vpop.f32.mrf.mxu0
    %v1188 = vpop.f32.mrf.mxu0
    %1189 = vdwg.mxu0
    %v1190 = vadd.f32 %v989, %v1153
    %v1191 = vadd.f32 %v990, %v1156
    %v1192 = vadd.f32 %v991, %v1161
    %v1193 = vadd.f32 %v992, %v1164
    %v1194 = vadd.f32 %v993, %v1169
    %v1195 = vadd.f32 %v994, %v1172
    %v1196 = vadd.f32 %v995, %v1177
    %v1197 = vadd.f32 %v996, %v1180
    %v1198 = vadd.f32 %v997, %v1185
    %v1199 = vld [vmem:[#allocation8 + $0x30] sm:$0x3]
    %s1200 = scalar_lea.vmem %s0, 256
    %v1201 = vld [vmem:[%s1200] sm:$0xf]
    %v1202 = vld [vmem:[%s1200 + $0x4] sm:$0xf]
    %v1203 = vld [vmem:[%s1200 + $0x8] sm:$0xf]
    %v1204 = vld [vmem:[%s1200 + $0xc] sm:$0xf]
    %v1205 = vld [vmem:[%s1200 + $0x10] sm:$0xf]
    %v1206 = vld [vmem:[%s1200 + $0x14] sm:$0xf]
    %v1207 = vld [vmem:[%s1200 + $0x18] sm:$0xf]
    %v1208 = vld [vmem:[%s1200 + $0x1c] sm:$0xf]
    %v1209 = vld [vmem:[%s1200 + $0x20] sm:$0xf]
    %v1210 = vld [vmem:[%s1200 + $0x24] sm:$0xf]
    %v1211 = vld [vmem:[%s1200 + $0x28] sm:$0xf]
    %v1212 = vld [vmem:[%s1200 + $0x2c] sm:$0xf]
    %v1213 = vld [vmem:[%s1200 + $0x30] sm:$0xf]
    %v1214 = vld [vmem:[%s1200 + $0x34] sm:$0xf]
    %v1215 = vld [vmem:[%s1200 + $0x38] sm:$0xf]
    %v1216 = vld [vmem:[%s1200 + $0x3c] sm:$0xf]
    %v1218 = vunpack.c.l.b16 %v1199
    %v1219 = vpack.c.b16 %v1218, %v1218
    %vm1220 = vsmask.f32 6400
    %v1222 = vshrl.u32 %v1048, 16
    %v1224 = vrot.slane %v1222, 1
    %v1225 = vshll.u32 %v1048, 16
    %v1227 = vrot.slane %v1225, 2
    %v1228 = vor.u32 %v1224, %v1227
    %v1230 = vshrl.u32 %v1049, 16
    %v1232 = vrot.slane %v1230, 1
    %v1233 = vshll.u32 %v1049, 16
    %v1235 = vrot.slane %v1233, 2
    %v1236 = vor.u32 %v1232, %v1235
    %v1237 = vsel %vm1220, %v1228, %v1236
    %v1239 = vshrl.u32 %v1050, 16
    %v1241 = vrot.slane %v1239, 1
    %v1242 = vshll.u32 %v1050, 16
    %v1244 = vrot.slane %v1242, 2
    %v1245 = vor.u32 %v1241, %v1244
    %v1246 = vsel %vm1220, %v1236, %v1245
    %v1248 = vshrl.u32 %v1051, 16
    %v1250 = vrot.slane %v1248, 1
    %v1251 = vshll.u32 %v1051, 16
    %v1253 = vrot.slane %v1251, 2
    %v1254 = vor.u32 %v1250, %v1253
    %v1255 = vsel %vm1220, %v1245, %v1254
    %v1257 = vshrl.u32 %v1052, 16
    %v1259 = vrot.slane %v1257, 1
    %v1260 = vshll.u32 %v1052, 16
    %v1262 = vrot.slane %v1260, 2
    %v1263 = vor.u32 %v1259, %v1262
    %v1264 = vsel %vm1220, %v1254, %v1263
    %v1266 = vshrl.u32 %v1219, 16
    %v1268 = vrot.slane %v1266, 1
    %v1269 = vshll.u32 %v1219, 16
    %v1271 = vrot.slane %v1269, 2
    %v1272 = vor.u32 %v1268, %v1271
    %v1273 = vsel %vm1220, %v1263, %v1272
    %v1295 = vunpack.c.l.b16 %v1201
    %v1296 = vunpack.c.l.b16 %v1202
    %v1297 = vunpack.c.l.b16 %v1203
    %v1298 = vunpack.c.l.b16 %v1204
    %v1299 = vunpack.c.l.b16 %v1205
    %v1300 = vunpack.c.l.b16 %v1206
    %v1301 = vunpack.c.l.b16 %v1207
    %v1302 = vunpack.c.l.b16 %v1208
    %v1303 = vunpack.c.l.b16 %v1209
    %v1304 = vunpack.c.l.b16 %v1210
    %v1305 = vunpack.c.l.b16 %v1211
    %v1306 = vunpack.c.l.b16 %v1212
    %v1307 = vunpack.c.l.b16 %v1213
    %v1308 = vunpack.c.l.b16 %v1214
    %v1309 = vunpack.c.l.b16 %v1215
    %v1310 = vunpack.c.l.b16 %v1216
    %v1311 = vpack.c.b16 %v1296, %v1295
    %v1312 = vpack.c.b16 %v1298, %v1297
    %v1313 = vpack.c.b16 %v1300, %v1299
    %v1314 = vpack.c.b16 %v1302, %v1301
    %v1315 = vpack.c.b16 %v1304, %v1303
    %v1316 = vpack.c.b16 %v1306, %v1305
    %v1317 = vpack.c.b16 %v1308, %v1307
    %v1318 = vpack.c.b16 %v1310, %v1309
    %1327 = vmatprep.subr.bf16.mxu0 0
    %1328 = vmatpush1.bf16.msra.mxu0 %v1318
    %1329 = vmatprep.subr.bf16.mxu0 0
    %1330 = vmatpush1.bf16.msra.mxu0 %v1317
    %1331 = vmatprep.subr.bf16.mxu0 0
    %1332 = vmatpush1.bf16.msra.mxu0 %v1316
    %1333 = vmatprep.subr.bf16.mxu0 0
    %1334 = vmatpush1.bf16.msra.mxu0 %v1315
    %1335 = vmatprep.subr.bf16.mxu0 0
    %1336 = vmatpush1.bf16.msra.mxu0 %v1314
    %1337 = vmatprep.subr.bf16.mxu0 0
    %1338 = vmatpush1.bf16.msra.mxu0 %v1313
    %1339 = vmatprep.subr.bf16.mxu0 0
    %1340 = vmatpush1.bf16.msra.mxu0 %v1312
    %1341 = vmatprep.subr.bf16.mxu0 0
    %1342 = vmatpush1.bf16.msra.mxu0 %v1311
    %1343 = vmatprep.subr.bf16.mxu0 0
    %1344 = vmatpush2.bf16.msra.mxu0 0
    %1345 = vmatprep.subr.bf16.mxu0 0
    %1346 = vmatpush2.bf16.msra.mxu0 0
    %1347 = vmatprep.subr.bf16.mxu0 0
    %1348 = vmatpush2.bf16.msra.mxu0 0
    %1349 = vmatprep.subr.bf16.mxu0 0
    %1350 = vmatpush2.bf16.msra.mxu0 0
    %1351 = vmatprep.subr.bf16.mxu0 0
    %1352 = vmatpush2.bf16.msra.mxu0 0
    %1353 = vmatprep.subr.bf16.mxu0 0
    %1354 = vmatpush2.bf16.msra.mxu0 0
    %1355 = vmatprep.subr.bf16.mxu0 0
    %1356 = vmatpush2.bf16.msra.mxu0 0
    %1357 = vmatprep.subr.bf16.mxu0 0
    %1358 = vmatpush2.bf16.msra.mxu0 0
    %1359 = vmatprep.mubr.bf16.mxu0 0
    %1360 = vmatmul.mubr.bf16.gmra.mxu0 %v1237
    %v1361 = vpop.f32.mrf.mxu0
    %v1362 = vadd.f32 0.0, %v1361
    %v1363 = vpop.f32.mrf.mxu0
    %v1364 = vpop.f32.mrf.mxu0
    %v1365 = vadd.f32 0.0, %v1364
    %v1366 = vpop.f32.mrf.mxu0
    %1367 = vmatprep.mubr.bf16.mxu0 0
    %1368 = vmatmul.mubr.bf16.gmra.mxu0 %v1246
    %v1369 = vpop.f32.mrf.mxu0
    %v1370 = vadd.f32 0.0, %v1369
    %v1371 = vpop.f32.mrf.mxu0
    %v1372 = vpop.f32.mrf.mxu0
    %v1373 = vadd.f32 0.0, %v1372
    %v1374 = vpop.f32.mrf.mxu0
    %1375 = vmatprep.mubr.bf16.mxu0 0
    %1376 = vmatmul.mubr.bf16.gmra.mxu0 %v1255
    %v1377 = vpop.f32.mrf.mxu0
    %v1378 = vadd.f32 0.0, %v1377
    %v1379 = vpop.f32.mrf.mxu0
    %v1380 = vpop.f32.mrf.mxu0
    %v1381 = vadd.f32 0.0, %v1380
    %v1382 = vpop.f32.mrf.mxu0
    %1383 = vmatprep.mubr.bf16.mxu0 0
    %1384 = vmatmul.mubr.bf16.gmra.mxu0 %v1264
    %v1385 = vpop.f32.mrf.mxu0
    %v1386 = vadd.f32 0.0, %v1385
    %v1387 = vpop.f32.mrf.mxu0
    %v1388 = vpop.f32.mrf.mxu0
    %v1389 = vadd.f32 0.0, %v1388
    %v1390 = vpop.f32.mrf.mxu0
    %1391 = vmatprep.mubr.bf16.mxu0 0
    %1392 = vmatmul.mubr.bf16.gmra.mxu0 %v1273
    %v1393 = vpop.f32.mrf.mxu0
    %v1394 = vadd.f32 0.0, %v1393
    %v1395 = vpop.f32.mrf.mxu0
    %v1396 = vpop.f32.mrf.mxu0
    %v1397 = vpop.f32.mrf.mxu0
    %1398 = vdwg.mxu0
    %v1399 = vadd.f32 %v1190, %v1362
    %v1400 = vadd.f32 %v1191, %v1365
    %v1401 = vadd.f32 %v1192, %v1370
    %v1402 = vadd.f32 %v1193, %v1373
    %v1403 = vadd.f32 %v1194, %v1378
    %v1404 = vadd.f32 %v1195, %v1381
    %v1405 = vadd.f32 %v1196, %v1386
    %v1406 = vadd.f32 %v1197, %v1389
    %v1407 = vadd.f32 %v1198, %v1394
    %v1408 = vld [vmem:[#allocation8 + $0x8] sm:$0xc]
    %s1409 = scalar_lea.vmem %s0, 320
    %v1410 = vld [vmem:[%s1409] sm:$0xf]
    %v1411 = vld [vmem:[%s1409 + $0x4] sm:$0xf]
    %v1412 = vld [vmem:[%s1409 + $0x8] sm:$0xf]
    %v1413 = vld [vmem:[%s1409 + $0xc] sm:$0xf]
    %v1414 = vld [vmem:[%s1409 + $0x10] sm:$0xf]
    %v1415 = vld [vmem:[%s1409 + $0x14] sm:$0xf]
    %v1416 = vld [vmem:[%s1409 + $0x18] sm:$0xf]
    %v1417 = vld [vmem:[%s1409 + $0x1c] sm:$0xf]
    %v1418 = vld [vmem:[%s1409 + $0x20] sm:$0xf]
    %v1419 = vld [vmem:[%s1409 + $0x24] sm:$0xf]
    %v1420 = vld [vmem:[%s1409 + $0x28] sm:$0xf]
    %v1421 = vld [vmem:[%s1409 + $0x2c] sm:$0xf]
    %v1422 = vld [vmem:[%s1409 + $0x30] sm:$0xf]
    %v1423 = vld [vmem:[%s1409 + $0x34] sm:$0xf]
    %v1424 = vld [vmem:[%s1409 + $0x38] sm:$0xf]
    %v1425 = vld [vmem:[%s1409 + $0x3c] sm:$0xf]
    %v1427 = vunpack.c.l.b16 %v1408
    %v1428 = vpack.c.b16 %v1038, %v1427
    %vm1429 = vcmask 1045504
    %v1430 = vrot.slane %v1428, 2
    %v1431 = vrot.slane %v1049, 2
    %v1432 = vsel %vm1429, %v1430, %v1431
    %v1433 = vrot.slane %v1050, 2
    %v1434 = vsel %vm1429, %v1431, %v1433
    %v1435 = vrot.slane %v1051, 2
    %v1436 = vsel %vm1429, %v1433, %v1435
    %v1437 = vrot.slane %v1052, 2
    %v1438 = vsel %vm1429, %v1435, %v1437
    %v1439 = vrot.slane %v1219, 2
    %v1440 = vsel %vm1429, %v1437, %v1439
    %v1462 = vunpack.c.l.b16 %v1410
    %v1463 = vunpack.c.l.b16 %v1411
    %v1464 = vunpack.c.l.b16 %v1412
    %v1465 = vunpack.c.l.b16 %v1413
    %v1466 = vunpack.c.l.b16 %v1414
    %v1467 = vunpack.c.l.b16 %v1415
    %v1468 = vunpack.c.l.b16 %v1416
    %v1469 = vunpack.c.l.b16 %v1417
    %v1470 = vunpack.c.l.b16 %v1418
    %v1471 = vunpack.c.l.b16 %v1419
    %v1472 = vunpack.c.l.b16 %v1420
    %v1473 = vunpack.c.l.b16 %v1421
    %v1474 = vunpack.c.l.b16 %v1422
    %v1475 = vunpack.c.l.b16 %v1423
    %v1476 = vunpack.c.l.b16 %v1424
    %v1477 = vunpack.c.l.b16 %v1425
    %v1478 = vpack.c.b16 %v1463, %v1462
    %v1479 = vpack.c.b16 %v1465, %v1464
    %v1480 = vpack.c.b16 %v1467, %v1466
    %v1481 = vpack.c.b16 %v1469, %v1468
    %v1482 = vpack.c.b16 %v1471, %v1470
    %v1483 = vpack.c.b16 %v1473, %v1472
    %v1484 = vpack.c.b16 %v1475, %v1474
    %v1485 = vpack.c.b16 %v1477, %v1476
    %1494 = vmatprep.subr.bf16.mxu0 0
    %1495 = vmatpush1.bf16.msra.mxu0 %v1485
    %1496 = vmatprep.subr.bf16.mxu0 0
    %1497 = vmatpush1.bf16.msra.mxu0 %v1484
    %1498 = vmatprep.subr.bf16.mxu0 0
    %1499 = vmatpush1.bf16.msra.mxu0 %v1483
    %1500 = vmatprep.subr.bf16.mxu0 0
    %1501 = vmatpush1.bf16.msra.mxu0 %v1482
    %1502 = vmatprep.subr.bf16.mxu0 0
    %1503 = vmatpush1.bf16.msra.mxu0 %v1481
    %1504 = vmatprep.subr.bf16.mxu0 0
    %1505 = vmatpush1.bf16.msra.mxu0 %v1480
    %1506 = vmatprep.subr.bf16.mxu0 0
    %1507 = vmatpush1.bf16.msra.mxu0 %v1479
    %1508 = vmatprep.subr.bf16.mxu0 0
    %1509 = vmatpush1.bf16.msra.mxu0 %v1478
    %1510 = vmatprep.subr.bf16.mxu0 0
    %1511 = vmatpush2.bf16.msra.mxu0 0
    %1512 = vmatprep.subr.bf16.mxu0 0
    %1513 = vmatpush2.bf16.msra.mxu0 0
    %1514 = vmatprep.subr.bf16.mxu0 0
    %1515 = vmatpush2.bf16.msra.mxu0 0
    %1516 = vmatprep.subr.bf16.mxu0 0
    %1517 = vmatpush2.bf16.msra.mxu0 0
    %1518 = vmatprep.subr.bf16.mxu0 0
    %1519 = vmatpush2.bf16.msra.mxu0 0
    %1520 = vmatprep.subr.bf16.mxu0 0
    %1521 = vmatpush2.bf16.msra.mxu0 0
    %1522 = vmatprep.subr.bf16.mxu0 0
    %1523 = vmatpush2.bf16.msra.mxu0 0
    %1524 = vmatprep.subr.bf16.mxu0 0
    %1525 = vmatpush2.bf16.msra.mxu0 0
    %1526 = vmatprep.mubr.bf16.mxu0 0
    %1527 = vmatmul.mubr.bf16.gmra.mxu0 %v1432
    %v1528 = vpop.f32.mrf.mxu0
    %v1529 = vadd.f32 0.0, %v1528
    %v1530 = vpop.f32.mrf.mxu0
    %v1531 = vpop.f32.mrf.mxu0
    %v1532 = vadd.f32 0.0, %v1531
    %v1533 = vpop.f32.mrf.mxu0
    %1534 = vmatprep.mubr.bf16.mxu0 0
    %1535 = vmatmul.mubr.bf16.gmra.mxu0 %v1434
    %v1536 = vpop.f32.mrf.mxu0
    %v1537 = vadd.f32 0.0, %v1536
    %v1538 = vpop.f32.mrf.mxu0
    %v1539 = vpop.f32.mrf.mxu0
    %v1540 = vadd.f32 0.0, %v1539
    %v1541 = vpop.f32.mrf.mxu0
    %1542 = vmatprep.mubr.bf16.mxu0 0
    %1543 = vmatmul.mubr.bf16.gmra.mxu0 %v1436
    %v1544 = vpop.f32.mrf.mxu0
    %v1545 = vadd.f32 0.0, %v1544
    %v1546 = vpop.f32.mrf.mxu0
    %v1547 = vpop.f32.mrf.mxu0
    %v1548 = vadd.f32 0.0, %v1547
    %v1549 = vpop.f32.mrf.mxu0
    %1550 = vmatprep.mubr.bf16.mxu0 0
    %1551 = vmatmul.mubr.bf16.gmra.mxu0 %v1438
    %v1552 = vpop.f32.mrf.mxu0
    %v1553 = vadd.f32 0.0, %v1552
    %v1554 = vpop.f32.mrf.mxu0
    %v1555 = vpop.f32.mrf.mxu0
    %v1556 = vadd.f32 0.0, %v1555
    %v1557 = vpop.f32.mrf.mxu0
    %1558 = vmatprep.mubr.bf16.mxu0 0
    %1559 = vmatmul.mubr.bf16.gmra.mxu0 %v1440
    %v1560 = vpop.f32.mrf.mxu0
    %v1561 = vadd.f32 0.0, %v1560
    %v1562 = vpop.f32.mrf.mxu0
    %v1563 = vpop.f32.mrf.mxu0
    %v1564 = vpop.f32.mrf.mxu0
    %1565 = vdwg.mxu0
    %v1566 = vadd.f32 %v1399, %v1529
    %v1567 = vadd.f32 %v1400, %v1532
    %v1568 = vadd.f32 %v1401, %v1537
    %v1569 = vadd.f32 %v1402, %v1540
    %v1570 = vadd.f32 %v1403, %v1545
    %v1571 = vadd.f32 %v1404, %v1548
    %v1572 = vadd.f32 %v1405, %v1553
    %v1573 = vadd.f32 %v1406, %v1556
    %v1574 = vadd.f32 %v1407, %v1561
    %v1575 = vld [vmem:[#allocation8 + $0x10] sm:$0xc]
    %v1576 = vld [vmem:[#allocation8 + $0x14] sm:$0xf]
    %v1577 = vld [vmem:[#allocation8 + $0x18] sm:$0xf]
    %v1578 = vld [vmem:[#allocation8 + $0x1c] sm:$0xf]
    %v1579 = vld [vmem:[#allocation8 + $0x20] sm:$0xf]
    %v1580 = vld [vmem:[#allocation8 + $0x24] sm:$0xf]
    %v1581 = vld [vmem:[#allocation8 + $0x28] sm:$0xf]
    %v1582 = vld [vmem:[#allocation8 + $0x2c] sm:$0xf]
    %v1583 = vld [vmem:[#allocation8 + $0x30] sm:$0xf]
    %v1584 = vld [vmem:[#allocation8 + $0x34] sm:$0xf]
    %v1585 = vld [vmem:[#allocation8 + $0x38] sm:$0x3]
    %s1586 = scalar_lea.vmem %s0, 384
    %v1587 = vld [vmem:[%s1586] sm:$0xf]
    %v1588 = vld [vmem:[%s1586 + $0x4] sm:$0xf]
    %v1589 = vld [vmem:[%s1586 + $0x8] sm:$0xf]
    %v1590 = vld [vmem:[%s1586 + $0xc] sm:$0xf]
    %v1591 = vld [vmem:[%s1586 + $0x10] sm:$0xf]
    %v1592 = vld [vmem:[%s1586 + $0x14] sm:$0xf]
    %v1593 = vld [vmem:[%s1586 + $0x18] sm:$0xf]
    %v1594 = vld [vmem:[%s1586 + $0x1c] sm:$0xf]
    %v1595 = vld [vmem:[%s1586 + $0x20] sm:$0xf]
    %v1596 = vld [vmem:[%s1586 + $0x24] sm:$0xf]
    %v1597 = vld [vmem:[%s1586 + $0x28] sm:$0xf]
    %v1598 = vld [vmem:[%s1586 + $0x2c] sm:$0xf]
    %v1599 = vld [vmem:[%s1586 + $0x30] sm:$0xf]
    %v1600 = vld [vmem:[%s1586 + $0x34] sm:$0xf]
    %v1601 = vld [vmem:[%s1586 + $0x38] sm:$0xf]
    %v1602 = vld [vmem:[%s1586 + $0x3c] sm:$0xf]
    %v1614 = vunpack.c.l.b16 %v1575
    %v1615 = vunpack.c.l.b16 %v1576
    %v1616 = vunpack.c.l.b16 %v1577
    %v1617 = vunpack.c.l.b16 %v1578
    %v1618 = vunpack.c.l.b16 %v1579
    %v1619 = vunpack.c.l.b16 %v1580
    %v1620 = vunpack.c.l.b16 %v1581
    %v1621 = vunpack.c.l.b16 %v1582
    %v1622 = vunpack.c.l.b16 %v1583
    %v1623 = vunpack.c.l.b16 %v1584
    %v1624 = vunpack.c.l.b16 %v1585
    %v1625 = vpack.c.b16 %v1615, %v1614
    %v1626 = vpack.c.b16 %v1617, %v1616
    %v1627 = vpack.c.b16 %v1619, %v1618
    %v1628 = vpack.c.b16 %v1621, %v1620
    %v1629 = vpack.c.b16 %v1623, %v1622
    %v1630 = vpack.c.b16 %v1624, %v1624
    %v1631 = vrot.slane %v1625, 2
    %v1632 = vrot.slane %v1626, 2
    %v1633 = vsel %vm1429, %v1631, %v1632
    %v1634 = vrot.slane %v1627, 2
    %v1635 = vsel %vm1429, %v1632, %v1634
    %v1636 = vrot.slane %v1628, 2
    %v1637 = vsel %vm1429, %v1634, %v1636
    %v1638 = vrot.slane %v1629, 2
    %v1639 = vsel %vm1429, %v1636, %v1638
    %v1640 = vrot.slane %v1630, 2
    %v1641 = vsel %vm1429, %v1638, %v1640
    %v1663 = vunpack.c.l.b16 %v1587
    %v1664 = vunpack.c.l.b16 %v1588
    %v1665 = vunpack.c.l.b16 %v1589
    %v1666 = vunpack.c.l.b16 %v1590
    %v1667 = vunpack.c.l.b16 %v1591
    %v1668 = vunpack.c.l.b16 %v1592
    %v1669 = vunpack.c.l.b16 %v1593
    %v1670 = vunpack.c.l.b16 %v1594
    %v1671 = vunpack.c.l.b16 %v1595
    %v1672 = vunpack.c.l.b16 %v1596
    %v1673 = vunpack.c.l.b16 %v1597
    %v1674 = vunpack.c.l.b16 %v1598
    %v1675 = vunpack.c.l.b16 %v1599
    %v1676 = vunpack.c.l.b16 %v1600
    %v1677 = vunpack.c.l.b16 %v1601
    %v1678 = vunpack.c.l.b16 %v1602
    %v1679 = vpack.c.b16 %v1664, %v1663
    %v1680 = vpack.c.b16 %v1666, %v1665
    %v1681 = vpack.c.b16 %v1668, %v1667
    %v1682 = vpack.c.b16 %v1670, %v1669
    %v1683 = vpack.c.b16 %v1672, %v1671
    %v1684 = vpack.c.b16 %v1674, %v1673
    %v1685 = vpack.c.b16 %v1676, %v1675
    %v1686 = vpack.c.b16 %v1678, %v1677
    %1695 = vmatprep.subr.bf16.mxu0 0
    %1696 = vmatpush1.bf16.msra.mxu0 %v1686
    %1697 = vmatprep.subr.bf16.mxu0 0
    %1698 = vmatpush1.bf16.msra.mxu0 %v1685
    %1699 = vmatprep.subr.bf16.mxu0 0
    %1700 = vmatpush1.bf16.msra.mxu0 %v1684
    %1701 = vmatprep.subr.bf16.mxu0 0
    %1702 = vmatpush1.bf16.msra.mxu0 %v1683
    %1703 = vmatprep.subr.bf16.mxu0 0
    %1704 = vmatpush1.bf16.msra.mxu0 %v1682
    %1705 = vmatprep.subr.bf16.mxu0 0
    %1706 = vmatpush1.bf16.msra.mxu0 %v1681
    %1707 = vmatprep.subr.bf16.mxu0 0
    %1708 = vmatpush1.bf16.msra.mxu0 %v1680
    %1709 = vmatprep.subr.bf16.mxu0 0
    %1710 = vmatpush1.bf16.msra.mxu0 %v1679
    %1711 = vmatprep.subr.bf16.mxu0 0
    %1712 = vmatpush2.bf16.msra.mxu0 0
    %1713 = vmatprep.subr.bf16.mxu0 0
    %1714 = vmatpush2.bf16.msra.mxu0 0
    %1715 = vmatprep.subr.bf16.mxu0 0
    %1716 = vmatpush2.bf16.msra.mxu0 0
    %1717 = vmatprep.subr.bf16.mxu0 0
    %1718 = vmatpush2.bf16.msra.mxu0 0
    %1719 = vmatprep.subr.bf16.mxu0 0
    %1720 = vmatpush2.bf16.msra.mxu0 0
    %1721 = vmatprep.subr.bf16.mxu0 0
    %1722 = vmatpush2.bf16.msra.mxu0 0
    %1723 = vmatprep.subr.bf16.mxu0 0
    %1724 = vmatpush2.bf16.msra.mxu0 0
    %1725 = vmatprep.subr.bf16.mxu0 0
    %1726 = vmatpush2.bf16.msra.mxu0 0
    %1727 = vmatprep.mubr.bf16.mxu0 0
    %1728 = vmatmul.mubr.bf16.gmra.mxu0 %v1633
    %v1729 = vpop.f32.mrf.mxu0
    %v1730 = vadd.f32 0.0, %v1729
    %v1731 = vpop.f32.mrf.mxu0
    %v1732 = vpop.f32.mrf.mxu0
    %v1733 = vadd.f32 0.0, %v1732
    %v1734 = vpop.f32.mrf.mxu0
    %1735 = vmatprep.mubr.bf16.mxu0 0
    %1736 = vmatmul.mubr.bf16.gmra.mxu0 %v1635
    %v1737 = vpop.f32.mrf.mxu0
    %v1738 = vadd.f32 0.0, %v1737
    %v1739 = vpop.f32.mrf.mxu0
    %v1740 = vpop.f32.mrf.mxu0
    %v1741 = vadd.f32 0.0, %v1740
    %v1742 = vpop.f32.mrf.mxu0
    %1743 = vmatprep.mubr.bf16.mxu0 0
    %1744 = vmatmul.mubr.bf16.gmra.mxu0 %v1637
    %v1745 = vpop.f32.mrf.mxu0
    %v1746 = vadd.f32 0.0, %v1745
    %v1747 = vpop.f32.mrf.mxu0
    %v1748 = vpop.f32.mrf.mxu0
    %v1749 = vadd.f32 0.0, %v1748
    %v1750 = vpop.f32.mrf.mxu0
    %1751 = vmatprep.mubr.bf16.mxu0 0
    %1752 = vmatmul.mubr.bf16.gmra.mxu0 %v1639
    %v1753 = vpop.f32.mrf.mxu0
    %v1754 = vadd.f32 0.0, %v1753
    %v1755 = vpop.f32.mrf.mxu0
    %v1756 = vpop.f32.mrf.mxu0
    %v1757 = vadd.f32 0.0, %v1756
    %v1758 = vpop.f32.mrf.mxu0
    %1759 = vmatprep.mubr.bf16.mxu0 0
    %1760 = vmatmul.mubr.bf16.gmra.mxu0 %v1641
    %v1761 = vpop.f32.mrf.mxu0
    %v1762 = vadd.f32 0.0, %v1761
    %v1763 = vpop.f32.mrf.mxu0
    %v1764 = vpop.f32.mrf.mxu0
    %v1765 = vpop.f32.mrf.mxu0
    %1766 = vdwg.mxu0
    %v1767 = vadd.f32 %v1566, %v1730
    %v1768 = vadd.f32 %v1567, %v1733
    %v1769 = vadd.f32 %v1568, %v1738
    %v1770 = vadd.f32 %v1569, %v1741
    %v1771 = vadd.f32 %v1570, %v1746
    %v1772 = vadd.f32 %v1571, %v1749
    %v1773 = vadd.f32 %v1572, %v1754
    %v1774 = vadd.f32 %v1573, %v1757
    %v1775 = vadd.f32 %v1574, %v1762
    %v1776 = vld [vmem:[#allocation8 + $0x38] sm:$0x7]
    %s1777 = scalar_lea.vmem %s0, 448
    %v1778 = vld [vmem:[%s1777] sm:$0xf]
    %v1779 = vld [vmem:[%s1777 + $0x4] sm:$0xf]
    %v1780 = vld [vmem:[%s1777 + $0x8] sm:$0xf]
    %v1781 = vld [vmem:[%s1777 + $0xc] sm:$0xf]
    %v1782 = vld [vmem:[%s1777 + $0x10] sm:$0xf]
    %v1783 = vld [vmem:[%s1777 + $0x14] sm:$0xf]
    %v1784 = vld [vmem:[%s1777 + $0x18] sm:$0xf]
    %v1785 = vld [vmem:[%s1777 + $0x1c] sm:$0xf]
    %v1786 = vld [vmem:[%s1777 + $0x20] sm:$0xf]
    %v1787 = vld [vmem:[%s1777 + $0x24] sm:$0xf]
    %v1788 = vld [vmem:[%s1777 + $0x28] sm:$0xf]
    %v1789 = vld [vmem:[%s1777 + $0x2c] sm:$0xf]
    %v1790 = vld [vmem:[%s1777 + $0x30] sm:$0xf]
    %v1791 = vld [vmem:[%s1777 + $0x34] sm:$0xf]
    %v1792 = vld [vmem:[%s1777 + $0x38] sm:$0xf]
    %v1793 = vld [vmem:[%s1777 + $0x3c] sm:$0xf]
    %v1795 = vunpack.c.l.b16 %v1776
    %v1796 = vpack.c.b16 %v1795, %v1795
    %vm1797 = vsmask.f32 5376
    %v1799 = vshrl.u32 %v1625, 16
    %v1801 = vrot.slane %v1799, 2
    %v1802 = vshll.u32 %v1625, 16
    %v1804 = vrot.slane %v1802, 3
    %v1805 = vor.u32 %v1801, %v1804
    %v1807 = vshrl.u32 %v1626, 16
    %v1809 = vrot.slane %v1807, 2
    %v1810 = vshll.u32 %v1626, 16
    %v1812 = vrot.slane %v1810, 3
    %v1813 = vor.u32 %v1809, %v1812
    %v1814 = vsel %vm1797, %v1805, %v1813
    %v1816 = vshrl.u32 %v1627, 16
    %v1818 = vrot.slane %v1816, 2
    %v1819 = vshll.u32 %v1627, 16
    %v1821 = vrot.slane %v1819, 3
    %v1822 = vor.u32 %v1818, %v1821
    %v1823 = vsel %vm1797, %v1813, %v1822
    %v1825 = vshrl.u32 %v1628, 16
    %v1827 = vrot.slane %v1825, 2
    %v1828 = vshll.u32 %v1628, 16
    %v1830 = vrot.slane %v1828, 3
    %v1831 = vor.u32 %v1827, %v1830
    %v1832 = vsel %vm1797, %v1822, %v1831
    %v1834 = vshrl.u32 %v1629, 16
    %v1836 = vrot.slane %v1834, 2
    %v1837 = vshll.u32 %v1629, 16
    %v1839 = vrot.slane %v1837, 3
    %v1840 = vor.u32 %v1836, %v1839
    %v1841 = vsel %vm1797, %v1831, %v1840
    %v1843 = vshrl.u32 %v1796, 16
    %v1845 = vrot.slane %v1843, 2
    %v1846 = vshll.u32 %v1796, 16
    %v1848 = vrot.slane %v1846, 3
    %v1849 = vor.u32 %v1845, %v1848
    %v1850 = vsel %vm1797, %v1840, %v1849
    %v1872 = vunpack.c.l.b16 %v1778
    %v1873 = vunpack.c.l.b16 %v1779
    %v1874 = vunpack.c.l.b16 %v1780
    %v1875 = vunpack.c.l.b16 %v1781
    %v1876 = vunpack.c.l.b16 %v1782
    %v1877 = vunpack.c.l.b16 %v1783
    %v1878 = vunpack.c.l.b16 %v1784
    %v1879 = vunpack.c.l.b16 %v1785
    %v1880 = vunpack.c.l.b16 %v1786
    %v1881 = vunpack.c.l.b16 %v1787
    %v1882 = vunpack.c.l.b16 %v1788
    %v1883 = vunpack.c.l.b16 %v1789
    %v1884 = vunpack.c.l.b16 %v1790
    %v1885 = vunpack.c.l.b16 %v1791
    %v1886 = vunpack.c.l.b16 %v1792
    %v1887 = vunpack.c.l.b16 %v1793
    %v1888 = vpack.c.b16 %v1873, %v1872
    %v1889 = vpack.c.b16 %v1875, %v1874
    %v1890 = vpack.c.b16 %v1877, %v1876
    %v1891 = vpack.c.b16 %v1879, %v1878
    %v1892 = vpack.c.b16 %v1881, %v1880
    %v1893 = vpack.c.b16 %v1883, %v1882
    %v1894 = vpack.c.b16 %v1885, %v1884
    %v1895 = vpack.c.b16 %v1887, %v1886
    %1904 = vmatprep.subr.bf16.mxu0 0
    %1905 = vmatpush1.bf16.msra.mxu0 %v1895
    %1906 = vmatprep.subr.bf16.mxu0 0
    %1907 = vmatpush1.bf16.msra.mxu0 %v1894
    %1908 = vmatprep.subr.bf16.mxu0 0
    %1909 = vmatpush1.bf16.msra.mxu0 %v1893
    %1910 = vmatprep.subr.bf16.mxu0 0
    %1911 = vmatpush1.bf16.msra.mxu0 %v1892
    %1912 = vmatprep.subr.bf16.mxu0 0
    %1913 = vmatpush1.bf16.msra.mxu0 %v1891
    %1914 = vmatprep.subr.bf16.mxu0 0
    %1915 = vmatpush1.bf16.msra.mxu0 %v1890
    %1916 = vmatprep.subr.bf16.mxu0 0
    %1917 = vmatpush1.bf16.msra.mxu0 %v1889
    %1918 = vmatprep.subr.bf16.mxu0 0
    %1919 = vmatpush1.bf16.msra.mxu0 %v1888
    %1920 = vmatprep.subr.bf16.mxu0 0
    %1921 = vmatpush2.bf16.msra.mxu0 0
    %1922 = vmatprep.subr.bf16.mxu0 0
    %1923 = vmatpush2.bf16.msra.mxu0 0
    %1924 = vmatprep.subr.bf16.mxu0 0
    %1925 = vmatpush2.bf16.msra.mxu0 0
    %1926 = vmatprep.subr.bf16.mxu0 0
    %1927 = vmatpush2.bf16.msra.mxu0 0
    %1928 = vmatprep.subr.bf16.mxu0 0
    %1929 = vmatpush2.bf16.msra.mxu0 0
    %1930 = vmatprep.subr.bf16.mxu0 0
    %1931 = vmatpush2.bf16.msra.mxu0 0
    %1932 = vmatprep.subr.bf16.mxu0 0
    %1933 = vmatpush2.bf16.msra.mxu0 0
    %1934 = vmatprep.subr.bf16.mxu0 0
    %1935 = vmatpush2.bf16.msra.mxu0 0
    %1936 = vmatprep.mubr.bf16.mxu0 0
    %1937 = vmatmul.mubr.bf16.gmra.mxu0 %v1814
    %v1938 = vpop.f32.mrf.mxu0
    %v1939 = vadd.f32 0.0, %v1938
    %v1940 = vpop.f32.mrf.mxu0
    %v1941 = vpop.f32.mrf.mxu0
    %v1942 = vadd.f32 0.0, %v1941
    %v1943 = vpop.f32.mrf.mxu0
    %1944 = vmatprep.mubr.bf16.mxu0 0
    %1945 = vmatmul.mubr.bf16.gmra.mxu0 %v1823
    %v1946 = vpop.f32.mrf.mxu0
    %v1947 = vadd.f32 0.0, %v1946
    %v1948 = vpop.f32.mrf.mxu0
    %v1949 = vpop.f32.mrf.mxu0
    %v1950 = vadd.f32 0.0, %v1949
    %v1951 = vpop.f32.mrf.mxu0
    %1952 = vmatprep.mubr.bf16.mxu0 0
    %1953 = vmatmul.mubr.bf16.gmra.mxu0 %v1832
    %v1954 = vpop.f32.mrf.mxu0
    %v1955 = vadd.f32 0.0, %v1954
    %v1956 = vpop.f32.mrf.mxu0
    %v1957 = vpop.f32.mrf.mxu0
    %v1958 = vadd.f32 0.0, %v1957
    %v1959 = vpop.f32.mrf.mxu0
    %1960 = vmatprep.mubr.bf16.mxu0 0
    %1961 = vmatmul.mubr.bf16.gmra.mxu0 %v1841
    %v1962 = vpop.f32.mrf.mxu0
    %v1963 = vadd.f32 0.0, %v1962
    %v1964 = vpop.f32.mrf.mxu0
    %v1965 = vpop.f32.mrf.mxu0
    %v1966 = vadd.f32 0.0, %v1965
    %v1967 = vpop.f32.mrf.mxu0
    %1968 = vmatprep.mubr.bf16.mxu0 0
    %1969 = vmatmul.mubr.bf16.gmra.mxu0 %v1850
    %v1970 = vpop.f32.mrf.mxu0
    %v1971 = vadd.f32 0.0, %v1970
    %v1972 = vpop.f32.mrf.mxu0
    %v1973 = vpop.f32.mrf.mxu0
    %v1974 = vpop.f32.mrf.mxu0
    %1975 = vdwg.mxu0
    %v1976 = vadd.f32 %v1767, %v1939
    %v1977 = vadd.f32 %v1768, %v1942
    %v1978 = vadd.f32 %v1769, %v1947
    %v1979 = vadd.f32 %v1770, %v1950
    %v1980 = vadd.f32 %v1771, %v1955
    %v1981 = vadd.f32 %v1772, %v1958
    %v1982 = vadd.f32 %v1773, %v1963
    %v1983 = vadd.f32 %v1774, %v1966
    %v1984 = vadd.f32 %v1775, %v1971
    %v1985 = vld [vmem:[#allocation8 + $0x10] sm:$0x8]
    %s1986 = scalar_lea.vmem %s0, 512
    %v1987 = vld [vmem:[%s1986] sm:$0xf]
    %v1988 = vld [vmem:[%s1986 + $0x4] sm:$0xf]
    %v1989 = vld [vmem:[%s1986 + $0x8] sm:$0xf]
    %v1990 = vld [vmem:[%s1986 + $0xc] sm:$0xf]
    %v1991 = vld [vmem:[%s1986 + $0x10] sm:$0xf]
    %v1992 = vld [vmem:[%s1986 + $0x14] sm:$0xf]
    %v1993 = vld [vmem:[%s1986 + $0x18] sm:$0xf]
    %v1994 = vld [vmem:[%s1986 + $0x1c] sm:$0xf]
    %v1995 = vld [vmem:[%s1986 + $0x20] sm:$0xf]
    %v1996 = vld [vmem:[%s1986 + $0x24] sm:$0xf]
    %v1997 = vld [vmem:[%s1986 + $0x28] sm:$0xf]
    %v1998 = vld [vmem:[%s1986 + $0x2c] sm:$0xf]
    %v1999 = vld [vmem:[%s1986 + $0x30] sm:$0xf]
    %v2000 = vld [vmem:[%s1986 + $0x34] sm:$0xf]
    %v2001 = vld [vmem:[%s1986 + $0x38] sm:$0xf]
    %v2002 = vld [vmem:[%s1986 + $0x3c] sm:$0xf]
    %v2004 = vunpack.c.l.b16 %v1985
    %v2005 = vpack.c.b16 %v1615, %v2004
    %vm2006 = vcmask 1044480
    %v2007 = vrot.slane %v2005, 3
    %v2008 = vrot.slane %v1626, 3
    %v2009 = vsel %vm2006, %v2007, %v2008
    %v2010 = vrot.slane %v1627, 3
    %v2011 = vsel %vm2006, %v2008, %v2010
    %v2012 = vrot.slane %v1628, 3
    %v2013 = vsel %vm2006, %v2010, %v2012
    %v2014 = vrot.slane %v1629, 3
    %v2015 = vsel %vm2006, %v2012, %v2014
    %v2016 = vrot.slane %v1796, 3
    %v2017 = vsel %vm2006, %v2014, %v2016
    %v2039 = vunpack.c.l.b16 %v1987
    %v2040 = vunpack.c.l.b16 %v1988
    %v2041 = vunpack.c.l.b16 %v1989
    %v2042 = vunpack.c.l.b16 %v1990
    %v2043 = vunpack.c.l.b16 %v1991
    %v2044 = vunpack.c.l.b16 %v1992
    %v2045 = vunpack.c.l.b16 %v1993
    %v2046 = vunpack.c.l.b16 %v1994
    %v2047 = vunpack.c.l.b16 %v1995
    %v2048 = vunpack.c.l.b16 %v1996
    %v2049 = vunpack.c.l.b16 %v1997
    %v2050 = vunpack.c.l.b16 %v1998
    %v2051 = vunpack.c.l.b16 %v1999
    %v2052 = vunpack.c.l.b16 %v2000
    %v2053 = vunpack.c.l.b16 %v2001
    %v2054 = vunpack.c.l.b16 %v2002
    %v2055 = vpack.c.b16 %v2040, %v2039
    %v2056 = vpack.c.b16 %v2042, %v2041
    %v2057 = vpack.c.b16 %v2044, %v2043
    %v2058 = vpack.c.b16 %v2046, %v2045
    %v2059 = vpack.c.b16 %v2048, %v2047
    %v2060 = vpack.c.b16 %v2050, %v2049
    %v2061 = vpack.c.b16 %v2052, %v2051
    %v2062 = vpack.c.b16 %v2054, %v2053
    %2071 = vmatprep.subr.bf16.mxu0 0
    %2072 = vmatpush1.bf16.msra.mxu0 %v2062
    %2073 = vmatprep.subr.bf16.mxu0 0
    %2074 = vmatpush1.bf16.msra.mxu0 %v2061
    %2075 = vmatprep.subr.bf16.mxu0 0
    %2076 = vmatpush1.bf16.msra.mxu0 %v2060
    %2077 = vmatprep.subr.bf16.mxu0 0
    %2078 = vmatpush1.bf16.msra.mxu0 %v2059
    %2079 = vmatprep.subr.bf16.mxu0 0
    %2080 = vmatpush1.bf16.msra.mxu0 %v2058
    %2081 = vmatprep.subr.bf16.mxu0 0
    %2082 = vmatpush1.bf16.msra.mxu0 %v2057
    %2083 = vmatprep.subr.bf16.mxu0 0
    %2084 = vmatpush1.bf16.msra.mxu0 %v2056
    %2085 = vmatprep.subr.bf16.mxu0 0
    %2086 = vmatpush1.bf16.msra.mxu0 %v2055
    %2087 = vmatprep.subr.bf16.mxu0 0
    %2088 = vmatpush2.bf16.msra.mxu0 0
    %2089 = vmatprep.subr.bf16.mxu0 0
    %2090 = vmatpush2.bf16.msra.mxu0 0
    %2091 = vmatprep.subr.bf16.mxu0 0
    %2092 = vmatpush2.bf16.msra.mxu0 0
    %2093 = vmatprep.subr.bf16.mxu0 0
    %2094 = vmatpush2.bf16.msra.mxu0 0
    %2095 = vmatprep.subr.bf16.mxu0 0
    %2096 = vmatpush2.bf16.msra.mxu0 0
    %2097 = vmatprep.subr.bf16.mxu0 0
    %2098 = vmatpush2.bf16.msra.mxu0 0
    %2099 = vmatprep.subr.bf16.mxu0 0
    %2100 = vmatpush2.bf16.msra.mxu0 0
    %2101 = vmatprep.subr.bf16.mxu0 0
    %2102 = vmatpush2.bf16.msra.mxu0 0
    %2103 = vmatprep.mubr.bf16.mxu0 0
    %2104 = vmatmul.mubr.bf16.gmra.mxu0 %v2009
    %v2105 = vpop.f32.mrf.mxu0
    %v2106 = vadd.f32 0.0, %v2105
    %v2107 = vpop.f32.mrf.mxu0
    %v2108 = vpop.f32.mrf.mxu0
    %v2109 = vadd.f32 0.0, %v2108
    %v2110 = vpop.f32.mrf.mxu0
    %2111 = vmatprep.mubr.bf16.mxu0 0
    %2112 = vmatmul.mubr.bf16.gmra.mxu0 %v2011
    %v2113 = vpop.f32.mrf.mxu0
    %v2114 = vadd.f32 0.0, %v2113
    %v2115 = vpop.f32.mrf.mxu0
    %v2116 = vpop.f32.mrf.mxu0
    %v2117 = vadd.f32 0.0, %v2116
    %v2118 = vpop.f32.mrf.mxu0
    %2119 = vmatprep.mubr.bf16.mxu0 0
    %2120 = vmatmul.mubr.bf16.gmra.mxu0 %v2013
    %v2121 = vpop.f32.mrf.mxu0
    %v2122 = vadd.f32 0.0, %v2121
    %v2123 = vpop.f32.mrf.mxu0
    %v2124 = vpop.f32.mrf.mxu0
    %v2125 = vadd.f32 0.0, %v2124
    %v2126 = vpop.f32.mrf.mxu0
    %2127 = vmatprep.mubr.bf16.mxu0 0
    %2128 = vmatmul.mubr.bf16.gmra.mxu0 %v2015
    %v2129 = vpop.f32.mrf.mxu0
    %v2130 = vadd.f32 0.0, %v2129
    %v2131 = vpop.f32.mrf.mxu0
    %v2132 = vpop.f32.mrf.mxu0
    %v2133 = vadd.f32 0.0, %v2132
    %v2134 = vpop.f32.mrf.mxu0
    %2135 = vmatprep.mubr.bf16.mxu0 0
    %2136 = vmatmul.mubr.bf16.gmra.mxu0 %v2017
    %v2137 = vpop.f32.mrf.mxu0
    %v2138 = vadd.f32 0.0, %v2137
    %v2139 = vpop.f32.mrf.mxu0
    %v2140 = vpop.f32.mrf.mxu0
    %v2141 = vpop.f32.mrf.mxu0
    %2142 = vdwg.mxu0
    %v2143 = vadd.f32 %v1976, %v2106
    %v2144 = vadd.f32 %v1977, %v2109
    %v2145 = vadd.f32 %v1978, %v2114
    %v2146 = vadd.f32 %v1979, %v2117
    %v2147 = vadd.f32 %v1980, %v2122
    %v2148 = vadd.f32 %v1981, %v2125
    %v2149 = vadd.f32 %v1982, %v2130
    %v2150 = vadd.f32 %v1983, %v2133
    %v2151 = vadd.f32 %v1984, %v2138
    %v2153 = vlaneseq
    %v2154 = vshrl.u32 %v2153, 7
    %v2155 = vsub.s32 0, %v2154
    %v2156 = vrot.slane %v463, %v2155
    %v2158 = vadd.f32 %v2143, %v2156
    %v2159 = vadd.f32 %v2144, %v2156
    %v2160 = vadd.f32 %v2145, %v2156
    %v2161 = vadd.f32 %v2146, %v2156
    %v2162 = vadd.f32 %v2147, %v2156
    %v2163 = vadd.f32 %v2148, %v2156
    %v2164 = vadd.f32 %v2149, %v2156
    %v2165 = vadd.f32 %v2150, %v2156
    %v2166 = vadd.f32 %v2151, %v2156
    %2167 = vst [vmem:[#allocation2] sm:$0xff] %v2158
    %2168 = vst [vmem:[#allocation2 + $0x8] sm:$0xff] %v2159
    %v2169 = vadd.f32 %v2158, %v2159
    %v2170 = vrot.slane %v2169, 4
    %v2171 = vadd.f32 %v2169, %v2170
    %v2172 = vrot.slane %v2171, 2
    %v2173 = vadd.f32 %v2171, %v2172
    %v2174 = vrot.slane %v2173, 1
    %v2175 = vadd.f32 %v2173, %v2174
    %v2176 = vadd.f32 %v2175, 0.0
    %2177 = vst [vmem:[#allocation2 + $0xe] sm:$0xfc] %v2160
    %2178 = vst [vmem:[#allocation2 + $0x16] sm:$0xff] %v2161
    %2179 = vst [vmem:[#allocation2 + $0x1e] sm:$0x3] %v2162
    %vm2183 = vcmask 1045504
    %v2184 = vrot.slane %v2160, 2
    %v2185 = vrot.slane %v2161, 2
    %v2186 = vsel %vm2183, %v2184, %v2185
    %v2187 = vrot.slane %v2162, 2
    %v2188 = vsel %vm2183, %v2185, %v2187
    %v2191 = vadd.f32 %v2186, %v2188
    %v2192 = vrot.slane %v2191, 4
    %v2193 = vadd.f32 %v2191, %v2192
    %v2194 = vrot.slane %v2193, 2
    %v2195 = vadd.f32 %v2193, %v2194
    %v2196 = vrot.slane %v2195, 1
    %v2197 = vadd.f32 %v2195, %v2196
    %v2198 = vadd.f32 %v2176, %v2197
    %2199 = vst [vmem:[#allocation2 + $0x1c] sm:$0xf0] %v2162
    %2200 = vst [vmem:[#allocation2 + $0x24] sm:$0xff] %v2163
    %2201 = vst [vmem:[#allocation2 + $0x2c] sm:$0xf] %v2164
    %vm2204 = vcmask 1043456
    %v2205 = vrot.slane %v2162, 4
    %v2206 = vrot.slane %v2163, 4
    %v2207 = vsel %vm2204, %v2205, %v2206
    %v2208 = vrot.slane %v2164, 4
    %v2209 = vsel %vm2204, %v2206, %v2208
    %v2212 = vadd.f32 %v2207, %v2209
    %v2213 = vrot.slane %v2212, 4
    %v2214 = vadd.f32 %v2212, %v2213
    %v2215 = vrot.slane %v2214, 2
    %v2216 = vadd.f32 %v2214, %v2215
    %v2217 = vrot.slane %v2216, 1
    %v2218 = vadd.f32 %v2216, %v2217
    %v2219 = vadd.f32 %v2198, %v2218
    %2220 = vst [vmem:[#allocation2 + $0x2a] sm:$0xc0] %v2164
    %2221 = vst [vmem:[#allocation2 + $0x32] sm:$0xff] %v2165
    %2222 = vst [vmem:[#allocation2 + $0x3a] sm:$0x3f] %v2166
    %vm2225 = vcmask 1041408
    %v2226 = vrot.slane %v2164, 6
    %v2227 = vrot.slane %v2165, 6
    %v2228 = vsel %vm2225, %v2226, %v2227
    %v2229 = vrot.slane %v2166, 6
    %v2230 = vsel %vm2225, %v2227, %v2229
    %v2233 = vadd.f32 %v2228, %v2230
    %v2234 = vrot.slane %v2233, 4
    %v2235 = vadd.f32 %v2233, %v2234
    %v2236 = vrot.slane %v2235, 2
    %v2237 = vadd.f32 %v2235, %v2236
    %v2238 = vrot.slane %v2237, 1
    %v2239 = vadd.f32 %v2237, %v2238
    %v2240 = vadd.f32 %v2219, %v2239
    %s2241 = scalar_lea.vmem [#allocation8], 60
    %v2242 = vld [vmem:[%s2241] sm:$0xf]
    %v2243 = vld [vmem:[%s2241 + $0x4] sm:$0xf]
    %v2244 = vld [vmem:[%s2241 + $0x8] sm:$0xf]
    %v2245 = vld [vmem:[%s2241 + $0xc] sm:$0xf]
    %v2246 = vld [vmem:[%s2241 + $0x10] sm:$0xf]
    %v2247 = vld [vmem:[%s2241 + $0x14] sm:$0xf]
    %v2248 = vld [vmem:[%s2241 + $0x18] sm:$0xf]
    %v2249 = vld [vmem:[%s2241 + $0x1c] sm:$0xf]
    %v2250 = vld [vmem:[%s2241 + $0x20] sm:$0xf]
    %v2251 = vld [vmem:[%s2241 + $0x24] sm:$0xf]
    %v2252 = vld [vmem:[%s0] sm:$0xf]
    %v2253 = vld [vmem:[%s0 + $0x4] sm:$0xf]
    %v2254 = vld [vmem:[%s0 + $0x8] sm:$0xf]
    %v2255 = vld [vmem:[%s0 + $0xc] sm:$0xf]
    %v2256 = vld [vmem:[%s0 + $0x10] sm:$0xf]
    %v2257 = vld [vmem:[%s0 + $0x14] sm:$0xf]
    %v2258 = vld [vmem:[%s0 + $0x18] sm:$0xf]
    %v2259 = vld [vmem:[%s0 + $0x1c] sm:$0xf]
    %v2260 = vld [vmem:[%s0 + $0x20] sm:$0xf]
    %v2261 = vld [vmem:[%s0 + $0x24] sm:$0xf]
    %v2262 = vld [vmem:[%s0 + $0x28] sm:$0xf]
    %v2263 = vld [vmem:[%s0 + $0x2c] sm:$0xf]
    %v2264 = vld [vmem:[%s0 + $0x30] sm:$0xf]
    %v2265 = vld [vmem:[%s0 + $0x34] sm:$0xf]
    %v2266 = vld [vmem:[%s0 + $0x38] sm:$0xf]
    %v2267 = vld [vmem:[%s0 + $0x3c] sm:$0xf]
    %v2268 = vld [vmem:[%s2241 + $0x28] sm:$0x1]
    %v2269 = vld [vmem:[%s491] sm:$0xf]
    %v2270 = vld [vmem:[%s491 + $0x4] sm:$0xf]
    %v2271 = vld [vmem:[%s491 + $0x8] sm:$0xf]
    %v2272 = vld [vmem:[%s491 + $0xc] sm:$0xf]
    %v2273 = vld [vmem:[%s491 + $0x10] sm:$0xf]
    %v2274 = vld [vmem:[%s491 + $0x14] sm:$0xf]
    %v2275 = vld [vmem:[%s491 + $0x18] sm:$0xf]
    %v2276 = vld [vmem:[%s491 + $0x1c] sm:$0xf]
    %v2277 = vld [vmem:[%s491 + $0x20] sm:$0xf]
    %v2278 = vld [vmem:[%s491 + $0x24] sm:$0xf]
    %v2279 = vld [vmem:[%s491 + $0x28] sm:$0xf]
    %v2280 = vld [vmem:[%s491 + $0x2c] sm:$0xf]
    %v2281 = vld [vmem:[%s491 + $0x30] sm:$0xf]
    %v2282 = vld [vmem:[%s491 + $0x34] sm:$0xf]
    %v2283 = vld [vmem:[%s491 + $0x38] sm:$0xf]
    %v2284 = vld [vmem:[%s491 + $0x3c] sm:$0xf]
    %v2296 = vunpack.c.l.b16 %v2242
    %v2297 = vunpack.c.l.b16 %v2243
    %v2298 = vunpack.c.l.b16 %v2244
    %v2299 = vunpack.c.l.b16 %v2245
    %v2300 = vunpack.c.l.b16 %v2246
    %v2301 = vunpack.c.l.b16 %v2247
    %v2302 = vunpack.c.l.b16 %v2248
    %v2303 = vunpack.c.l.b16 %v2249
    %v2304 = vunpack.c.l.b16 %v2250
    %v2305 = vunpack.c.l.b16 %v2251
    %v2306 = vunpack.c.l.b16 %v2268
    %v2307 = vpack.c.b16 %v2297, %v2296
    %v2308 = vpack.c.b16 %v2299, %v2298
    %v2309 = vpack.c.b16 %v2301, %v2300
    %v2310 = vpack.c.b16 %v2303, %v2302
    %v2311 = vpack.c.b16 %v2305, %v2304
    %v2312 = vpack.c.b16 %v2306, %v2306
    %v2314 = vshrl.u32 %v2307, 16
    %v2316 = vshll.u32 %v2307, 16
    %v2318 = vrot.slane %v2316, 1
    %v2319 = vor.u32 %v2314, %v2318
    %v2321 = vshll.u32 %v2308, 16
    %v2323 = vrot.slane %v2321, 1
    %v2324 = vsel %vm536, %v2319, %v2323
    %v2325 = vshrl.u32 %v2308, 16
    %v2327 = vor.u32 %v2325, %v2323
    %v2329 = vshll.u32 %v2309, 16
    %v2331 = vrot.slane %v2329, 1
    %v2332 = vsel %vm536, %v2327, %v2331
    %v2333 = vshrl.u32 %v2309, 16
    %v2335 = vor.u32 %v2333, %v2331
    %v2337 = vshll.u32 %v2310, 16
    %v2339 = vrot.slane %v2337, 1
    %v2340 = vsel %vm536, %v2335, %v2339
    %v2341 = vshrl.u32 %v2310, 16
    %v2343 = vor.u32 %v2341, %v2339
    %v2345 = vshll.u32 %v2311, 16
    %v2347 = vrot.slane %v2345, 1
    %v2348 = vsel %vm536, %v2343, %v2347
    %v2349 = vshrl.u32 %v2311, 16
    %v2351 = vor.u32 %v2349, %v2347
    %v2353 = vshll.u32 %v2312, 16
    %v2355 = vrot.slane %v2353, 1
    %v2356 = vsel %vm536, %v2351, %v2355
    %v2378 = vunpack.c.l.b16 %v2269
    %v2379 = vunpack.c.l.b16 %v2270
    %v2380 = vunpack.c.l.b16 %v2271
    %v2381 = vunpack.c.l.b16 %v2272
    %v2382 = vunpack.c.l.b16 %v2273
    %v2383 = vunpack.c.l.b16 %v2274
    %v2384 = vunpack.c.l.b16 %v2275
    %v2385 = vunpack.c.l.b16 %v2276
    %v2386 = vunpack.c.l.b16 %v2277
    %v2387 = vunpack.c.l.b16 %v2278
    %v2388 = vunpack.c.l.b16 %v2279
    %v2389 = vunpack.c.l.b16 %v2280
    %v2390 = vunpack.c.l.b16 %v2281
    %v2391 = vunpack.c.l.b16 %v2282
    %v2392 = vunpack.c.l.b16 %v2283
    %v2393 = vunpack.c.l.b16 %v2284
    %v2394 = vpack.c.b16 %v2379, %v2378
    %v2395 = vpack.c.b16 %v2381, %v2380
    %v2396 = vpack.c.b16 %v2383, %v2382
    %v2397 = vpack.c.b16 %v2385, %v2384
    %v2398 = vpack.c.b16 %v2387, %v2386
    %v2399 = vpack.c.b16 %v2389, %v2388
    %v2400 = vpack.c.b16 %v2391, %v2390
    %v2401 = vpack.c.b16 %v2393, %v2392
    %2410 = vmatprep.subr.bf16.mxu0 0
    %2411 = vmatpush1.bf16.msra.mxu0 %v2401
    %2412 = vmatprep.subr.bf16.mxu0 0
    %2413 = vmatpush1.bf16.msra.mxu0 %v2400
    %2414 = vmatprep.subr.bf16.mxu0 0
    %2415 = vmatpush1.bf16.msra.mxu0 %v2399
    %2416 = vmatprep.subr.bf16.mxu0 0
    %2417 = vmatpush1.bf16.msra.mxu0 %v2398
    %2418 = vmatprep.subr.bf16.mxu0 0
    %2419 = vmatpush1.bf16.msra.mxu0 %v2397
    %2420 = vmatprep.subr.bf16.mxu0 0
    %2421 = vmatpush1.bf16.msra.mxu0 %v2396
    %2422 = vmatprep.subr.bf16.mxu0 0
    %2423 = vmatpush1.bf16.msra.mxu0 %v2395
    %2424 = vmatprep.subr.bf16.mxu0 0
    %2425 = vmatpush1.bf16.msra.mxu0 %v2394
    %2426 = vmatprep.subr.bf16.mxu0 0
    %2427 = vmatpush2.bf16.msra.mxu0 0
    %2428 = vmatprep.subr.bf16.mxu0 0
    %2429 = vmatpush2.bf16.msra.mxu0 0
    %2430 = vmatprep.subr.bf16.mxu0 0
    %2431 = vmatpush2.bf16.msra.mxu0 0
    %2432 = vmatprep.subr.bf16.mxu0 0
    %2433 = vmatpush2.bf16.msra.mxu0 0
    %2434 = vmatprep.subr.bf16.mxu0 0
    %2435 = vmatpush2.bf16.msra.mxu0 0
    %2436 = vmatprep.subr.bf16.mxu0 0
    %2437 = vmatpush2.bf16.msra.mxu0 0
    %2438 = vmatprep.subr.bf16.mxu0 0
    %2439 = vmatpush2.bf16.msra.mxu0 0
    %2440 = vmatprep.subr.bf16.mxu0 0
    %2441 = vmatpush2.bf16.msra.mxu0 0
    %2442 = vmatprep.mubr.bf16.mxu0 0
    %2443 = vmatmul.mubr.bf16.gmra.mxu0 %v2324
    %v2444 = vpop.f32.mrf.mxu0
    %v2445 = vadd.f32 0.0, %v2444
    %v2446 = vpop.f32.mrf.mxu0
    %v2447 = vpop.f32.mrf.mxu0
    %v2448 = vadd.f32 0.0, %v2447
    %v2449 = vpop.f32.mrf.mxu0
    %2450 = vmatprep.mubr.bf16.mxu0 0
    %2451 = vmatmul.mubr.bf16.gmra.mxu0 %v2332
    %v2452 = vpop.f32.mrf.mxu0
    %v2453 = vadd.f32 0.0, %v2452
    %v2454 = vpop.f32.mrf.mxu0
    %v2455 = vpop.f32.mrf.mxu0
    %v2456 = vadd.f32 0.0, %v2455
    %v2457 = vpop.f32.mrf.mxu0
    %2458 = vmatprep.mubr.bf16.mxu0 0
    %2459 = vmatmul.mubr.bf16.gmra.mxu0 %v2340
    %v2460 = vpop.f32.mrf.mxu0
    %v2461 = vadd.f32 0.0, %v2460
    %v2462 = vpop.f32.mrf.mxu0
    %v2463 = vpop.f32.mrf.mxu0
    %v2464 = vadd.f32 0.0, %v2463
    %v2465 = vpop.f32.mrf.mxu0
    %2466 = vmatprep.mubr.bf16.mxu0 0
    %2467 = vmatmul.mubr.bf16.gmra.mxu0 %v2348
    %v2468 = vpop.f32.mrf.mxu0
    %v2469 = vadd.f32 0.0, %v2468
    %v2470 = vpop.f32.mrf.mxu0
    %v2471 = vpop.f32.mrf.mxu0
    %v2472 = vadd.f32 0.0, %v2471
    %v2473 = vpop.f32.mrf.mxu0
    %2474 = vmatprep.mubr.bf16.mxu0 0
    %2475 = vmatmul.mubr.bf16.gmra.mxu0 %v2356
    %v2476 = vpop.f32.mrf.mxu0
    %v2477 = vadd.f32 0.0, %v2476
    %v2478 = vpop.f32.mrf.mxu0
    %v2479 = vpop.f32.mrf.mxu0
    %v2480 = vpop.f32.mrf.mxu0
    %2481 = vdwg.mxu0
    %v2503 = vunpack.c.l.b16 %v2252
    %v2504 = vunpack.c.l.b16 %v2253
    %v2505 = vunpack.c.l.b16 %v2254
    %v2506 = vunpack.c.l.b16 %v2255
    %v2507 = vunpack.c.l.b16 %v2256
    %v2508 = vunpack.c.l.b16 %v2257
    %v2509 = vunpack.c.l.b16 %v2258
    %v2510 = vunpack.c.l.b16 %v2259
    %v2511 = vunpack.c.l.b16 %v2260
    %v2512 = vunpack.c.l.b16 %v2261
    %v2513 = vunpack.c.l.b16 %v2262
    %v2514 = vunpack.c.l.b16 %v2263
    %v2515 = vunpack.c.l.b16 %v2264
    %v2516 = vunpack.c.l.b16 %v2265
    %v2517 = vunpack.c.l.b16 %v2266
    %v2518 = vunpack.c.l.b16 %v2267
    %v2519 = vpack.c.b16 %v2504, %v2503
    %v2520 = vpack.c.b16 %v2506, %v2505
    %v2521 = vpack.c.b16 %v2508, %v2507
    %v2522 = vpack.c.b16 %v2510, %v2509
    %v2523 = vpack.c.b16 %v2512, %v2511
    %v2524 = vpack.c.b16 %v2514, %v2513
    %v2525 = vpack.c.b16 %v2516, %v2515
    %v2526 = vpack.c.b16 %v2518, %v2517
    %2535 = vmatprep.subr.bf16.mxu0 0
    %2536 = vmatpush1.bf16.msra.mxu0 %v2526
    %2537 = vmatprep.subr.bf16.mxu0 0
    %2538 = vmatpush1.bf16.msra.mxu0 %v2525
    %2539 = vmatprep.subr.bf16.mxu0 0
    %2540 = vmatpush1.bf16.msra.mxu0 %v2524
    %2541 = vmatprep.subr.bf16.mxu0 0
    %2542 = vmatpush1.bf16.msra.mxu0 %v2523
    %2543 = vmatprep.subr.bf16.mxu0 0
    %2544 = vmatpush1.bf16.msra.mxu0 %v2522
    %2545 = vmatprep.subr.bf16.mxu0 0
    %2546 = vmatpush1.bf16.msra.mxu0 %v2521
    %2547 = vmatprep.subr.bf16.mxu0 0
    %2548 = vmatpush1.bf16.msra.mxu0 %v2520
    %2549 = vmatprep.subr.bf16.mxu0 0
    %2550 = vmatpush1.bf16.msra.mxu0 %v2519
    %2551 = vmatprep.subr.bf16.mxu0 0
    %2552 = vmatpush2.bf16.msra.mxu0 0
    %2553 = vmatprep.subr.bf16.mxu0 0
    %2554 = vmatpush2.bf16.msra.mxu0 0
    %2555 = vmatprep.subr.bf16.mxu0 0
    %2556 = vmatpush2.bf16.msra.mxu0 0
    %2557 = vmatprep.subr.bf16.mxu0 0
    %2558 = vmatpush2.bf16.msra.mxu0 0
    %2559 = vmatprep.subr.bf16.mxu0 0
    %2560 = vmatpush2.bf16.msra.mxu0 0
    %2561 = vmatprep.subr.bf16.mxu0 0
    %2562 = vmatpush2.bf16.msra.mxu0 0
    %2563 = vmatprep.subr.bf16.mxu0 0
    %2564 = vmatpush2.bf16.msra.mxu0 0
    %2565 = vmatprep.subr.bf16.mxu0 0
    %2566 = vmatpush2.bf16.msra.mxu0 0
    %2567 = vmatprep.mubr.bf16.mxu0 0
    %2568 = vmatmul.mubr.bf16.gmra.mxu0 %v2307
    %v2569 = vpop.f32.mrf.mxu0
    %v2570 = vadd.f32 %v2445, %v2569
    %v2571 = vpop.f32.mrf.mxu0
    %v2572 = vpop.f32.mrf.mxu0
    %v2573 = vadd.f32 %v2448, %v2572
    %v2574 = vpop.f32.mrf.mxu0
    %2575 = vmatprep.mubr.bf16.mxu0 0
    %2576 = vmatmul.mubr.bf16.gmra.mxu0 %v2308
    %v2577 = vpop.f32.mrf.mxu0
    %v2578 = vadd.f32 %v2453, %v2577
    %v2579 = vpop.f32.mrf.mxu0
    %v2580 = vpop.f32.mrf.mxu0
    %v2581 = vadd.f32 %v2456, %v2580
    %v2582 = vpop.f32.mrf.mxu0
    %2583 = vmatprep.mubr.bf16.mxu0 0
    %2584 = vmatmul.mubr.bf16.gmra.mxu0 %v2309
    %v2585 = vpop.f32.mrf.mxu0
    %v2586 = vadd.f32 %v2461, %v2585
    %v2587 = vpop.f32.mrf.mxu0
    %v2588 = vpop.f32.mrf.mxu0
    %v2589 = vadd.f32 %v2464, %v2588
    %v2590 = vpop.f32.mrf.mxu0
    %2591 = vmatprep.mubr.bf16.mxu0 0
    %2592 = vmatmul.mubr.bf16.gmra.mxu0 %v2310
    %v2593 = vpop.f32.mrf.mxu0
    %v2594 = vadd.f32 %v2469, %v2593
    %v2595 = vpop.f32.mrf.mxu0
    %v2596 = vpop.f32.mrf.mxu0
    %v2597 = vadd.f32 %v2472, %v2596
    %v2598 = vpop.f32.mrf.mxu0
    %2599 = vmatprep.mubr.bf16.mxu0 0
    %2600 = vmatmul.mubr.bf16.gmra.mxu0 %v2311
    %v2601 = vpop.f32.mrf.mxu0
    %v2602 = vadd.f32 %v2477, %v2601
    %v2603 = vpop.f32.mrf.mxu0
    %v2604 = vpop.f32.mrf.mxu0
    %v2605 = vpop.f32.mrf.mxu0
    %2606 = vdwg.mxu0
    %v2607 = vld [vmem:[%s2241] sm:$0xe]
    %v2608 = vld [vmem:[%s832] sm:$0xf]
    %v2609 = vld [vmem:[%s832 + $0x4] sm:$0xf]
    %v2610 = vld [vmem:[%s832 + $0x8] sm:$0xf]
    %v2611 = vld [vmem:[%s832 + $0xc] sm:$0xf]
    %v2612 = vld [vmem:[%s832 + $0x10] sm:$0xf]
    %v2613 = vld [vmem:[%s832 + $0x14] sm:$0xf]
    %v2614 = vld [vmem:[%s832 + $0x18] sm:$0xf]
    %v2615 = vld [vmem:[%s832 + $0x1c] sm:$0xf]
    %v2616 = vld [vmem:[%s832 + $0x20] sm:$0xf]
    %v2617 = vld [vmem:[%s832 + $0x24] sm:$0xf]
    %v2618 = vld [vmem:[%s832 + $0x28] sm:$0xf]
    %v2619 = vld [vmem:[%s832 + $0x2c] sm:$0xf]
    %v2620 = vld [vmem:[%s832 + $0x30] sm:$0xf]
    %v2621 = vld [vmem:[%s832 + $0x34] sm:$0xf]
    %v2622 = vld [vmem:[%s832 + $0x38] sm:$0xf]
    %v2623 = vld [vmem:[%s832 + $0x3c] sm:$0xf]
    %v2625 = vunpack.c.l.b16 %v2607
    %v2626 = vpack.c.b16 %v2297, %v2625
    %v2627 = vrot.slane %v2626, 1
    %v2628 = vrot.slane %v2308, 1
    %v2629 = vsel %vm852, %v2627, %v2628
    %v2630 = vrot.slane %v2309, 1
    %v2631 = vsel %vm852, %v2628, %v2630
    %v2632 = vrot.slane %v2310, 1
    %v2633 = vsel %vm852, %v2630, %v2632
    %v2634 = vrot.slane %v2311, 1
    %v2635 = vsel %vm852, %v2632, %v2634
    %v2636 = vrot.slane %v2312, 1
    %v2637 = vsel %vm852, %v2634, %v2636
    %v2659 = vunpack.c.l.b16 %v2608
    %v2660 = vunpack.c.l.b16 %v2609
    %v2661 = vunpack.c.l.b16 %v2610
    %v2662 = vunpack.c.l.b16 %v2611
    %v2663 = vunpack.c.l.b16 %v2612
    %v2664 = vunpack.c.l.b16 %v2613
    %v2665 = vunpack.c.l.b16 %v2614
    %v2666 = vunpack.c.l.b16 %v2615
    %v2667 = vunpack.c.l.b16 %v2616
    %v2668 = vunpack.c.l.b16 %v2617
    %v2669 = vunpack.c.l.b16 %v2618
    %v2670 = vunpack.c.l.b16 %v2619
    %v2671 = vunpack.c.l.b16 %v2620
    %v2672 = vunpack.c.l.b16 %v2621
    %v2673 = vunpack.c.l.b16 %v2622
    %v2674 = vunpack.c.l.b16 %v2623
    %v2675 = vpack.c.b16 %v2660, %v2659
    %v2676 = vpack.c.b16 %v2662, %v2661
    %v2677 = vpack.c.b16 %v2664, %v2663
    %v2678 = vpack.c.b16 %v2666, %v2665
    %v2679 = vpack.c.b16 %v2668, %v2667
    %v2680 = vpack.c.b16 %v2670, %v2669
    %v2681 = vpack.c.b16 %v2672, %v2671
    %v2682 = vpack.c.b16 %v2674, %v2673
    %2691 = vmatprep.subr.bf16.mxu0 0
    %2692 = vmatpush1.bf16.msra.mxu0 %v2682
    %2693 = vmatprep.subr.bf16.mxu0 0
    %2694 = vmatpush1.bf16.msra.mxu0 %v2681
    %2695 = vmatprep.subr.bf16.mxu0 0
    %2696 = vmatpush1.bf16.msra.mxu0 %v2680
    %2697 = vmatprep.subr.bf16.mxu0 0
    %2698 = vmatpush1.bf16.msra.mxu0 %v2679
    %2699 = vmatprep.subr.bf16.mxu0 0
    %2700 = vmatpush1.bf16.msra.mxu0 %v2678
    %2701 = vmatprep.subr.bf16.mxu0 0
    %2702 = vmatpush1.bf16.msra.mxu0 %v2677
    %2703 = vmatprep.subr.bf16.mxu0 0
    %2704 = vmatpush1.bf16.msra.mxu0 %v2676
    %2705 = vmatprep.subr.bf16.mxu0 0
    %2706 = vmatpush1.bf16.msra.mxu0 %v2675
    %2707 = vmatprep.subr.bf16.mxu0 0
    %2708 = vmatpush2.bf16.msra.mxu0 0
    %2709 = vmatprep.subr.bf16.mxu0 0
    %2710 = vmatpush2.bf16.msra.mxu0 0
    %2711 = vmatprep.subr.bf16.mxu0 0
    %2712 = vmatpush2.bf16.msra.mxu0 0
    %2713 = vmatprep.subr.bf16.mxu0 0
    %2714 = vmatpush2.bf16.msra.mxu0 0
    %2715 = vmatprep.subr.bf16.mxu0 0
    %2716 = vmatpush2.bf16.msra.mxu0 0
    %2717 = vmatprep.subr.bf16.mxu0 0
    %2718 = vmatpush2.bf16.msra.mxu0 0
    %2719 = vmatprep.subr.bf16.mxu0 0
    %2720 = vmatpush2.bf16.msra.mxu0 0
    %2721 = vmatprep.subr.bf16.mxu0 0
    %2722 = vmatpush2.bf16.msra.mxu0 0
    %2723 = vmatprep.mubr.bf16.mxu0 0
    %2724 = vmatmul.mubr.bf16.gmra.mxu0 %v2629
    %v2725 = vpop.f32.mrf.mxu0
    %v2726 = vadd.f32 0.0, %v2725
    %v2727 = vpop.f32.mrf.mxu0
    %v2728 = vpop.f32.mrf.mxu0
    %v2729 = vadd.f32 0.0, %v2728
    %v2730 = vpop.f32.mrf.mxu0
    %2731 = vmatprep.mubr.bf16.mxu0 0
    %2732 = vmatmul.mubr.bf16.gmra.mxu0 %v2631
    %v2733 = vpop.f32.mrf.mxu0
    %v2734 = vadd.f32 0.0, %v2733
    %v2735 = vpop.f32.mrf.mxu0
    %v2736 = vpop.f32.mrf.mxu0
    %v2737 = vadd.f32 0.0, %v2736
    %v2738 = vpop.f32.mrf.mxu0
    %2739 = vmatprep.mubr.bf16.mxu0 0
    %2740 = vmatmul.mubr.bf16.gmra.mxu0 %v2633
    %v2741 = vpop.f32.mrf.mxu0
    %v2742 = vadd.f32 0.0, %v2741
    %v2743 = vpop.f32.mrf.mxu0
    %v2744 = vpop.f32.mrf.mxu0
    %v2745 = vadd.f32 0.0, %v2744
    %v2746 = vpop.f32.mrf.mxu0
    %2747 = vmatprep.mubr.bf16.mxu0 0
    %2748 = vmatmul.mubr.bf16.gmra.mxu0 %v2635
    %v2749 = vpop.f32.mrf.mxu0
    %v2750 = vadd.f32 0.0, %v2749
    %v2751 = vpop.f32.mrf.mxu0
    %v2752 = vpop.f32.mrf.mxu0
    %v2753 = vadd.f32 0.0, %v2752
    %v2754 = vpop.f32.mrf.mxu0
    %2755 = vmatprep.mubr.bf16.mxu0 0
    %2756 = vmatmul.mubr.bf16.gmra.mxu0 %v2637
    %v2757 = vpop.f32.mrf.mxu0
    %v2758 = vadd.f32 0.0, %v2757
    %v2759 = vpop.f32.mrf.mxu0
    %v2760 = vpop.f32.mrf.mxu0
    %v2761 = vpop.f32.mrf.mxu0
    %2762 = vdwg.mxu0
    %v2763 = vadd.f32 %v2570, %v2726
    %v2764 = vadd.f32 %v2573, %v2729
    %v2765 = vadd.f32 %v2578, %v2734
    %v2766 = vadd.f32 %v2581, %v2737
    %v2767 = vadd.f32 %v2586, %v2742
    %v2768 = vadd.f32 %v2589, %v2745
    %v2769 = vadd.f32 %v2594, %v2750
    %v2770 = vadd.f32 %v2597, %v2753
    %v2771 = vadd.f32 %v2602, %v2758
    %v2772 = vld [vmem:[%s2241 + $0x8] sm:$0xe]
    %v2773 = vld [vmem:[%s2241 + $0xc] sm:$0xf]
    %v2774 = vld [vmem:[%s2241 + $0x10] sm:$0xf]
    %v2775 = vld [vmem:[%s2241 + $0x14] sm:$0xf]
    %v2776 = vld [vmem:[%s2241 + $0x18] sm:$0xf]
    %v2777 = vld [vmem:[%s2241 + $0x1c] sm:$0xf]
    %v2778 = vld [vmem:[%s2241 + $0x20] sm:$0xf]
    %v2779 = vld [vmem:[%s2241 + $0x24] sm:$0xf]
    %v2780 = vld [vmem:[%s2241 + $0x28] sm:$0xf]
    %v2781 = vld [vmem:[%s2241 + $0x2c] sm:$0xf]
    %v2782 = vld [vmem:[%s2241 + $0x30] sm:$0x1]
    %v2783 = vld [vmem:[%s1009] sm:$0xf]
    %v2784 = vld [vmem:[%s1009 + $0x4] sm:$0xf]
    %v2785 = vld [vmem:[%s1009 + $0x8] sm:$0xf]
    %v2786 = vld [vmem:[%s1009 + $0xc] sm:$0xf]
    %v2787 = vld [vmem:[%s1009 + $0x10] sm:$0xf]
    %v2788 = vld [vmem:[%s1009 + $0x14] sm:$0xf]
    %v2789 = vld [vmem:[%s1009 + $0x18] sm:$0xf]
    %v2790 = vld [vmem:[%s1009 + $0x1c] sm:$0xf]
    %v2791 = vld [vmem:[%s1009 + $0x20] sm:$0xf]
    %v2792 = vld [vmem:[%s1009 + $0x24] sm:$0xf]
    %v2793 = vld [vmem:[%s1009 + $0x28] sm:$0xf]
    %v2794 = vld [vmem:[%s1009 + $0x2c] sm:$0xf]
    %v2795 = vld [vmem:[%s1009 + $0x30] sm:$0xf]
    %v2796 = vld [vmem:[%s1009 + $0x34] sm:$0xf]
    %v2797 = vld [vmem:[%s1009 + $0x38] sm:$0xf]
    %v2798 = vld [vmem:[%s1009 + $0x3c] sm:$0xf]
    %v2810 = vunpack.c.l.b16 %v2772
    %v2811 = vunpack.c.l.b16 %v2773
    %v2812 = vunpack.c.l.b16 %v2774
    %v2813 = vunpack.c.l.b16 %v2775
    %v2814 = vunpack.c.l.b16 %v2776
    %v2815 = vunpack.c.l.b16 %v2777
    %v2816 = vunpack.c.l.b16 %v2778
    %v2817 = vunpack.c.l.b16 %v2779
    %v2818 = vunpack.c.l.b16 %v2780
    %v2819 = vunpack.c.l.b16 %v2781
    %v2820 = vunpack.c.l.b16 %v2782
    %v2821 = vpack.c.b16 %v2811, %v2810
    %v2822 = vpack.c.b16 %v2813, %v2812
    %v2823 = vpack.c.b16 %v2815, %v2814
    %v2824 = vpack.c.b16 %v2817, %v2816
    %v2825 = vpack.c.b16 %v2819, %v2818
    %v2826 = vpack.c.b16 %v2820, %v2820
    %v2827 = vrot.slane %v2821, 1
    %v2828 = vrot.slane %v2822, 1
    %v2829 = vsel %vm852, %v2827, %v2828
    %v2830 = vrot.slane %v2823, 1
    %v2831 = vsel %vm852, %v2828, %v2830
    %v2832 = vrot.slane %v2824, 1
    %v2833 = vsel %vm852, %v2830, %v2832
    %v2834 = vrot.slane %v2825, 1
    %v2835 = vsel %vm852, %v2832, %v2834
    %v2836 = vrot.slane %v2826, 1
    %v2837 = vsel %vm852, %v2834, %v2836
    %v2859 = vunpack.c.l.b16 %v2783
    %v2860 = vunpack.c.l.b16 %v2784
    %v2861 = vunpack.c.l.b16 %v2785
    %v2862 = vunpack.c.l.b16 %v2786
    %v2863 = vunpack.c.l.b16 %v2787
    %v2864 = vunpack.c.l.b16 %v2788
    %v2865 = vunpack.c.l.b16 %v2789
    %v2866 = vunpack.c.l.b16 %v2790
    %v2867 = vunpack.c.l.b16 %v2791
    %v2868 = vunpack.c.l.b16 %v2792
    %v2869 = vunpack.c.l.b16 %v2793
    %v2870 = vunpack.c.l.b16 %v2794
    %v2871 = vunpack.c.l.b16 %v2795
    %v2872 = vunpack.c.l.b16 %v2796
    %v2873 = vunpack.c.l.b16 %v2797
    %v2874 = vunpack.c.l.b16 %v2798
    %v2875 = vpack.c.b16 %v2860, %v2859
    %v2876 = vpack.c.b16 %v2862, %v2861
    %v2877 = vpack.c.b16 %v2864, %v2863
    %v2878 = vpack.c.b16 %v2866, %v2865
    %v2879 = vpack.c.b16 %v2868, %v2867
    %v2880 = vpack.c.b16 %v2870, %v2869
    %v2881 = vpack.c.b16 %v2872, %v2871
    %v2882 = vpack.c.b16 %v2874, %v2873
    %2891 = vmatprep.subr.bf16.mxu0 0
    %2892 = vmatpush1.bf16.msra.mxu0 %v2882
    %2893 = vmatprep.subr.bf16.mxu0 0
    %2894 = vmatpush1.bf16.msra.mxu0 %v2881
    %2895 = vmatprep.subr.bf16.mxu0 0
    %2896 = vmatpush1.bf16.msra.mxu0 %v2880
    %2897 = vmatprep.subr.bf16.mxu0 0
    %2898 = vmatpush1.bf16.msra.mxu0 %v2879
    %2899 = vmatprep.subr.bf16.mxu0 0
    %2900 = vmatpush1.bf16.msra.mxu0 %v2878
    %2901 = vmatprep.subr.bf16.mxu0 0
    %2902 = vmatpush1.bf16.msra.mxu0 %v2877
    %2903 = vmatprep.subr.bf16.mxu0 0
    %2904 = vmatpush1.bf16.msra.mxu0 %v2876
    %2905 = vmatprep.subr.bf16.mxu0 0
    %2906 = vmatpush1.bf16.msra.mxu0 %v2875
    %2907 = vmatprep.subr.bf16.mxu0 0
    %2908 = vmatpush2.bf16.msra.mxu0 0
    %2909 = vmatprep.subr.bf16.mxu0 0
    %2910 = vmatpush2.bf16.msra.mxu0 0
    %2911 = vmatprep.subr.bf16.mxu0 0
    %2912 = vmatpush2.bf16.msra.mxu0 0
    %2913 = vmatprep.subr.bf16.mxu0 0
    %2914 = vmatpush2.bf16.msra.mxu0 0
    %2915 = vmatprep.subr.bf16.mxu0 0
    %2916 = vmatpush2.bf16.msra.mxu0 0
    %2917 = vmatprep.subr.bf16.mxu0 0
    %2918 = vmatpush2.bf16.msra.mxu0 0
    %2919 = vmatprep.subr.bf16.mxu0 0
    %2920 = vmatpush2.bf16.msra.mxu0 0
    %2921 = vmatprep.subr.bf16.mxu0 0
    %2922 = vmatpush2.bf16.msra.mxu0 0
    %2923 = vmatprep.mubr.bf16.mxu0 0
    %2924 = vmatmul.mubr.bf16.gmra.mxu0 %v2829
    %v2925 = vpop.f32.mrf.mxu0
    %v2926 = vadd.f32 0.0, %v2925
    %v2927 = vpop.f32.mrf.mxu0
    %v2928 = vpop.f32.mrf.mxu0
    %v2929 = vadd.f32 0.0, %v2928
    %v2930 = vpop.f32.mrf.mxu0
    %2931 = vmatprep.mubr.bf16.mxu0 0
    %2932 = vmatmul.mubr.bf16.gmra.mxu0 %v2831
    %v2933 = vpop.f32.mrf.mxu0
    %v2934 = vadd.f32 0.0, %v2933
    %v2935 = vpop.f32.mrf.mxu0
    %v2936 = vpop.f32.mrf.mxu0
    %v2937 = vadd.f32 0.0, %v2936
    %v2938 = vpop.f32.mrf.mxu0
    %2939 = vmatprep.mubr.bf16.mxu0 0
    %2940 = vmatmul.mubr.bf16.gmra.mxu0 %v2833
    %v2941 = vpop.f32.mrf.mxu0
    %v2942 = vadd.f32 0.0, %v2941
    %v2943 = vpop.f32.mrf.mxu0
    %v2944 = vpop.f32.mrf.mxu0
    %v2945 = vadd.f32 0.0, %v2944
    %v2946 = vpop.f32.mrf.mxu0
    %2947 = vmatprep.mubr.bf16.mxu0 0
    %2948 = vmatmul.mubr.bf16.gmra.mxu0 %v2835
    %v2949 = vpop.f32.mrf.mxu0
    %v2950 = vadd.f32 0.0, %v2949
    %v2951 = vpop.f32.mrf.mxu0
    %v2952 = vpop.f32.mrf.mxu0
    %v2953 = vadd.f32 0.0, %v2952
    %v2954 = vpop.f32.mrf.mxu0
    %2955 = vmatprep.mubr.bf16.mxu0 0
    %2956 = vmatmul.mubr.bf16.gmra.mxu0 %v2837
    %v2957 = vpop.f32.mrf.mxu0
    %v2958 = vadd.f32 0.0, %v2957
    %v2959 = vpop.f32.mrf.mxu0
    %v2960 = vpop.f32.mrf.mxu0
    %v2961 = vpop.f32.mrf.mxu0
    %2962 = vdwg.mxu0
    %v2963 = vadd.f32 %v2763, %v2926
    %v2964 = vadd.f32 %v2764, %v2929
    %v2965 = vadd.f32 %v2765, %v2934
    %v2966 = vadd.f32 %v2766, %v2937
    %v2967 = vadd.f32 %v2767, %v2942
    %v2968 = vadd.f32 %v2768, %v2945
    %v2969 = vadd.f32 %v2769, %v2950
    %v2970 = vadd.f32 %v2770, %v2953
    %v2971 = vadd.f32 %v2771, %v2958
    %v2972 = vld [vmem:[%s2241 + $0x30] sm:$0x3]
    %v2973 = vld [vmem:[%s1200] sm:$0xf]
    %v2974 = vld [vmem:[%s1200 + $0x4] sm:$0xf]
    %v2975 = vld [vmem:[%s1200 + $0x8] sm:$0xf]
    %v2976 = vld [vmem:[%s1200 + $0xc] sm:$0xf]
    %v2977 = vld [vmem:[%s1200 + $0x10] sm:$0xf]
    %v2978 = vld [vmem:[%s1200 + $0x14] sm:$0xf]
    %v2979 = vld [vmem:[%s1200 + $0x18] sm:$0xf]
    %v2980 = vld [vmem:[%s1200 + $0x1c] sm:$0xf]
    %v2981 = vld [vmem:[%s1200 + $0x20] sm:$0xf]
    %v2982 = vld [vmem:[%s1200 + $0x24] sm:$0xf]
    %v2983 = vld [vmem:[%s1200 + $0x28] sm:$0xf]
    %v2984 = vld [vmem:[%s1200 + $0x2c] sm:$0xf]
    %v2985 = vld [vmem:[%s1200 + $0x30] sm:$0xf]
    %v2986 = vld [vmem:[%s1200 + $0x34] sm:$0xf]
    %v2987 = vld [vmem:[%s1200 + $0x38] sm:$0xf]
    %v2988 = vld [vmem:[%s1200 + $0x3c] sm:$0xf]
    %v2990 = vunpack.c.l.b16 %v2972
    %v2991 = vpack.c.b16 %v2990, %v2990
    %v2993 = vshrl.u32 %v2821, 16
    %v2995 = vrot.slane %v2993, 1
    %v2996 = vshll.u32 %v2821, 16
    %v2998 = vrot.slane %v2996, 2
    %v2999 = vor.u32 %v2995, %v2998
    %v3001 = vshrl.u32 %v2822, 16
    %v3003 = vrot.slane %v3001, 1
    %v3004 = vshll.u32 %v2822, 16
    %v3006 = vrot.slane %v3004, 2
    %v3007 = vor.u32 %v3003, %v3006
    %v3008 = vsel %vm1220, %v2999, %v3007
    %v3010 = vshrl.u32 %v2823, 16
    %v3012 = vrot.slane %v3010, 1
    %v3013 = vshll.u32 %v2823, 16
    %v3015 = vrot.slane %v3013, 2
    %v3016 = vor.u32 %v3012, %v3015
    %v3017 = vsel %vm1220, %v3007, %v3016
    %v3019 = vshrl.u32 %v2824, 16
    %v3021 = vrot.slane %v3019, 1
    %v3022 = vshll.u32 %v2824, 16
    %v3024 = vrot.slane %v3022, 2
    %v3025 = vor.u32 %v3021, %v3024
    %v3026 = vsel %vm1220, %v3016, %v3025
    %v3028 = vshrl.u32 %v2825, 16
    %v3030 = vrot.slane %v3028, 1
    %v3031 = vshll.u32 %v2825, 16
    %v3033 = vrot.slane %v3031, 2
    %v3034 = vor.u32 %v3030, %v3033
    %v3035 = vsel %vm1220, %v3025, %v3034
    %v3037 = vshrl.u32 %v2991, 16
    %v3039 = vrot.slane %v3037, 1
    %v3040 = vshll.u32 %v2991, 16
    %v3042 = vrot.slane %v3040, 2
    %v3043 = vor.u32 %v3039, %v3042
    %v3044 = vsel %vm1220, %v3034, %v3043
    %v3066 = vunpack.c.l.b16 %v2973
    %v3067 = vunpack.c.l.b16 %v2974
    %v3068 = vunpack.c.l.b16 %v2975
    %v3069 = vunpack.c.l.b16 %v2976
    %v3070 = vunpack.c.l.b16 %v2977
    %v3071 = vunpack.c.l.b16 %v2978
    %v3072 = vunpack.c.l.b16 %v2979
    %v3073 = vunpack.c.l.b16 %v2980
    %v3074 = vunpack.c.l.b16 %v2981
    %v3075 = vunpack.c.l.b16 %v2982
    %v3076 = vunpack.c.l.b16 %v2983
    %v3077 = vunpack.c.l.b16 %v2984
    %v3078 = vunpack.c.l.b16 %v2985
    %v3079 = vunpack.c.l.b16 %v2986
    %v3080 = vunpack.c.l.b16 %v2987
    %v3081 = vunpack.c.l.b16 %v2988
    %v3082 = vpack.c.b16 %v3067, %v3066
    %v3083 = vpack.c.b16 %v3069, %v3068
    %v3084 = vpack.c.b16 %v3071, %v3070
    %v3085 = vpack.c.b16 %v3073, %v3072
    %v3086 = vpack.c.b16 %v3075, %v3074
    %v3087 = vpack.c.b16 %v3077, %v3076
    %v3088 = vpack.c.b16 %v3079, %v3078
    %v3089 = vpack.c.b16 %v3081, %v3080
    %3098 = vmatprep.subr.bf16.mxu0 0
    %3099 = vmatpush1.bf16.msra.mxu0 %v3089
    %3100 = vmatprep.subr.bf16.mxu0 0
    %3101 = vmatpush1.bf16.msra.mxu0 %v3088
    %3102 = vmatprep.subr.bf16.mxu0 0
    %3103 = vmatpush1.bf16.msra.mxu0 %v3087
    %3104 = vmatprep.subr.bf16.mxu0 0
    %3105 = vmatpush1.bf16.msra.mxu0 %v3086
    %3106 = vmatprep.subr.bf16.mxu0 0
    %3107 = vmatpush1.bf16.msra.mxu0 %v3085
    %3108 = vmatprep.subr.bf16.mxu0 0
    %3109 = vmatpush1.bf16.msra.mxu0 %v3084
    %3110 = vmatprep.subr.bf16.mxu0 0
    %3111 = vmatpush1.bf16.msra.mxu0 %v3083
    %3112 = vmatprep.subr.bf16.mxu0 0
    %3113 = vmatpush1.bf16.msra.mxu0 %v3082
    %3114 = vmatprep.subr.bf16.mxu0 0
    %3115 = vmatpush2.bf16.msra.mxu0 0
    %3116 = vmatprep.subr.bf16.mxu0 0
    %3117 = vmatpush2.bf16.msra.mxu0 0
    %3118 = vmatprep.subr.bf16.mxu0 0
    %3119 = vmatpush2.bf16.msra.mxu0 0
    %3120 = vmatprep.subr.bf16.mxu0 0
    %3121 = vmatpush2.bf16.msra.mxu0 0
    %3122 = vmatprep.subr.bf16.mxu0 0
    %3123 = vmatpush2.bf16.msra.mxu0 0
    %3124 = vmatprep.subr.bf16.mxu0 0
    %3125 = vmatpush2.bf16.msra.mxu0 0
    %3126 = vmatprep.subr.bf16.mxu0 0
    %3127 = vmatpush2.bf16.msra.mxu0 0
    %3128 = vmatprep.subr.bf16.mxu0 0
    %3129 = vmatpush2.bf16.msra.mxu0 0
    %3130 = vmatprep.mubr.bf16.mxu0 0
    %3131 = vmatmul.mubr.bf16.gmra.mxu0 %v3008
    %v3132 = vpop.f32.mrf.mxu0
    %v3133 = vadd.f32 0.0, %v3132
    %v3134 = vpop.f32.mrf.mxu0
    %v3135 = vpop.f32.mrf.mxu0
    %v3136 = vadd.f32 0.0, %v3135
    %v3137 = vpop.f32.mrf.mxu0
    %3138 = vmatprep.mubr.bf16.mxu0 0
    %3139 = vmatmul.mubr.bf16.gmra.mxu0 %v3017
    %v3140 = vpop.f32.mrf.mxu0
    %v3141 = vadd.f32 0.0, %v3140
    %v3142 = vpop.f32.mrf.mxu0
    %v3143 = vpop.f32.mrf.mxu0
    %v3144 = vadd.f32 0.0, %v3143
    %v3145 = vpop.f32.mrf.mxu0
    %3146 = vmatprep.mubr.bf16.mxu0 0
    %3147 = vmatmul.mubr.bf16.gmra.mxu0 %v3026
    %v3148 = vpop.f32.mrf.mxu0
    %v3149 = vadd.f32 0.0, %v3148
    %v3150 = vpop.f32.mrf.mxu0
    %v3151 = vpop.f32.mrf.mxu0
    %v3152 = vadd.f32 0.0, %v3151
    %v3153 = vpop.f32.mrf.mxu0
    %3154 = vmatprep.mubr.bf16.mxu0 0
    %3155 = vmatmul.mubr.bf16.gmra.mxu0 %v3035
    %v3156 = vpop.f32.mrf.mxu0
    %v3157 = vadd.f32 0.0, %v3156
    %v3158 = vpop.f32.mrf.mxu0
    %v3159 = vpop.f32.mrf.mxu0
    %v3160 = vadd.f32 0.0, %v3159
    %v3161 = vpop.f32.mrf.mxu0
    %3162 = vmatprep.mubr.bf16.mxu0 0
    %3163 = vmatmul.mubr.bf16.gmra.mxu0 %v3044
    %v3164 = vpop.f32.mrf.mxu0
    %v3165 = vadd.f32 0.0, %v3164
    %v3166 = vpop.f32.mrf.mxu0
    %v3167 = vpop.f32.mrf.mxu0
    %v3168 = vpop.f32.mrf.mxu0
    %3169 = vdwg.mxu0
    %v3170 = vadd.f32 %v2963, %v3133
    %v3171 = vadd.f32 %v2964, %v3136
    %v3172 = vadd.f32 %v2965, %v3141
    %v3173 = vadd.f32 %v2966, %v3144
    %v3174 = vadd.f32 %v2967, %v3149
    %v3175 = vadd.f32 %v2968, %v3152
    %v3176 = vadd.f32 %v2969, %v3157
    %v3177 = vadd.f32 %v2970, %v3160
    %v3178 = vadd.f32 %v2971, %v3165
    %v3179 = vld [vmem:[%s2241 + $0x8] sm:$0xc]
    %v3180 = vld [vmem:[%s1409] sm:$0xf]
    %v3181 = vld [vmem:[%s1409 + $0x4] sm:$0xf]
    %v3182 = vld [vmem:[%s1409 + $0x8] sm:$0xf]
    %v3183 = vld [vmem:[%s1409 + $0xc] sm:$0xf]
    %v3184 = vld [vmem:[%s1409 + $0x10] sm:$0xf]
    %v3185 = vld [vmem:[%s1409 + $0x14] sm:$0xf]
    %v3186 = vld [vmem:[%s1409 + $0x18] sm:$0xf]
    %v3187 = vld [vmem:[%s1409 + $0x1c] sm:$0xf]
    %v3188 = vld [vmem:[%s1409 + $0x20] sm:$0xf]
    %v3189 = vld [vmem:[%s1409 + $0x24] sm:$0xf]
    %v3190 = vld [vmem:[%s1409 + $0x28] sm:$0xf]
    %v3191 = vld [vmem:[%s1409 + $0x2c] sm:$0xf]
    %v3192 = vld [vmem:[%s1409 + $0x30] sm:$0xf]
    %v3193 = vld [vmem:[%s1409 + $0x34] sm:$0xf]
    %v3194 = vld [vmem:[%s1409 + $0x38] sm:$0xf]
    %v3195 = vld [vmem:[%s1409 + $0x3c] sm:$0xf]
    %v3197 = vunpack.c.l.b16 %v3179
    %v3198 = vpack.c.b16 %v2811, %v3197
    %v3199 = vrot.slane %v3198, 2
    %v3200 = vrot.slane %v2822, 2
    %v3201 = vsel %vm1429, %v3199, %v3200
    %v3202 = vrot.slane %v2823, 2
    %v3203 = vsel %vm1429, %v3200, %v3202
    %v3204 = vrot.slane %v2824, 2
    %v3205 = vsel %vm1429, %v3202, %v3204
    %v3206 = vrot.slane %v2825, 2
    %v3207 = vsel %vm1429, %v3204, %v3206
    %v3208 = vrot.slane %v2991, 2
    %v3209 = vsel %vm1429, %v3206, %v3208
    %v3231 = vunpack.c.l.b16 %v3180
    %v3232 = vunpack.c.l.b16 %v3181
    %v3233 = vunpack.c.l.b16 %v3182
    %v3234 = vunpack.c.l.b16 %v3183
    %v3235 = vunpack.c.l.b16 %v3184
    %v3236 = vunpack.c.l.b16 %v3185
    %v3237 = vunpack.c.l.b16 %v3186
    %v3238 = vunpack.c.l.b16 %v3187
    %v3239 = vunpack.c.l.b16 %v3188
    %v3240 = vunpack.c.l.b16 %v3189
    %v3241 = vunpack.c.l.b16 %v3190
    %v3242 = vunpack.c.l.b16 %v3191
    %v3243 = vunpack.c.l.b16 %v3192
    %v3244 = vunpack.c.l.b16 %v3193
    %v3245 = vunpack.c.l.b16 %v3194
    %v3246 = vunpack.c.l.b16 %v3195
    %v3247 = vpack.c.b16 %v3232, %v3231
    %v3248 = vpack.c.b16 %v3234, %v3233
    %v3249 = vpack.c.b16 %v3236, %v3235
    %v3250 = vpack.c.b16 %v3238, %v3237
    %v3251 = vpack.c.b16 %v3240, %v3239
    %v3252 = vpack.c.b16 %v3242, %v3241
    %v3253 = vpack.c.b16 %v3244, %v3243
    %v3254 = vpack.c.b16 %v3246, %v3245
    %3263 = vmatprep.subr.bf16.mxu0 0
    %3264 = vmatpush1.bf16.msra.mxu0 %v3254
    %3265 = vmatprep.subr.bf16.mxu0 0
    %3266 = vmatpush1.bf16.msra.mxu0 %v3253
    %3267 = vmatprep.subr.bf16.mxu0 0
    %3268 = vmatpush1.bf16.msra.mxu0 %v3252
    %3269 = vmatprep.subr.bf16.mxu0 0
    %3270 = vmatpush1.bf16.msra.mxu0 %v3251
    %3271 = vmatprep.subr.bf16.mxu0 0
    %3272 = vmatpush1.bf16.msra.mxu0 %v3250
    %3273 = vmatprep.subr.bf16.mxu0 0
    %3274 = vmatpush1.bf16.msra.mxu0 %v3249
    %3275 = vmatprep.subr.bf16.mxu0 0
    %3276 = vmatpush1.bf16.msra.mxu0 %v3248
    %3277 = vmatprep.subr.bf16.mxu0 0
    %3278 = vmatpush1.bf16.msra.mxu0 %v3247
    %3279 = vmatprep.subr.bf16.mxu0 0
    %3280 = vmatpush2.bf16.msra.mxu0 0
    %3281 = vmatprep.subr.bf16.mxu0 0
    %3282 = vmatpush2.bf16.msra.mxu0 0
    %3283 = vmatprep.subr.bf16.mxu0 0
    %3284 = vmatpush2.bf16.msra.mxu0 0
    %3285 = vmatprep.subr.bf16.mxu0 0
    %3286 = vmatpush2.bf16.msra.mxu0 0
    %3287 = vmatprep.subr.bf16.mxu0 0
    %3288 = vmatpush2.bf16.msra.mxu0 0
    %3289 = vmatprep.subr.bf16.mxu0 0
    %3290 = vmatpush2.bf16.msra.mxu0 0
    %3291 = vmatprep.subr.bf16.mxu0 0
    %3292 = vmatpush2.bf16.msra.mxu0 0
    %3293 = vmatprep.subr.bf16.mxu0 0
    %3294 = vmatpush2.bf16.msra.mxu0 0
    %3295 = vmatprep.mubr.bf16.mxu0 0
    %3296 = vmatmul.mubr.bf16.gmra.mxu0 %v3201
    %v3297 = vpop.f32.mrf.mxu0
    %v3298 = vadd.f32 0.0, %v3297
    %v3299 = vpop.f32.mrf.mxu0
    %v3300 = vpop.f32.mrf.mxu0
    %v3301 = vadd.f32 0.0, %v3300
    %v3302 = vpop.f32.mrf.mxu0
    %3303 = vmatprep.mubr.bf16.mxu0 0
    %3304 = vmatmul.mubr.bf16.gmra.mxu0 %v3203
    %v3305 = vpop.f32.mrf.mxu0
    %v3306 = vadd.f32 0.0, %v3305
    %v3307 = vpop.f32.mrf.mxu0
    %v3308 = vpop.f32.mrf.mxu0
    %v3309 = vadd.f32 0.0, %v3308
    %v3310 = vpop.f32.mrf.mxu0
    %3311 = vmatprep.mubr.bf16.mxu0 0
    %3312 = vmatmul.mubr.bf16.gmra.mxu0 %v3205
    %v3313 = vpop.f32.mrf.mxu0
    %v3314 = vadd.f32 0.0, %v3313
    %v3315 = vpop.f32.mrf.mxu0
    %v3316 = vpop.f32.mrf.mxu0
    %v3317 = vadd.f32 0.0, %v3316
    %v3318 = vpop.f32.mrf.mxu0
    %3319 = vmatprep.mubr.bf16.mxu0 0
    %3320 = vmatmul.mubr.bf16.gmra.mxu0 %v3207
    %v3321 = vpop.f32.mrf.mxu0
    %v3322 = vadd.f32 0.0, %v3321
    %v3323 = vpop.f32.mrf.mxu0
    %v3324 = vpop.f32.mrf.mxu0
    %v3325 = vadd.f32 0.0, %v3324
    %v3326 = vpop.f32.mrf.mxu0
    %3327 = vmatprep.mubr.bf16.mxu0 0
    %3328 = vmatmul.mubr.bf16.gmra.mxu0 %v3209
    %v3329 = vpop.f32.mrf.mxu0
    %v3330 = vadd.f32 0.0, %v3329
    %v3331 = vpop.f32.mrf.mxu0
    %v3332 = vpop.f32.mrf.mxu0
    %v3333 = vpop.f32.mrf.mxu0
    %3334 = vdwg.mxu0
    %v3335 = vadd.f32 %v3170, %v3298
    %v3336 = vadd.f32 %v3171, %v3301
    %v3337 = vadd.f32 %v3172, %v3306
    %v3338 = vadd.f32 %v3173, %v3309
    %v3339 = vadd.f32 %v3174, %v3314
    %v3340 = vadd.f32 %v3175, %v3317
    %v3341 = vadd.f32 %v3176, %v3322
    %v3342 = vadd.f32 %v3177, %v3325
    %v3343 = vadd.f32 %v3178, %v3330
    %v3344 = vld [vmem:[%s2241 + $0x10] sm:$0xc]
    %v3345 = vld [vmem:[%s2241 + $0x14] sm:$0xf]
    %v3346 = vld [vmem:[%s2241 + $0x18] sm:$0xf]
    %v3347 = vld [vmem:[%s2241 + $0x1c] sm:$0xf]
    %v3348 = vld [vmem:[%s2241 + $0x20] sm:$0xf]
    %v3349 = vld [vmem:[%s2241 + $0x24] sm:$0xf]
    %v3350 = vld [vmem:[%s2241 + $0x28] sm:$0xf]
    %v3351 = vld [vmem:[%s2241 + $0x2c] sm:$0xf]
    %v3352 = vld [vmem:[%s2241 + $0x30] sm:$0xf]
    %v3353 = vld [vmem:[%s2241 + $0x34] sm:$0xf]
    %v3354 = vld [vmem:[%s2241 + $0x38] sm:$0x3]
    %v3355 = vld [vmem:[%s1586] sm:$0xf]
    %v3356 = vld [vmem:[%s1586 + $0x4] sm:$0xf]
    %v3357 = vld [vmem:[%s1586 + $0x8] sm:$0xf]
    %v3358 = vld [vmem:[%s1586 + $0xc] sm:$0xf]
    %v3359 = vld [vmem:[%s1586 + $0x10] sm:$0xf]
    %v3360 = vld [vmem:[%s1586 + $0x14] sm:$0xf]
    %v3361 = vld [vmem:[%s1586 + $0x18] sm:$0xf]
    %v3362 = vld [vmem:[%s1586 + $0x1c] sm:$0xf]
    %v3363 = vld [vmem:[%s1586 + $0x20] sm:$0xf]
    %v3364 = vld [vmem:[%s1586 + $0x24] sm:$0xf]
    %v3365 = vld [vmem:[%s1586 + $0x28] sm:$0xf]
    %v3366 = vld [vmem:[%s1586 + $0x2c] sm:$0xf]
    %v3367 = vld [vmem:[%s1586 + $0x30] sm:$0xf]
    %v3368 = vld [vmem:[%s1586 + $0x34] sm:$0xf]
    %v3369 = vld [vmem:[%s1586 + $0x38] sm:$0xf]
    %v3370 = vld [vmem:[%s1586 + $0x3c] sm:$0xf]
    %v3382 = vunpack.c.l.b16 %v3344
    %v3383 = vunpack.c.l.b16 %v3345
    %v3384 = vunpack.c.l.b16 %v3346
    %v3385 = vunpack.c.l.b16 %v3347
    %v3386 = vunpack.c.l.b16 %v3348
    %v3387 = vunpack.c.l.b16 %v3349
    %v3388 = vunpack.c.l.b16 %v3350
    %v3389 = vunpack.c.l.b16 %v3351
    %v3390 = vunpack.c.l.b16 %v3352
    %v3391 = vunpack.c.l.b16 %v3353
    %v3392 = vunpack.c.l.b16 %v3354
    %v3393 = vpack.c.b16 %v3383, %v3382
    %v3394 = vpack.c.b16 %v3385, %v3384
    %v3395 = vpack.c.b16 %v3387, %v3386
    %v3396 = vpack.c.b16 %v3389, %v3388
    %v3397 = vpack.c.b16 %v3391, %v3390
    %v3398 = vpack.c.b16 %v3392, %v3392
    %v3399 = vrot.slane %v3393, 2
    %v3400 = vrot.slane %v3394, 2
    %v3401 = vsel %vm1429, %v3399, %v3400
    %v3402 = vrot.slane %v3395, 2
    %v3403 = vsel %vm1429, %v3400, %v3402
    %v3404 = vrot.slane %v3396, 2
    %v3405 = vsel %vm1429, %v3402, %v3404
    %v3406 = vrot.slane %v3397, 2
    %v3407 = vsel %vm1429, %v3404, %v3406
    %v3408 = vrot.slane %v3398, 2
    %v3409 = vsel %vm1429, %v3406, %v3408
    %v3431 = vunpack.c.l.b16 %v3355
    %v3432 = vunpack.c.l.b16 %v3356
    %v3433 = vunpack.c.l.b16 %v3357
    %v3434 = vunpack.c.l.b16 %v3358
    %v3435 = vunpack.c.l.b16 %v3359
    %v3436 = vunpack.c.l.b16 %v3360
    %v3437 = vunpack.c.l.b16 %v3361
    %v3438 = vunpack.c.l.b16 %v3362
    %v3439 = vunpack.c.l.b16 %v3363
    %v3440 = vunpack.c.l.b16 %v3364
    %v3441 = vunpack.c.l.b16 %v3365
    %v3442 = vunpack.c.l.b16 %v3366
    %v3443 = vunpack.c.l.b16 %v3367
    %v3444 = vunpack.c.l.b16 %v3368
    %v3445 = vunpack.c.l.b16 %v3369
    %v3446 = vunpack.c.l.b16 %v3370
    %v3447 = vpack.c.b16 %v3432, %v3431
    %v3448 = vpack.c.b16 %v3434, %v3433
    %v3449 = vpack.c.b16 %v3436, %v3435
    %v3450 = vpack.c.b16 %v3438, %v3437
    %v3451 = vpack.c.b16 %v3440, %v3439
    %v3452 = vpack.c.b16 %v3442, %v3441
    %v3453 = vpack.c.b16 %v3444, %v3443
    %v3454 = vpack.c.b16 %v3446, %v3445
    %3463 = vmatprep.subr.bf16.mxu0 0
    %3464 = vmatpush1.bf16.msra.mxu0 %v3454
    %3465 = vmatprep.subr.bf16.mxu0 0
    %3466 = vmatpush1.bf16.msra.mxu0 %v3453
    %3467 = vmatprep.subr.bf16.mxu0 0
    %3468 = vmatpush1.bf16.msra.mxu0 %v3452
    %3469 = vmatprep.subr.bf16.mxu0 0
    %3470 = vmatpush1.bf16.msra.mxu0 %v3451
    %3471 = vmatprep.subr.bf16.mxu0 0
    %3472 = vmatpush1.bf16.msra.mxu0 %v3450
    %3473 = vmatprep.subr.bf16.mxu0 0
    %3474 = vmatpush1.bf16.msra.mxu0 %v3449
    %3475 = vmatprep.subr.bf16.mxu0 0
    %3476 = vmatpush1.bf16.msra.mxu0 %v3448
    %3477 = vmatprep.subr.bf16.mxu0 0
    %3478 = vmatpush1.bf16.msra.mxu0 %v3447
    %3479 = vmatprep.subr.bf16.mxu0 0
    %3480 = vmatpush2.bf16.msra.mxu0 0
    %3481 = vmatprep.subr.bf16.mxu0 0
    %3482 = vmatpush2.bf16.msra.mxu0 0
    %3483 = vmatprep.subr.bf16.mxu0 0
    %3484 = vmatpush2.bf16.msra.mxu0 0
    %3485 = vmatprep.subr.bf16.mxu0 0
    %3486 = vmatpush2.bf16.msra.mxu0 0
    %3487 = vmatprep.subr.bf16.mxu0 0
    %3488 = vmatpush2.bf16.msra.mxu0 0
    %3489 = vmatprep.subr.bf16.mxu0 0
    %3490 = vmatpush2.bf16.msra.mxu0 0
    %3491 = vmatprep.subr.bf16.mxu0 0
    %3492 = vmatpush2.bf16.msra.mxu0 0
    %3493 = vmatprep.subr.bf16.mxu0 0
    %3494 = vmatpush2.bf16.msra.mxu0 0
    %3495 = vmatprep.mubr.bf16.mxu0 0
    %3496 = vmatmul.mubr.bf16.gmra.mxu0 %v3401
    %v3497 = vpop.f32.mrf.mxu0
    %v3498 = vadd.f32 0.0, %v3497
    %v3499 = vpop.f32.mrf.mxu0
    %v3500 = vpop.f32.mrf.mxu0
    %v3501 = vadd.f32 0.0, %v3500
    %v3502 = vpop.f32.mrf.mxu0
    %3503 = vmatprep.mubr.bf16.mxu0 0
    %3504 = vmatmul.mubr.bf16.gmra.mxu0 %v3403
    %v3505 = vpop.f32.mrf.mxu0
    %v3506 = vadd.f32 0.0, %v3505
    %v3507 = vpop.f32.mrf.mxu0
    %v3508 = vpop.f32.mrf.mxu0
    %v3509 = vadd.f32 0.0, %v3508
    %v3510 = vpop.f32.mrf.mxu0
    %3511 = vmatprep.mubr.bf16.mxu0 0
    %3512 = vmatmul.mubr.bf16.gmra.mxu0 %v3405
    %v3513 = vpop.f32.mrf.mxu0
    %v3514 = vadd.f32 0.0, %v3513
    %v3515 = vpop.f32.mrf.mxu0
    %v3516 = vpop.f32.mrf.mxu0
    %v3517 = vadd.f32 0.0, %v3516
    %v3518 = vpop.f32.mrf.mxu0
    %3519 = vmatprep.mubr.bf16.mxu0 0
    %3520 = vmatmul.mubr.bf16.gmra.mxu0 %v3407
    %v3521 = vpop.f32.mrf.mxu0
    %v3522 = vadd.f32 0.0, %v3521
    %v3523 = vpop.f32.mrf.mxu0
    %v3524 = vpop.f32.mrf.mxu0
    %v3525 = vadd.f32 0.0, %v3524
    %v3526 = vpop.f32.mrf.mxu0
    %3527 = vmatprep.mubr.bf16.mxu0 0
    %3528 = vmatmul.mubr.bf16.gmra.mxu0 %v3409
    %v3529 = vpop.f32.mrf.mxu0
    %v3530 = vadd.f32 0.0, %v3529
    %v3531 = vpop.f32.mrf.mxu0
    %v3532 = vpop.f32.mrf.mxu0
    %v3533 = vpop.f32.mrf.mxu0
    %3534 = vdwg.mxu0
    %v3535 = vadd.f32 %v3335, %v3498
    %v3536 = vadd.f32 %v3336, %v3501
    %v3537 = vadd.f32 %v3337, %v3506
    %v3538 = vadd.f32 %v3338, %v3509
    %v3539 = vadd.f32 %v3339, %v3514
    %v3540 = vadd.f32 %v3340, %v3517
    %v3541 = vadd.f32 %v3341, %v3522
    %v3542 = vadd.f32 %v3342, %v3525
    %v3543 = vadd.f32 %v3343, %v3530
    %v3544 = vld [vmem:[%s2241 + $0x38] sm:$0x7]
    %v3545 = vld [vmem:[%s1777] sm:$0xf]
    %v3546 = vld [vmem:[%s1777 + $0x4] sm:$0xf]
    %v3547 = vld [vmem:[%s1777 + $0x8] sm:$0xf]
    %v3548 = vld [vmem:[%s1777 + $0xc] sm:$0xf]
    %v3549 = vld [vmem:[%s1777 + $0x10] sm:$0xf]
    %v3550 = vld [vmem:[%s1777 + $0x14] sm:$0xf]
    %v3551 = vld [vmem:[%s1777 + $0x18] sm:$0xf]
    %v3552 = vld [vmem:[%s1777 + $0x1c] sm:$0xf]
    %v3553 = vld [vmem:[%s1777 + $0x20] sm:$0xf]
    %v3554 = vld [vmem:[%s1777 + $0x24] sm:$0xf]
    %v3555 = vld [vmem:[%s1777 + $0x28] sm:$0xf]
    %v3556 = vld [vmem:[%s1777 + $0x2c] sm:$0xf]
    %v3557 = vld [vmem:[%s1777 + $0x30] sm:$0xf]
    %v3558 = vld [vmem:[%s1777 + $0x34] sm:$0xf]
    %v3559 = vld [vmem:[%s1777 + $0x38] sm:$0xf]
    %v3560 = vld [vmem:[%s1777 + $0x3c] sm:$0xf]
    %v3562 = vunpack.c.l.b16 %v3544
    %v3563 = vpack.c.b16 %v3562, %v3562
    %v3565 = vshrl.u32 %v3393, 16
    %v3567 = vrot.slane %v3565, 2
    %v3568 = vshll.u32 %v3393, 16
    %v3570 = vrot.slane %v3568, 3
    %v3571 = vor.u32 %v3567, %v3570
    %v3573 = vshrl.u32 %v3394, 16
    %v3575 = vrot.slane %v3573, 2
    %v3576 = vshll.u32 %v3394, 16
    %v3578 = vrot.slane %v3576, 3
    %v3579 = vor.u32 %v3575, %v3578
    %v3580 = vsel %vm1797, %v3571, %v3579
    %v3582 = vshrl.u32 %v3395, 16
    %v3584 = vrot.slane %v3582, 2
    %v3585 = vshll.u32 %v3395, 16
    %v3587 = vrot.slane %v3585, 3
    %v3588 = vor.u32 %v3584, %v3587
    %v3589 = vsel %vm1797, %v3579, %v3588
    %v3591 = vshrl.u32 %v3396, 16
    %v3593 = vrot.slane %v3591, 2
    %v3594 = vshll.u32 %v3396, 16
    %v3596 = vrot.slane %v3594, 3
    %v3597 = vor.u32 %v3593, %v3596
    %v3598 = vsel %vm1797, %v3588, %v3597
    %v3600 = vshrl.u32 %v3397, 16
    %v3602 = vrot.slane %v3600, 2
    %v3603 = vshll.u32 %v3397, 16
    %v3605 = vrot.slane %v3603, 3
    %v3606 = vor.u32 %v3602, %v3605
    %v3607 = vsel %vm1797, %v3597, %v3606
    %v3609 = vshrl.u32 %v3563, 16
    %v3611 = vrot.slane %v3609, 2
    %v3612 = vshll.u32 %v3563, 16
    %v3614 = vrot.slane %v3612, 3
    %v3615 = vor.u32 %v3611, %v3614
    %v3616 = vsel %vm1797, %v3606, %v3615
    %v3638 = vunpack.c.l.b16 %v3545
    %v3639 = vunpack.c.l.b16 %v3546
    %v3640 = vunpack.c.l.b16 %v3547
    %v3641 = vunpack.c.l.b16 %v3548
    %v3642 = vunpack.c.l.b16 %v3549
    %v3643 = vunpack.c.l.b16 %v3550
    %v3644 = vunpack.c.l.b16 %v3551
    %v3645 = vunpack.c.l.b16 %v3552
    %v3646 = vunpack.c.l.b16 %v3553
    %v3647 = vunpack.c.l.b16 %v3554
    %v3648 = vunpack.c.l.b16 %v3555
    %v3649 = vunpack.c.l.b16 %v3556
    %v3650 = vunpack.c.l.b16 %v3557
    %v3651 = vunpack.c.l.b16 %v3558
    %v3652 = vunpack.c.l.b16 %v3559
    %v3653 = vunpack.c.l.b16 %v3560
    %v3654 = vpack.c.b16 %v3639, %v3638
    %v3655 = vpack.c.b16 %v3641, %v3640
    %v3656 = vpack.c.b16 %v3643, %v3642
    %v3657 = vpack.c.b16 %v3645, %v3644
    %v3658 = vpack.c.b16 %v3647, %v3646
    %v3659 = vpack.c.b16 %v3649, %v3648
    %v3660 = vpack.c.b16 %v3651, %v3650
    %v3661 = vpack.c.b16 %v3653, %v3652
    %3670 = vmatprep.subr.bf16.mxu0 0
    %3671 = vmatpush1.bf16.msra.mxu0 %v3661
    %3672 = vmatprep.subr.bf16.mxu0 0
    %3673 = vmatpush1.bf16.msra.mxu0 %v3660
    %3674 = vmatprep.subr.bf16.mxu0 0
    %3675 = vmatpush1.bf16.msra.mxu0 %v3659
    %3676 = vmatprep.subr.bf16.mxu0 0
    %3677 = vmatpush1.bf16.msra.mxu0 %v3658
    %3678 = vmatprep.subr.bf16.mxu0 0
    %3679 = vmatpush1.bf16.msra.mxu0 %v3657
    %3680 = vmatprep.subr.bf16.mxu0 0
    %3681 = vmatpush1.bf16.msra.mxu0 %v3656
    %3682 = vmatprep.subr.bf16.mxu0 0
    %3683 = vmatpush1.bf16.msra.mxu0 %v3655
    %3684 = vmatprep.subr.bf16.mxu0 0
    %3685 = vmatpush1.bf16.msra.mxu0 %v3654
    %3686 = vmatprep.subr.bf16.mxu0 0
    %3687 = vmatpush2.bf16.msra.mxu0 0
    %3688 = vmatprep.subr.bf16.mxu0 0
    %3689 = vmatpush2.bf16.msra.mxu0 0
    %3690 = vmatprep.subr.bf16.mxu0 0
    %3691 = vmatpush2.bf16.msra.mxu0 0
    %3692 = vmatprep.subr.bf16.mxu0 0
    %3693 = vmatpush2.bf16.msra.mxu0 0
    %3694 = vmatprep.subr.bf16.mxu0 0
    %3695 = vmatpush2.bf16.msra.mxu0 0
    %3696 = vmatprep.subr.bf16.mxu0 0
    %3697 = vmatpush2.bf16.msra.mxu0 0
    %3698 = vmatprep.subr.bf16.mxu0 0
    %3699 = vmatpush2.bf16.msra.mxu0 0
    %3700 = vmatprep.subr.bf16.mxu0 0
    %3701 = vmatpush2.bf16.msra.mxu0 0
    %3702 = vmatprep.mubr.bf16.mxu0 0
    %3703 = vmatmul.mubr.bf16.gmra.mxu0 %v3580
    %v3704 = vpop.f32.mrf.mxu0
    %v3705 = vadd.f32 0.0, %v3704
    %v3706 = vpop.f32.mrf.mxu0
    %v3707 = vpop.f32.mrf.mxu0
    %v3708 = vadd.f32 0.0, %v3707
    %v3709 = vpop.f32.mrf.mxu0
    %3710 = vmatprep.mubr.bf16.mxu0 0
    %3711 = vmatmul.mubr.bf16.gmra.mxu0 %v3589
    %v3712 = vpop.f32.mrf.mxu0
    %v3713 = vadd.f32 0.0, %v3712
    %v3714 = vpop.f32.mrf.mxu0
    %v3715 = vpop.f32.mrf.mxu0
    %v3716 = vadd.f32 0.0, %v3715
    %v3717 = vpop.f32.mrf.mxu0
    %3718 = vmatprep.mubr.bf16.mxu0 0
    %3719 = vmatmul.mubr.bf16.gmra.mxu0 %v3598
    %v3720 = vpop.f32.mrf.mxu0
    %v3721 = vadd.f32 0.0, %v3720
    %v3722 = vpop.f32.mrf.mxu0
    %v3723 = vpop.f32.mrf.mxu0
    %v3724 = vadd.f32 0.0, %v3723
    %v3725 = vpop.f32.mrf.mxu0
    %3726 = vmatprep.mubr.bf16.mxu0 0
    %3727 = vmatmul.mubr.bf16.gmra.mxu0 %v3607
    %v3728 = vpop.f32.mrf.mxu0
    %v3729 = vadd.f32 0.0, %v3728
    %v3730 = vpop.f32.mrf.mxu0
    %v3731 = vpop.f32.mrf.mxu0
    %v3732 = vadd.f32 0.0, %v3731
    %v3733 = vpop.f32.mrf.mxu0
    %3734 = vmatprep.mubr.bf16.mxu0 0
    %3735 = vmatmul.mubr.bf16.gmra.mxu0 %v3616
    %v3736 = vpop.f32.mrf.mxu0
    %v3737 = vadd.f32 0.0, %v3736
    %v3738 = vpop.f32.mrf.mxu0
    %v3739 = vpop.f32.mrf.mxu0
    %v3740 = vpop.f32.mrf.mxu0
    %3741 = vdwg.mxu0
    %v3742 = vadd.f32 %v3535, %v3705
    %v3743 = vadd.f32 %v3536, %v3708
    %v3744 = vadd.f32 %v3537, %v3713
    %v3745 = vadd.f32 %v3538, %v3716
    %v3746 = vadd.f32 %v3539, %v3721
    %v3747 = vadd.f32 %v3540, %v3724
    %v3748 = vadd.f32 %v3541, %v3729
    %v3749 = vadd.f32 %v3542, %v3732
    %v3750 = vadd.f32 %v3543, %v3737
    %v3751 = vld [vmem:[%s2241 + $0x10] sm:$0x8]
    %v3752 = vld [vmem:[%s1986] sm:$0xf]
    %v3753 = vld [vmem:[%s1986 + $0x4] sm:$0xf]
    %v3754 = vld [vmem:[%s1986 + $0x8] sm:$0xf]
    %v3755 = vld [vmem:[%s1986 + $0xc] sm:$0xf]
    %v3756 = vld [vmem:[%s1986 + $0x10] sm:$0xf]
    %v3757 = vld [vmem:[%s1986 + $0x14] sm:$0xf]
    %v3758 = vld [vmem:[%s1986 + $0x18] sm:$0xf]
    %v3759 = vld [vmem:[%s1986 + $0x1c] sm:$0xf]
    %v3760 = vld [vmem:[%s1986 + $0x20] sm:$0xf]
    %v3761 = vld [vmem:[%s1986 + $0x24] sm:$0xf]
    %v3762 = vld [vmem:[%s1986 + $0x28] sm:$0xf]
    %v3763 = vld [vmem:[%s1986 + $0x2c] sm:$0xf]
    %v3764 = vld [vmem:[%s1986 + $0x30] sm:$0xf]
    %v3765 = vld [vmem:[%s1986 + $0x34] sm:$0xf]
    %v3766 = vld [vmem:[%s1986 + $0x38] sm:$0xf]
    %v3767 = vld [vmem:[%s1986 + $0x3c] sm:$0xf]
    %v3769 = vunpack.c.l.b16 %v3751
    %v3770 = vpack.c.b16 %v3383, %v3769
    %v3771 = vrot.slane %v3770, 3
    %v3772 = vrot.slane %v3394, 3
    %v3773 = vsel %vm2006, %v3771, %v3772
    %v3774 = vrot.slane %v3395, 3
    %v3775 = vsel %vm2006, %v3772, %v3774
    %v3776 = vrot.slane %v3396, 3
    %v3777 = vsel %vm2006, %v3774, %v3776
    %v3778 = vrot.slane %v3397, 3
    %v3779 = vsel %vm2006, %v3776, %v3778
    %v3780 = vrot.slane %v3563, 3
    %v3781 = vsel %vm2006, %v3778, %v3780
    %v3803 = vunpack.c.l.b16 %v3752
    %v3804 = vunpack.c.l.b16 %v3753
    %v3805 = vunpack.c.l.b16 %v3754
    %v3806 = vunpack.c.l.b16 %v3755
    %v3807 = vunpack.c.l.b16 %v3756
    %v3808 = vunpack.c.l.b16 %v3757
    %v3809 = vunpack.c.l.b16 %v3758
    %v3810 = vunpack.c.l.b16 %v3759
    %v3811 = vunpack.c.l.b16 %v3760
    %v3812 = vunpack.c.l.b16 %v3761
    %v3813 = vunpack.c.l.b16 %v3762
    %v3814 = vunpack.c.l.b16 %v3763
    %v3815 = vunpack.c.l.b16 %v3764
    %v3816 = vunpack.c.l.b16 %v3765
    %v3817 = vunpack.c.l.b16 %v3766
    %v3818 = vunpack.c.l.b16 %v3767
    %v3819 = vpack.c.b16 %v3804, %v3803
    %v3820 = vpack.c.b16 %v3806, %v3805
    %v3821 = vpack.c.b16 %v3808, %v3807
    %v3822 = vpack.c.b16 %v3810, %v3809
    %v3823 = vpack.c.b16 %v3812, %v3811
    %v3824 = vpack.c.b16 %v3814, %v3813
    %v3825 = vpack.c.b16 %v3816, %v3815
    %v3826 = vpack.c.b16 %v3818, %v3817
    %3835 = vmatprep.subr.bf16.mxu0 0
    %3836 = vmatpush1.bf16.msra.mxu0 %v3826
    %3837 = vmatprep.subr.bf16.mxu0 0
    %3838 = vmatpush1.bf16.msra.mxu0 %v3825
    %3839 = vmatprep.subr.bf16.mxu0 0
    %3840 = vmatpush1.bf16.msra.mxu0 %v3824
    %3841 = vmatprep.subr.bf16.mxu0 0
    %3842 = vmatpush1.bf16.msra.mxu0 %v3823
    %3843 = vmatprep.subr.bf16.mxu0 0
    %3844 = vmatpush1.bf16.msra.mxu0 %v3822
    %3845 = vmatprep.subr.bf16.mxu0 0
    %3846 = vmatpush1.bf16.msra.mxu0 %v3821
    %3847 = vmatprep.subr.bf16.mxu0 0
    %3848 = vmatpush1.bf16.msra.mxu0 %v3820
    %3849 = vmatprep.subr.bf16.mxu0 0
    %3850 = vmatpush1.bf16.msra.mxu0 %v3819
    %3851 = vmatprep.subr.bf16.mxu0 0
    %3852 = vmatpush2.bf16.msra.mxu0 0
    %3853 = vmatprep.subr.bf16.mxu0 0
    %3854 = vmatpush2.bf16.msra.mxu0 0
    %3855 = vmatprep.subr.bf16.mxu0 0
    %3856 = vmatpush2.bf16.msra.mxu0 0
    %3857 = vmatprep.subr.bf16.mxu0 0
    %3858 = vmatpush2.bf16.msra.mxu0 0
    %3859 = vmatprep.subr.bf16.mxu0 0
    %3860 = vmatpush2.bf16.msra.mxu0 0
    %3861 = vmatprep.subr.bf16.mxu0 0
    %3862 = vmatpush2.bf16.msra.mxu0 0
    %3863 = vmatprep.subr.bf16.mxu0 0
    %3864 = vmatpush2.bf16.msra.mxu0 0
    %3865 = vmatprep.subr.bf16.mxu0 0
    %3866 = vmatpush2.bf16.msra.mxu0 0
    %3867 = vmatprep.mubr.bf16.mxu0 0
    %3868 = vmatmul.mubr.bf16.gmra.mxu0 %v3773
    %v3869 = vpop.f32.mrf.mxu0
    %v3870 = vadd.f32 0.0, %v3869
    %v3871 = vpop.f32.mrf.mxu0
    %v3872 = vpop.f32.mrf.mxu0
    %v3873 = vadd.f32 0.0, %v3872
    %v3874 = vpop.f32.mrf.mxu0
    %3875 = vmatprep.mubr.bf16.mxu0 0
    %3876 = vmatmul.mubr.bf16.gmra.mxu0 %v3775
    %v3877 = vpop.f32.mrf.mxu0
    %v3878 = vadd.f32 0.0, %v3877
    %v3879 = vpop.f32.mrf.mxu0
    %v3880 = vpop.f32.mrf.mxu0
    %v3881 = vadd.f32 0.0, %v3880
    %v3882 = vpop.f32.mrf.mxu0
    %3883 = vmatprep.mubr.bf16.mxu0 0
    %3884 = vmatmul.mubr.bf16.gmra.mxu0 %v3777
    %v3885 = vpop.f32.mrf.mxu0
    %v3886 = vadd.f32 0.0, %v3885
    %v3887 = vpop.f32.mrf.mxu0
    %v3888 = vpop.f32.mrf.mxu0
    %v3889 = vadd.f32 0.0, %v3888
    %v3890 = vpop.f32.mrf.mxu0
    %3891 = vmatprep.mubr.bf16.mxu0 0
    %3892 = vmatmul.mubr.bf16.gmra.mxu0 %v3779
    %v3893 = vpop.f32.mrf.mxu0
    %v3894 = vadd.f32 0.0, %v3893
    %v3895 = vpop.f32.mrf.mxu0
    %v3896 = vpop.f32.mrf.mxu0
    %v3897 = vadd.f32 0.0, %v3896
    %v3898 = vpop.f32.mrf.mxu0
    %3899 = vmatprep.mubr.bf16.mxu0 0
    %3900 = vmatmul.mubr.bf16.gmra.mxu0 %v3781
    %v3901 = vpop.f32.mrf.mxu0
    %v3902 = vadd.f32 0.0, %v3901
    %v3903 = vpop.f32.mrf.mxu0
    %v3904 = vpop.f32.mrf.mxu0
    %v3905 = vpop.f32.mrf.mxu0
    %3906 = vdwg.mxu0
    %v3907 = vadd.f32 %v3742, %v3870
    %v3908 = vadd.f32 %v3743, %v3873
    %v3909 = vadd.f32 %v3744, %v3878
    %v3910 = vadd.f32 %v3745, %v3881
    %v3911 = vadd.f32 %v3746, %v3886
    %v3912 = vadd.f32 %v3747, %v3889
    %v3913 = vadd.f32 %v3748, %v3894
    %v3914 = vadd.f32 %v3749, %v3897
    %v3915 = vadd.f32 %v3750, %v3902
    %v3916 = vadd.f32 %v3907, %v2156
    %v3917 = vadd.f32 %v3908, %v2156
    %v3918 = vadd.f32 %v3909, %v2156
    %v3919 = vadd.f32 %v3910, %v2156
    %v3920 = vadd.f32 %v3911, %v2156
    %v3921 = vadd.f32 %v3912, %v2156
    %v3922 = vadd.f32 %v3913, %v2156
    %v3923 = vadd.f32 %v3914, %v2156
    %v3924 = vadd.f32 %v3915, %v2156
    %s3925 = scalar_lea.vmem [#allocation2], 64
    %3926 = vst [vmem:[%s3925] sm:$0xff] %v3916
    %3927 = vst [vmem:[%s3925 + $0x8] sm:$0xff] %v3917
    %v3928 = vadd.f32 %v3916, %v3917
    %v3929 = vrot.slane %v3928, 4
    %v3930 = vadd.f32 %v3928, %v3929
    %v3931 = vrot.slane %v3930, 2
    %v3932 = vadd.f32 %v3930, %v3931
    %v3933 = vrot.slane %v3932, 1
    %v3934 = vadd.f32 %v3932, %v3933
    %v3935 = vadd.f32 %v2240, %v3934
    %3936 = vst [vmem:[%s3925 + $0xe] sm:$0xfc] %v3918
    %3937 = vst [vmem:[%s3925 + $0x16] sm:$0xff] %v3919
    %3938 = vst [vmem:[%s3925 + $0x1e] sm:$0x3] %v3920
    %v3942 = vrot.slane %v3918, 2
    %v3943 = vrot.slane %v3919, 2
    %v3944 = vsel %vm2183, %v3942, %v3943
    %v3945 = vrot.slane %v3920, 2
    %v3946 = vsel %vm2183, %v3943, %v3945
    %v3949 = vadd.f32 %v3944, %v3946
    %v3950 = vrot.slane %v3949, 4
    %v3951 = vadd.f32 %v3949, %v3950
    %v3952 = vrot.slane %v3951, 2
    %v3953 = vadd.f32 %v3951, %v3952
    %v3954 = vrot.slane %v3953, 1
    %v3955 = vadd.f32 %v3953, %v3954
    %v3956 = vadd.f32 %v3935, %v3955
    %3957 = vst [vmem:[%s3925 + $0x1c] sm:$0xf0] %v3920
    %3958 = vst [vmem:[%s3925 + $0x24] sm:$0xff] %v3921
    %3959 = vst [vmem:[%s3925 + $0x2c] sm:$0xf] %v3922
    %v3962 = vrot.slane %v3920, 4
    %v3963 = vrot.slane %v3921, 4
    %v3964 = vsel %vm2204, %v3962, %v3963
    %v3965 = vrot.slane %v3922, 4
    %v3966 = vsel %vm2204, %v3963, %v3965
    %v3969 = vadd.f32 %v3964, %v3966
    %v3970 = vrot.slane %v3969, 4
    %v3971 = vadd.f32 %v3969, %v3970
    %v3972 = vrot.slane %v3971, 2
    %v3973 = vadd.f32 %v3971, %v3972
    %v3974 = vrot.slane %v3973, 1
    %v3975 = vadd.f32 %v3973, %v3974
    %v3976 = vadd.f32 %v3956, %v3975
    %3977 = vst [vmem:[%s3925 + $0x2a] sm:$0xc0] %v3922
    %3978 = vst [vmem:[%s3925 + $0x32] sm:$0xff] %v3923
    %3979 = vst [vmem:[%s3925 + $0x3a] sm:$0x3f] %v3924
    %v3982 = vrot.slane %v3922, 6
    %v3983 = vrot.slane %v3923, 6
    %v3984 = vsel %vm2225, %v3982, %v3983
    %v3985 = vrot.slane %v3924, 6
    %v3986 = vsel %vm2225, %v3983, %v3985
    %v3989 = vadd.f32 %v3984, %v3986
    %v3990 = vrot.slane %v3989, 4
    %v3991 = vadd.f32 %v3989, %v3990
    %v3992 = vrot.slane %v3991, 2
    %v3993 = vadd.f32 %v3991, %v3992
    %v3994 = vrot.slane %v3993, 1
    %v3995 = vadd.f32 %v3993, %v3994
    %v3996 = vadd.f32 %v3976, %v3995
    %3997 = vrot.lane.b32.xlu0 %v3996, 8
    %v3998 = vpop.permute.xlu0 %3997
    %v3999 = vadd.f32 %v3996, %v3998
    %4000 = vrot.lane.b32.xlu0 %v3999, 16
    %v4001 = vpop.permute.xlu0 %4000
    %v4002 = vadd.f32 %v3999, %v4001
    %4003 = vrot.lane.b32.xlu0 %v4002, 32
    %v4004 = vpop.permute.xlu0 %4003
    %v4005 = vadd.f32 %v4002, %v4004
    %4006 = vrot.lane.b32.xlu0 %v4005, 64
    %v4007 = vpop.permute.xlu0 %4006
    %v4008 = vadd.f32 %v4005, %v4007
    %v4009 = vmul.f32 %v4008, 0.00048828125
    %v4010 = vld [vmem:[#allocation2] sm:$0xff]
    %v4011 = vld [vmem:[#allocation2 + $0x8] sm:$0xff]
    %v4012 = vld [vmem:[#allocation2 + $0x10] sm:$0xff]
    %v4013 = vld [vmem:[#allocation2 + $0x18] sm:$0xff]
    %v4014 = vld [vmem:[#allocation2 + $0x20] sm:$0xff]
    %v4015 = vld [vmem:[#allocation2 + $0x28] sm:$0xff]
    %v4016 = vld [vmem:[#allocation2 + $0x30] sm:$0xff]
    %v4017 = vld [vmem:[#allocation2 + $0x38] sm:$0xff]
    %v4018 = vlaneseq
    %v4019 = vshrl.u32 %v4018, 7
    %v4020 = vsub.s32 0, %v4019
    %v4021 = vrot.slane %v4009, %v4020
    %v4022 = vsub.f32 %v4010, %v4021
    %v4023 = vsub.f32 %v4011, %v4021
    %v4024 = vsub.f32 %v4012, %v4021
    %v4025 = vsub.f32 %v4013, %v4021
    %v4026 = vsub.f32 %v4014, %v4021
    %v4027 = vsub.f32 %v4015, %v4021
    %v4028 = vsub.f32 %v4016, %v4021
    %v4029 = vsub.f32 %v4017, %v4021
    %v4030 = vmul.f32 %v4022, %v4022
    %v4031 = vmul.f32 %v4023, %v4023
    %v4032 = vmul.f32 %v4024, %v4024
    %v4033 = vmul.f32 %v4025, %v4025
    %v4034 = vmul.f32 %v4026, %v4026
    %v4035 = vmul.f32 %v4027, %v4027
    %v4036 = vmul.f32 %v4028, %v4028
    %v4037 = vmul.f32 %v4029, %v4029
    %v4038 = vadd.f32 %v4030, %v4031
    %v4039 = vadd.f32 %v4038, %v4032
    %v4040 = vadd.f32 %v4039, %v4033
    %v4041 = vadd.f32 %v4040, %v4034
    %v4042 = vadd.f32 %v4041, %v4035
    %v4043 = vadd.f32 %v4042, %v4036
    %v4044 = vadd.f32 %v4043, %v4037
    %v4045 = vrot.slane %v4044, 4
    %v4046 = vadd.f32 %v4044, %v4045
    %v4047 = vrot.slane %v4046, 2
    %v4048 = vadd.f32 %v4046, %v4047
    %v4049 = vrot.slane %v4048, 1
    %v4050 = vadd.f32 %v4048, %v4049
    %v4051 = vadd.f32 %v4050, 0.0
    %v4052 = vld [vmem:[%s3925] sm:$0xff]
    %v4053 = vld [vmem:[%s3925 + $0x8] sm:$0xff]
    %v4054 = vld [vmem:[%s3925 + $0x10] sm:$0xff]
    %v4055 = vld [vmem:[%s3925 + $0x18] sm:$0xff]
    %v4056 = vld [vmem:[%s3925 + $0x20] sm:$0xff]
    %v4057 = vld [vmem:[%s3925 + $0x28] sm:$0xff]
    %v4058 = vld [vmem:[%s3925 + $0x30] sm:$0xff]
    %v4059 = vld [vmem:[%s3925 + $0x38] sm:$0xff]
    %v4060 = vsub.f32 %v4052, %v4021
    %v4061 = vsub.f32 %v4053, %v4021
    %v4062 = vsub.f32 %v4054, %v4021
    %v4063 = vsub.f32 %v4055, %v4021
    %v4064 = vsub.f32 %v4056, %v4021
    %v4065 = vsub.f32 %v4057, %v4021
    %v4066 = vsub.f32 %v4058, %v4021
    %v4067 = vsub.f32 %v4059, %v4021
    %v4068 = vmul.f32 %v4060, %v4060
    %v4069 = vmul.f32 %v4061, %v4061
    %v4070 = vmul.f32 %v4062, %v4062
    %v4071 = vmul.f32 %v4063, %v4063
    %v4072 = vmul.f32 %v4064, %v4064
    %v4073 = vmul.f32 %v4065, %v4065
    %v4074 = vmul.f32 %v4066, %v4066
    %v4075 = vmul.f32 %v4067, %v4067
    %v4076 = vadd.f32 %v4068, %v4069
    %v4077 = vadd.f32 %v4076, %v4070
    %v4078 = vadd.f32 %v4077, %v4071
    %v4079 = vadd.f32 %v4078, %v4072
    %v4080 = vadd.f32 %v4079, %v4073
    %v4081 = vadd.f32 %v4080, %v4074
    %v4082 = vadd.f32 %v4081, %v4075
    %v4083 = vrot.slane %v4082, 4
    %v4084 = vadd.f32 %v4082, %v4083
    %v4085 = vrot.slane %v4084, 2
    %v4086 = vadd.f32 %v4084, %v4085
    %v4087 = vrot.slane %v4086, 1
    %v4088 = vadd.f32 %v4086, %v4087
    %v4089 = vadd.f32 %v4051, %v4088
    %4090 = vrot.lane.b32.xlu0 %v4089, 8
    %v4091 = vpop.permute.xlu0 %4090
    %v4092 = vadd.f32 %v4089, %v4091
    %4093 = vrot.lane.b32.xlu0 %v4092, 16
    %v4094 = vpop.permute.xlu0 %4093
    %v4095 = vadd.f32 %v4092, %v4094
    %4096 = vrot.lane.b32.xlu0 %v4095, 32
    %v4097 = vpop.permute.xlu0 %4096
    %v4098 = vadd.f32 %v4095, %v4097
    %4099 = vrot.lane.b32.xlu0 %v4098, 64
    %v4100 = vpop.permute.xlu0 %4099
    %v4101 = vadd.f32 %v4098, %v4100
    %v4102 = vmul.f32 %v4101, 0.00048828125
    %v4103 = vld [vmem:[%s2] sm:$0x1]
    %v4104 = vadd.f32 %v4102, 1e-05
    %v4105 = vrsqrt.pop %v4104
    %v4106 = vmul.f32 %v4103, %v4105
    %v4107 = vld [vmem:[%s3] sm:$0x1]
    %v4108 = vmul.f32 %v4009, %v4106
    %v4109 = vsub.f32 %v4107, %v4108
    %v4111 = vlaneseq
    %v4112 = vshrl.u32 %v4111, 7
    %v4113 = vsub.s32 0, %v4112
    %v4114 = vrot.slane %v4106, %v4113
    %v4116 = vmul.f32 %v4010, %v4114
    %v4117 = vmul.f32 %v4011, %v4114
    %v4118 = vmul.f32 %v4012, %v4114
    %v4119 = vmul.f32 %v4013, %v4114
    %v4120 = vmul.f32 %v4014, %v4114
    %v4121 = vmul.f32 %v4015, %v4114
    %v4122 = vmul.f32 %v4016, %v4114
    %v4123 = vmul.f32 %v4017, %v4114
    %v4125 = vlaneseq
    %v4126 = vshrl.u32 %v4125, 7
    %v4127 = vsub.s32 0, %v4126
    %v4128 = vrot.slane %v4109, %v4127
    %v4130 = vadd.f32 %v4116, %v4128
    %v4131 = vadd.f32 %v4117, %v4128
    %v4132 = vadd.f32 %v4118, %v4128
    %v4133 = vadd.f32 %v4119, %v4128
    %v4134 = vadd.f32 %v4120, %v4128
    %v4135 = vadd.f32 %v4121, %v4128
    %v4136 = vadd.f32 %v4122, %v4128
    %v4137 = vadd.f32 %v4123, %v4128
    %v4138 = vmax.f32 %v4130, 0.0
    %v4139 = vmax.f32 %v4131, 0.0
    %v4140 = vmax.f32 %v4132, 0.0
    %v4141 = vmax.f32 %v4133, 0.0
    %v4142 = vmax.f32 %v4134, 0.0
    %v4143 = vmax.f32 %v4135, 0.0
    %v4144 = vmax.f32 %v4136, 0.0
    %v4145 = vmax.f32 %v4137, 0.0
    %vm4154 = vcmask 1046528
    %v4155 = vrot.slane %v4138, 1
    %v4156 = vrot.slane %v4139, 1
    %v4157 = vsel %vm4154, %v4155, %v4156
    %v4158 = vrot.slane %v4140, 1
    %v4159 = vsel %vm4154, %v4156, %v4158
    %v4160 = vrot.slane %v4141, 1
    %v4161 = vsel %vm4154, %v4158, %v4160
    %v4162 = vrot.slane %v4142, 1
    %v4163 = vsel %vm4154, %v4160, %v4162
    %v4164 = vrot.slane %v4143, 1
    %v4165 = vsel %vm4154, %v4162, %v4164
    %v4166 = vrot.slane %v4144, 1
    %v4167 = vsel %vm4154, %v4164, %v4166
    %v4168 = vrot.slane %v4145, 1
    %v4169 = vsel %vm4154, %v4166, %v4168
    %v4179 = vsel %vm4154, %v4168, %v4155
    %v4180 = vadd.f32 %v4138, %v4157
    %v4181 = vadd.f32 %v4139, %v4159
    %v4182 = vadd.f32 %v4140, %v4161
    %v4183 = vadd.f32 %v4141, %v4163
    %v4184 = vadd.f32 %v4142, %v4165
    %v4185 = vadd.f32 %v4143, %v4167
    %v4186 = vadd.f32 %v4144, %v4169
    %v4187 = vadd.f32 %v4145, %v4179
    %4196 = vrot.lane.b32.xlu0 %v4180, 120
    %v4197 = vpop.permute.xlu0 %4196
    %4198 = vrot.lane.b32.xlu0 %v4181, 120
    %v4199 = vpop.permute.xlu0 %4198
    %4200 = vrot.lane.b32.xlu0 %v4182, 120
    %v4201 = vpop.permute.xlu0 %4200
    %4202 = vrot.lane.b32.xlu0 %v4183, 120
    %v4203 = vpop.permute.xlu0 %4202
    %4204 = vrot.lane.b32.xlu0 %v4184, 120
    %v4205 = vpop.permute.xlu0 %4204
    %4206 = vrot.lane.b32.xlu0 %v4185, 120
    %v4207 = vpop.permute.xlu0 %4206
    %4208 = vrot.lane.b32.xlu0 %v4186, 120
    %v4209 = vpop.permute.xlu0 %4208
    %4210 = vrot.lane.b32.xlu0 %v4187, 120
    %v4211 = vpop.permute.xlu0 %4210
    %v4220 = vadd.f32 %v4180, %v4197
    %v4221 = vadd.f32 %v4181, %v4199
    %v4222 = vadd.f32 %v4182, %v4201
    %v4223 = vadd.f32 %v4183, %v4203
    %v4224 = vadd.f32 %v4184, %v4205
    %v4225 = vadd.f32 %v4185, %v4207
    %v4226 = vadd.f32 %v4186, %v4209
    %v4227 = vadd.f32 %v4187, %v4211
    %v4228 = vmul.f32 %v4220, 0.25
    %v4229 = vmul.f32 %v4221, 0.25
    %v4230 = vmul.f32 %v4222, 0.25
    %v4231 = vmul.f32 %v4223, 0.25
    %v4232 = vmul.f32 %v4224, 0.25
    %v4233 = vmul.f32 %v4225, 0.25
    %v4234 = vmul.f32 %v4226, 0.25
    %v4235 = vmul.f32 %v4227, 0.25
    %4236 = vst [vmem:[%s6] sm:$0xff] %v4228
    %4237 = vst [vmem:[%s6 + $0x8] sm:$0xff] %v4229
    %4238 = vst [vmem:[%s6 + $0x10] sm:$0xff] %v4230
    %4239 = vst [vmem:[%s6 + $0x18] sm:$0xff] %v4231
    %4240 = vst [vmem:[%s6 + $0x20] sm:$0xff] %v4232
    %4241 = vst [vmem:[%s6 + $0x28] sm:$0xff] %v4233
    %4242 = vst [vmem:[%s6 + $0x30] sm:$0xff] %v4234
    %4243 = vst [vmem:[%s6 + $0x38] sm:$0xff] %v4235
    %v4244 = vld [vmem:[%s3925] sm:$0xff]
    %v4245 = vld [vmem:[%s3925 + $0x8] sm:$0xff]
    %v4246 = vld [vmem:[%s3925 + $0x10] sm:$0xff]
    %v4247 = vld [vmem:[%s3925 + $0x18] sm:$0xff]
    %v4248 = vld [vmem:[%s3925 + $0x20] sm:$0xff]
    %v4249 = vld [vmem:[%s3925 + $0x28] sm:$0xff]
    %v4250 = vld [vmem:[%s3925 + $0x30] sm:$0xff]
    %v4251 = vld [vmem:[%s3925 + $0x38] sm:$0xff]
    %v4252 = vmul.f32 %v4244, %v4114
    %v4253 = vmul.f32 %v4245, %v4114
    %v4254 = vmul.f32 %v4246, %v4114
    %v4255 = vmul.f32 %v4247, %v4114
    %v4256 = vmul.f32 %v4248, %v4114
    %v4257 = vmul.f32 %v4249, %v4114
    %v4258 = vmul.f32 %v4250, %v4114
    %v4259 = vmul.f32 %v4251, %v4114
    %v4260 = vadd.f32 %v4252, %v4128
    %v4261 = vadd.f32 %v4253, %v4128
    %v4262 = vadd.f32 %v4254, %v4128
    %v4263 = vadd.f32 %v4255, %v4128
    %v4264 = vadd.f32 %v4256, %v4128
    %v4265 = vadd.f32 %v4257, %v4128
    %v4266 = vadd.f32 %v4258, %v4128
    %v4267 = vadd.f32 %v4259, %v4128
    %v4268 = vmax.f32 %v4260, 0.0
    %v4269 = vmax.f32 %v4261, 0.0
    %v4270 = vmax.f32 %v4262, 0.0
    %v4271 = vmax.f32 %v4263, 0.0
    %v4272 = vmax.f32 %v4264, 0.0
    %v4273 = vmax.f32 %v4265, 0.0
    %v4274 = vmax.f32 %v4266, 0.0
    %v4275 = vmax.f32 %v4267, 0.0
    %v4284 = vrot.slane %v4268, 1
    %v4285 = vrot.slane %v4269, 1
    %v4286 = vsel %vm4154, %v4284, %v4285
    %v4287 = vrot.slane %v4270, 1
    %v4288 = vsel %vm4154, %v4285, %v4287
    %v4289 = vrot.slane %v4271, 1
    %v4290 = vsel %vm4154, %v4287, %v4289
    %v4291 = vrot.slane %v4272, 1
    %v4292 = vsel %vm4154, %v4289, %v4291
    %v4293 = vrot.slane %v4273, 1
    %v4294 = vsel %vm4154, %v4291, %v4293
    %v4295 = vrot.slane %v4274, 1
    %v4296 = vsel %vm4154, %v4293, %v4295
    %v4297 = vrot.slane %v4275, 1
    %v4298 = vsel %vm4154, %v4295, %v4297
    %v4308 = vsel %vm4154, %v4297, %v4284
    %v4309 = vadd.f32 %v4268, %v4286
    %v4310 = vadd.f32 %v4269, %v4288
    %v4311 = vadd.f32 %v4270, %v4290
    %v4312 = vadd.f32 %v4271, %v4292
    %v4313 = vadd.f32 %v4272, %v4294
    %v4314 = vadd.f32 %v4273, %v4296
    %v4315 = vadd.f32 %v4274, %v4298
    %v4316 = vadd.f32 %v4275, %v4308
    %4325 = vrot.lane.b32.xlu0 %v4309, 120
    %v4326 = vpop.permute.xlu0 %4325
    %4327 = vrot.lane.b32.xlu0 %v4310, 120
    %v4328 = vpop.permute.xlu0 %4327
    %4329 = vrot.lane.b32.xlu0 %v4311, 120
    %v4330 = vpop.permute.xlu0 %4329
    %4331 = vrot.lane.b32.xlu0 %v4312, 120
    %v4332 = vpop.permute.xlu0 %4331
    %4333 = vrot.lane.b32.xlu0 %v4313, 120
    %v4334 = vpop.permute.xlu0 %4333
    %4335 = vrot.lane.b32.xlu0 %v4314, 120
    %v4336 = vpop.permute.xlu0 %4335
    %4337 = vrot.lane.b32.xlu0 %v4315, 120
    %v4338 = vpop.permute.xlu0 %4337
    %4339 = vrot.lane.b32.xlu0 %v4316, 120
    %v4340 = vpop.permute.xlu0 %4339
    %v4349 = vadd.f32 %v4309, %v4326
    %v4350 = vadd.f32 %v4310, %v4328
    %v4351 = vadd.f32 %v4311, %v4330
    %v4352 = vadd.f32 %v4312, %v4332
    %v4353 = vadd.f32 %v4313, %v4334
    %v4354 = vadd.f32 %v4314, %v4336
    %v4355 = vadd.f32 %v4315, %v4338
    %v4356 = vadd.f32 %v4316, %v4340
    %v4357 = vmul.f32 %v4349, 0.25
    %v4358 = vmul.f32 %v4350, 0.25
    %v4359 = vmul.f32 %v4351, 0.25
    %v4360 = vmul.f32 %v4352, 0.25
    %v4361 = vmul.f32 %v4353, 0.25
    %v4362 = vmul.f32 %v4354, 0.25
    %v4363 = vmul.f32 %v4355, 0.25
    %v4364 = vmul.f32 %v4356, 0.25
    %s4365 = scalar_lea.vmem %s6, 64
    %4366 = vst [vmem:[%s4365] sm:$0xff] %v4357
    %4367 = vst [vmem:[%s4365 + $0x8] sm:$0xff] %v4358
    %4368 = vst [vmem:[%s4365 + $0x10] sm:$0xff] %v4359
    %4369 = vst [vmem:[%s4365 + $0x18] sm:$0xff] %v4360
    %4370 = vst [vmem:[%s4365 + $0x20] sm:$0xff] %v4361
    %4371 = vst [vmem:[%s4365 + $0x28] sm:$0xff] %v4362
    %4372 = vst [vmem:[%s4365 + $0x30] sm:$0xff] %v4363
    %4373 = vst [vmem:[%s4365 + $0x38] sm:$0xff] %v4364
    // Predicated region
    $region22: #{forward.2} parent=1 // pred_check
      _
    $region23: #{forward.2} parent=1 // pred_check_branch
      %4375 = sbr.rel (0) target = $region25
    $region24: #{forward.2} parent=1 // pred_region
      _
    $region25: #{forward.2} parent=1 // pred_fallthru
      _
    // Predicated region
    $region26: #{forward.2} parent=1 // pred_check
      _
    $region27: #{forward.2} parent=1 // pred_check_branch
      %4377 = sbr.rel (0) target = $region29
    $region28: #{forward.2} parent=1 // pred_region
      _
    $region29: #{forward.2} parent=1 // pred_fallthru
      _

</llo_original>
